<compile_context>
chip_gen: v7x
topology: tpu7x:2x2x1
jax: 0.10.0
libtpu: 0.0.40
codegen_flags: <defaults>
</compile_context>

<pallas_src>
import jax
import jax.numpy as jnp
from jax.experimental import pallas as pl
from jax.experimental.pallas import tpu as pltpu

IN_FEAT = 399            # 13 cell + 384 BERT + 2 tail
CELL = 13
BERT_LO, BERT_HI = 13, 397
LEAKY_SLOPE = 0.01       # torch.nn.LeakyReLU default


def _round_up(x, m):
    return ((x + m - 1) // m) * m


def _lrelu(v):
    # max(v, a*v) == LeakyReLU(v) for 0 <= a <= 1; 2 VALU ops instead of 3.
    return jnp.maximum(v, LEAKY_SLOPE * v)


def _dot(a, b):
    return jnp.dot(a, b, preferred_element_type=jnp.float32)


def finegrained_kernel(
    x_ref,
    w0, b0,                              # folded first layer: (399, 32) bf16 / (1, 32) f32
    w1, b1, w2, b2, w3, b3, w4, b4, w5, b5,   # last_mlp1..last_mlp5 (f32)
    o_ref,
):
    x = x_ref[...].astype(jnp.bfloat16)                  # (T, 399)

    # Folded (BERT chain + concat + last_mlp) first layer: one MXU pass,
    # bf16 operands, f32 accumulation, f32 bias.
    h = _lrelu(_dot(x, w0[...]) + b0[...])               # (T, 32)

    # Tiny tail stack, f32, LeakyReLU after each (HBM-bound; kept simple).
    h = _lrelu(_dot(h, w1[...]) + b1[...])               # (T, 32)
    h = _lrelu(_dot(h, w2[...]) + b2[...])               # (T, 32)
    h = _lrelu(_dot(h, w3[...]) + b3[...])               # (T, 16)
    h = _lrelu(_dot(h, w4[...]) + b4[...])               # (T, 16)
    h = _lrelu(_dot(h, w5[...]) + b5[...])               # (T, 16)

    o_ref[...] = h.astype(o_ref.dtype)


def _choose_row_tile(n_rows):
    """Row tile: >= ~8 grid steps for DMA/compute overlap (and >= 4 steps per
    TensorCore on v7x megacore), multiple of 8, capped at 2048 rows so
    double-buffered f32 input tiles fit comfortably in scoped VMEM on all
    generations (v5e default 16 MiB .. v7x 64 MiB physical)."""
    target_steps = 8
    tile = _round_up(pl.cdiv(n_rows, target_steps), 8)
    return max(64, min(tile, 2048))


def finegrained_forward(x, params):
    """x: (B, C, H, 399) float32 -> (B*C*H*16 // 1000, 100, 10)."""
    B, C, H, W = x.shape
    assert W == IN_FEAT
    n_rows = B * C * H
    x2d = x.reshape(n_rows, IN_FEAT)

    (w_m, b_m), (w_m1, b_m1), (w_m2, b_m2) = params[0:3]
    (lw0, lb0), (lw1, lb1), (lw2, lb2), (lw3, lb3), (lw4, lb4), (lw5, lb5) = params[3:9]

    # ---- fold the activation-free BERT chain + first tail layer (in f32) ----
    lw0c, lw0b, lw0t = lw0[0:CELL], lw0[CELL:CELL + 20], lw0[CELL + 20:]
    bert_w = w_m @ w_m1 @ w_m2                              # (384, 20)
    bert_b = (b_m @ w_m1 + b_m1) @ w_m2 + b_m2              # (1, 20)
    w_first = jnp.concatenate([lw0c, bert_w @ lw0b, lw0t], axis=0)   # (399, 32)
    b_first = bert_b @ lw0b + lb0                           # (1, 32)

    # bf16 operand for the single FLOP-dominant matmul (f32 accumulation
    # in-kernel); small tail weights stay f32.
    w_first_bf16 = w_first.astype(jnp.bfloat16)

    operands = [w_first_bf16, b_first,
                lw1, lb1, lw2, lb2, lw3, lb3, lw4, lb4, lw5, lb5]

    row_tile = _choose_row_tile(n_rows)
    grid = (pl.cdiv(n_rows, row_tile),)

    in_specs = [pl.BlockSpec((row_tile, IN_FEAT), lambda i: (i, 0))]
    # Parameters: whole-array blocks, replicated across the row grid.
    in_specs += [pl.BlockSpec(p.shape, lambda i: (0, 0)) for p in operands]

    # Advisory cost estimate (per row after folding: ~15.8K MACs).
    flops_per_row = 2 * (IN_FEAT * 32 + 32 * 32 + 32 * 32
                         + 32 * 16 + 16 * 16 + 16 * 16)
    param_bytes = sum(int(p.size) * p.dtype.itemsize for p in operands)
    cost = pl.CostEstimate(
        flops=flops_per_row * n_rows,
        transcendentals=0,
        bytes_accessed=(IN_FEAT + 16) * 4 * n_rows + param_bytes,
    )

    out = pl.pallas_call(
        finegrained_kernel,
        out_shape=jax.ShapeDtypeStruct((n_rows, 16), jnp.float32),
        grid=grid,
        in_specs=in_specs,
        out_specs=pl.BlockSpec((row_tile, 16), lambda i: (i, 0)),
        compiler_params=pltpu.CompilerParams(
            dimension_semantics=("parallel",),
            vmem_limit_bytes=32 * 1024 * 1024,
        ),
        cost_estimate=cost,
    )(x2d, *operands)

    return out.reshape(-1, 100, 10)


def init_params(key):
    """Deterministic params.  Linear weights stored as (in, out) (transposed
    vs torch's (out, in)), biases as (1, out)."""
    layer_dims = [
        (384, 100), (100, 50), (50, 20),             # mlp, mlp1, mlp2
        (35, 32), (32, 32), (32, 32),                # last_mlp .. last_mlp2
        (32, 16), (16, 16), (16, 16),                # last_mlp3 .. last_mlp5
    ]
    params = []
    for idx, (fi, fo) in enumerate(layer_dims):
        kw, kb = jax.random.split(jax.random.fold_in(key, idx))
        bound = 1.0 / (fi ** 0.5)                    # torch Linear init range
        w = jax.random.uniform(kw, (fi, fo), jnp.float32, -bound, bound)
        b = jax.random.uniform(kb, (1, fo), jnp.float32, -bound, bound)
        params.append((w, b))
    return params


def reference_forward(x, params):
    """Plain-JAX f32 reference matching the PyTorch module (unfolded)."""
    bert = x[..., BERT_LO:BERT_HI]
    for (w, b) in params[:3]:
        bert = bert @ w + b[0]
    concat = jnp.concatenate([x[..., 0:BERT_LO], bert, x[..., BERT_HI:]], -1)
    h = concat
    for (w, b) in params[3:]:
        h = jnp.where(h @ w + b[0] > 0, h @ w + b[0], LEAKY_SLOPE * (h @ w + b[0]))
    return h.reshape(-1, 100, 10)


if __name__ == "__main__":
    key = jax.random.PRNGKey(0)
    params = init_params(jax.random.fold_in(key, 1000))

    # B*C*H must be a multiple of 125 so B*C*H*16 reshapes to (-1, 100, 10).
    # 2*9*125 = 2250 rows exercises the multi-block grid and the ragged
    # (non-divisible) boundary block with no explicit padding.
    B, C, H = 2, 9, 125
    x = jax.random.normal(jax.random.fold_in(key, 2000),
                          (B, C, H, IN_FEAT), jnp.float32)

    out = jax.block_until_ready(finegrained_forward(x, params))
    ref = reference_forward(x, params)

    assert out.shape == (B * C * H * 16 // 1000, 100, 10), out.shape
    # Tolerance accounts for the single bf16-operand matmul in the folded
    # first layer (f32 reference); observed errors are O(1e-3) for O(1)
    # activations.
    assert jnp.allclose(out, ref, atol=2e-2, rtol=2e-2), float(
        jnp.max(jnp.abs(out - ref))
    )
    print("KERNEL_OK")
</pallas_src>

<mosaic_0001>
module attributes {stable_mosaic.version = 11 : i64} {
  func.func @finegrained_kernel(%arg0: i32, %arg1: memref<288x399xf32, #tpu.memory_space<vmem>>, %arg2: memref<399x32xbf16, #tpu.memory_space<vmem>>, %arg3: memref<1x32xf32, #tpu.memory_space<vmem>>, %arg4: memref<32x32xf32, #tpu.memory_space<vmem>>, %arg5: memref<1x32xf32, #tpu.memory_space<vmem>>, %arg6: memref<32x32xf32, #tpu.memory_space<vmem>>, %arg7: memref<1x32xf32, #tpu.memory_space<vmem>>, %arg8: memref<32x16xf32, #tpu.memory_space<vmem>>, %arg9: memref<1x16xf32, #tpu.memory_space<vmem>>, %arg10: memref<16x16xf32, #tpu.memory_space<vmem>>, %arg11: memref<1x16xf32, #tpu.memory_space<vmem>>, %arg12: memref<16x16xf32, #tpu.memory_space<vmem>>, %arg13: memref<1x16xf32, #tpu.memory_space<vmem>>, %arg14: memref<288x16xf32, #tpu.memory_space<vmem>>) attributes {dimension_semantics = [#tpu.dimension_semantics<parallel>], iteration_bounds = array<i64: 8>, scalar_prefetch = 0 : i64, scratch_operands = 0 : i64, tpu.core_type = #tpu.core_type<tc>, window_params = [{transform_indices = @transform_0, window_bounds = array<i64: 288, 399>}, {pipeline_mode = #tpu.pipeline_mode<synchronous>, transform_indices = @transform_1, window_bounds = array<i64: 399, 32>}, {pipeline_mode = #tpu.pipeline_mode<synchronous>, transform_indices = @transform_2, window_bounds = array<i64: 1, 32>}, {pipeline_mode = #tpu.pipeline_mode<synchronous>, transform_indices = @transform_3, window_bounds = array<i64: 32, 32>}, {pipeline_mode = #tpu.pipeline_mode<synchronous>, transform_indices = @transform_4, window_bounds = array<i64: 1, 32>}, {pipeline_mode = #tpu.pipeline_mode<synchronous>, transform_indices = @transform_5, window_bounds = array<i64: 32, 32>}, {pipeline_mode = #tpu.pipeline_mode<synchronous>, transform_indices = @transform_6, window_bounds = array<i64: 1, 32>}, {pipeline_mode = #tpu.pipeline_mode<synchronous>, transform_indices = @transform_7, window_bounds = array<i64: 32, 16>}, {pipeline_mode = #tpu.pipeline_mode<synchronous>, transform_indices = @transform_8, window_bounds = array<i64: 1, 16>}, {pipeline_mode = #tpu.pipeline_mode<synchronous>, transform_indices = @transform_9, window_bounds = array<i64: 16, 16>}, {pipeline_mode = #tpu.pipeline_mode<synchronous>, transform_indices = @transform_10, window_bounds = array<i64: 1, 16>}, {pipeline_mode = #tpu.pipeline_mode<synchronous>, transform_indices = @transform_11, window_bounds = array<i64: 16, 16>}, {pipeline_mode = #tpu.pipeline_mode<synchronous>, transform_indices = @transform_12, window_bounds = array<i64: 1, 16>}, {transform_indices = @transform_13, window_bounds = array<i64: 288, 16>}]} {
    %c0 = arith.constant 0 : index
    %c0_0 = arith.constant 0 : index
    %0 = vector.load %arg1[%c0, %c0_0] : memref<288x399xf32, #tpu.memory_space<vmem>>, vector<288x399xf32>
    %1 = arith.truncf %0 : vector<288x399xf32> to vector<288x399xbf16>
    %c0_1 = arith.constant 0 : index
    %c0_2 = arith.constant 0 : index
    %2 = vector.load %arg2[%c0_1, %c0_2] : memref<399x32xbf16, #tpu.memory_space<vmem>>, vector<399x32xbf16>
    %cst = arith.constant dense<0.000000e+00> : vector<288x32xf32>
    %3 = tpu.matmul %1, %2, %cst {dimension_numbers = #tpu.dot_dimension_numbers<[1], [0], [0], [1], [0, 0, 1, 1], [], []>} : vector<288x399xbf16>, vector<399x32xbf16>, vector<288x32xf32> -> vector<288x32xf32>
    %c0_3 = arith.constant 0 : index
    %c0_4 = arith.constant 0 : index
    %4 = vector.load %arg3[%c0_3, %c0_4] : memref<1x32xf32, #tpu.memory_space<vmem>>, vector<1x32xf32>
    %5 = vector.broadcast %4 : vector<1x32xf32> to vector<288x32xf32>
    %6 = arith.addf %3, %5 : vector<288x32xf32>
    %cst_5 = arith.constant 0.00999999977 : f32
    %7 = vector.broadcast %cst_5 : f32 to vector<288x32xf32>
    %8 = arith.mulf %7, %6 : vector<288x32xf32>
    %9 = arith.maximumf %6, %8 : vector<288x32xf32>
    %c0_6 = arith.constant 0 : index
    %c0_7 = arith.constant 0 : index
    %10 = vector.load %arg4[%c0_6, %c0_7] : memref<32x32xf32, #tpu.memory_space<vmem>>, vector<32x32xf32>
    %cst_8 = arith.constant dense<0.000000e+00> : vector<288x32xf32>
    %11 = tpu.matmul %9, %10, %cst_8 {dimension_numbers = #tpu.dot_dimension_numbers<[1], [0], [0], [1], [0, 0, 1, 1], [], []>} : vector<288x32xf32>, vector<32x32xf32>, vector<288x32xf32> -> vector<288x32xf32>
    %c0_9 = arith.constant 0 : index
    %c0_10 = arith.constant 0 : index
    %12 = vector.load %arg5[%c0_9, %c0_10] : memref<1x32xf32, #tpu.memory_space<vmem>>, vector<1x32xf32>
    %13 = vector.broadcast %12 : vector<1x32xf32> to vector<288x32xf32>
    %14 = arith.addf %11, %13 : vector<288x32xf32>
    %cst_11 = arith.constant 0.00999999977 : f32
    %15 = vector.broadcast %cst_11 : f32 to vector<288x32xf32>
    %16 = arith.mulf %15, %14 : vector<288x32xf32>
    %17 = arith.maximumf %14, %16 : vector<288x32xf32>
    %c0_12 = arith.constant 0 : index
    %c0_13 = arith.constant 0 : index
    %18 = vector.load %arg6[%c0_12, %c0_13] : memref<32x32xf32, #tpu.memory_space<vmem>>, vector<32x32xf32>
    %cst_14 = arith.constant dense<0.000000e+00> : vector<288x32xf32>
    %19 = tpu.matmul %17, %18, %cst_14 {dimension_numbers = #tpu.dot_dimension_numbers<[1], [0], [0], [1], [0, 0, 1, 1], [], []>} : vector<288x32xf32>, vector<32x32xf32>, vector<288x32xf32> -> vector<288x32xf32>
    %c0_15 = arith.constant 0 : index
    %c0_16 = arith.constant 0 : index
    %20 = vector.load %arg7[%c0_15, %c0_16] : memref<1x32xf32, #tpu.memory_space<vmem>>, vector<1x32xf32>
    %21 = vector.broadcast %20 : vector<1x32xf32> to vector<288x32xf32>
    %22 = arith.addf %19, %21 : vector<288x32xf32>
    %cst_17 = arith.constant 0.00999999977 : f32
    %23 = vector.broadcast %cst_17 : f32 to vector<288x32xf32>
    %24 = arith.mulf %23, %22 : vector<288x32xf32>
    %25 = arith.maximumf %22, %24 : vector<288x32xf32>
    %c0_18 = arith.constant 0 : index
    %c0_19 = arith.constant 0 : index
    %26 = vector.load %arg8[%c0_18, %c0_19] : memref<32x16xf32, #tpu.memory_space<vmem>>, vector<32x16xf32>
    %cst_20 = arith.constant dense<0.000000e+00> : vector<288x16xf32>
    %27 = tpu.matmul %25, %26, %cst_20 {dimension_numbers = #tpu.dot_dimension_numbers<[1], [0], [0], [1], [0, 0, 1, 1], [], []>} : vector<288x32xf32>, vector<32x16xf32>, vector<288x16xf32> -> vector<288x16xf32>
    %c0_21 = arith.constant 0 : index
    %c0_22 = arith.constant 0 : index
    %28 = vector.load %arg9[%c0_21, %c0_22] : memref<1x16xf32, #tpu.memory_space<vmem>>, vector<1x16xf32>
    %29 = vector.broadcast %28 : vector<1x16xf32> to vector<288x16xf32>
    %30 = arith.addf %27, %29 : vector<288x16xf32>
    %cst_23 = arith.constant 0.00999999977 : f32
    %31 = vector.broadcast %cst_23 : f32 to vector<288x16xf32>
    %32 = arith.mulf %31, %30 : vector<288x16xf32>
    %33 = arith.maximumf %30, %32 : vector<288x16xf32>
    %c0_24 = arith.constant 0 : index
    %c0_25 = arith.constant 0 : index
    %34 = vector.load %arg10[%c0_24, %c0_25] : memref<16x16xf32, #tpu.memory_space<vmem>>, vector<16x16xf32>
    %cst_26 = arith.constant dense<0.000000e+00> : vector<288x16xf32>
    %35 = tpu.matmul %33, %34, %cst_26 {dimension_numbers = #tpu.dot_dimension_numbers<[1], [0], [0], [1], [0, 0, 1, 1], [], []>} : vector<288x16xf32>, vector<16x16xf32>, vector<288x16xf32> -> vector<288x16xf32>
    %c0_27 = arith.constant 0 : index
    %c0_28 = arith.constant 0 : index
    %36 = vector.load %arg11[%c0_27, %c0_28] : memref<1x16xf32, #tpu.memory_space<vmem>>, vector<1x16xf32>
    %37 = vector.broadcast %36 : vector<1x16xf32> to vector<288x16xf32>
    %38 = arith.addf %35, %37 : vector<288x16xf32>
    %cst_29 = arith.constant 0.00999999977 : f32
    %39 = vector.broadcast %cst_29 : f32 to vector<288x16xf32>
    %40 = arith.mulf %39, %38 : vector<288x16xf32>
    %41 = arith.maximumf %38, %40 : vector<288x16xf32>
    %c0_30 = arith.constant 0 : index
    %c0_31 = arith.constant 0 : index
    %42 = vector.load %arg12[%c0_30, %c0_31] : memref<16x16xf32, #tpu.memory_space<vmem>>, vector<16x16xf32>
    %cst_32 = arith.constant dense<0.000000e+00> : vector<288x16xf32>
    %43 = tpu.matmul %41, %42, %cst_32 {dimension_numbers = #tpu.dot_dimension_numbers<[1], [0], [0], [1], [0, 0, 1, 1], [], []>} : vector<288x16xf32>, vector<16x16xf32>, vector<288x16xf32> -> vector<288x16xf32>
    %c0_33 = arith.constant 0 : index
    %c0_34 = arith.constant 0 : index
    %44 = vector.load %arg13[%c0_33, %c0_34] : memref<1x16xf32, #tpu.memory_space<vmem>>, vector<1x16xf32>
    %45 = vector.broadcast %44 : vector<1x16xf32> to vector<288x16xf32>
    %46 = arith.addf %43, %45 : vector<288x16xf32>
    %cst_35 = arith.constant 0.00999999977 : f32
    %47 = vector.broadcast %cst_35 : f32 to vector<288x16xf32>
    %48 = arith.mulf %47, %46 : vector<288x16xf32>
    %49 = arith.maximumf %46, %48 : vector<288x16xf32>
    %c0_36 = arith.constant 0 : index
    %c0_37 = arith.constant 0 : index
    %50 = vector.load %arg14[%c0_36, %c0_37] : memref<288x16xf32, #tpu.memory_space<vmem>>, vector<288x16xf32>
    tpu.vector_store %arg14[%c0_36, %c0_37], %49 {strides = array<i32>} : memref<288x16xf32, #tpu.memory_space<vmem>>, vector<288x16xf32>,
    return
  }
  func.func @transform_0(%arg0: i32) -> (i32, i32) {
    %c0_i32 = arith.constant 0 : i32
    %c0_i32_0 = arith.constant 0 : i32
    return %arg0, %c0_i32 : i32, i32
  }
  func.func @transform_1(%arg0: i32) -> (i32, i32) {
    %c0_i32 = arith.constant 0 : i32
    %c0_i32_0 = arith.constant 0 : i32
    %c0_i32_1 = arith.constant 0 : i32
    return %c0_i32, %c0_i32_0 : i32, i32
  }
  func.func @transform_2(%arg0: i32) -> (i32, i32) {
    %c0_i32 = arith.constant 0 : i32
    %c0_i32_0 = arith.constant 0 : i32
    %c0_i32_1 = arith.constant 0 : i32
    return %c0_i32, %c0_i32_0 : i32, i32
  }
  func.func @transform_3(%arg0: i32) -> (i32, i32) {
    %c0_i32 = arith.constant 0 : i32
    %c0_i32_0 = arith.constant 0 : i32
    %c0_i32_1 = arith.constant 0 : i32
    return %c0_i32, %c0_i32_0 : i32, i32
  }
  func.func @transform_4(%arg0: i32) -> (i32, i32) {
    %c0_i32 = arith.constant 0 : i32
    %c0_i32_0 = arith.constant 0 : i32
    %c0_i32_1 = arith.constant 0 : i32
    return %c0_i32, %c0_i32_0 : i32, i32
  }
  func.func @transform_5(%arg0: i32) -> (i32, i32) {
    %c0_i32 = arith.constant 0 : i32
    %c0_i32_0 = arith.constant 0 : i32
    %c0_i32_1 = arith.constant 0 : i32
    return %c0_i32, %c0_i32_0 : i32, i32
  }
  func.func @transform_6(%arg0: i32) -> (i32, i32) {
    %c0_i32 = arith.constant 0 : i32
    %c0_i32_0 = arith.constant 0 : i32
    %c0_i32_1 = arith.constant 0 : i32
    return %c0_i32, %c0_i32_0 : i32, i32
  }
  func.func @transform_7(%arg0: i32) -> (i32, i32) {
    %c0_i32 = arith.constant 0 : i32
    %c0_i32_0 = arith.constant 0 : i32
    %c0_i32_1 = arith.constant 0 : i32
    return %c0_i32, %c0_i32_0 : i32, i32
  }
  func.func @transform_8(%arg0: i32) -> (i32, i32) {
    %c0_i32 = arith.constant 0 : i32
    %c0_i32_0 = arith.constant 0 : i32
    %c0_i32_1 = arith.constant 0 : i32
    return %c0_i32, %c0_i32_0 : i32, i32
  }
  func.func @transform_9(%arg0: i32) -> (i32, i32) {
    %c0_i32 = arith.constant 0 : i32
    %c0_i32_0 = arith.constant 0 : i32
    %c0_i32_1 = arith.constant 0 : i32
    return %c0_i32, %c0_i32_0 : i32, i32
  }
  func.func @transform_10(%arg0: i32) -> (i32, i32) {
    %c0_i32 = arith.constant 0 : i32
    %c0_i32_0 = arith.constant 0 : i32
    %c0_i32_1 = arith.constant 0 : i32
    return %c0_i32, %c0_i32_0 : i32, i32
  }
  func.func @transform_11(%arg0: i32) -> (i32, i32) {
    %c0_i32 = arith.constant 0 : i32
    %c0_i32_0 = arith.constant 0 : i32
    %c0_i32_1 = arith.constant 0 : i32
    return %c0_i32, %c0_i32_0 : i32, i32
  }
  func.func @transform_12(%arg0: i32) -> (i32, i32) {
    %c0_i32 = arith.constant 0 : i32
    %c0_i32_0 = arith.constant 0 : i32
    %c0_i32_1 = arith.constant 0 : i32
    return %c0_i32, %c0_i32_0 : i32, i32
  }
  func.func @transform_13(%arg0: i32) -> (i32, i32) {
    %c0_i32 = arith.constant 0 : i32
    %c0_i32_0 = arith.constant 0 : i32
    return %arg0, %c0_i32 : i32, i32
  }
}

</mosaic_0001>

<llo_original>
// kernel: tpu_custom_call.1
$region0: #{tpu_custom_call.1}
  #allocation0 [shape = 'u32[]', space=smem, size = 0x4, offset = 0x4, fixed_abs, tag = 'smem constant byte address 0x4 - core index']
  #allocation1 [shape = 'u32[144,128]{1,0:T(1,128)}', space=vmem, size = 0x12000, scoped, tag = 'internal scratch']
  %s0 = inlined_call_operand.vmem [shape: f32[2250,399], index: 0, kind: input, shape index: {}]
  %s1 = inlined_call_operand.vmem [shape: bf16[399,32], index: 1, kind: input, shape index: {}]
  %s2 = inlined_call_operand.vmem [shape: f32[1,32], index: 2, kind: input, shape index: {}]
  %s3 = inlined_call_operand.vmem [shape: f32[32,32], index: 3, kind: input, shape index: {}]
  %s4 = inlined_call_operand.vmem [shape: f32[1,32], index: 4, kind: input, shape index: {}]
  %s5 = inlined_call_operand.vmem [shape: f32[32,32], index: 5, kind: input, shape index: {}]
  %s6 = inlined_call_operand.vmem [shape: f32[1,32], index: 6, kind: input, shape index: {}]
  %s7 = inlined_call_operand.vmem [shape: f32[32,16], index: 7, kind: input, shape index: {}]
  %s8 = inlined_call_operand.vmem [shape: f32[1,16], index: 8, kind: input, shape index: {}]
  %s9 = inlined_call_operand.vmem [shape: f32[16,16], index: 9, kind: input, shape index: {}]
  %s10 = inlined_call_operand.vmem [shape: f32[1,16], index: 10, kind: input, shape index: {}]
  %s11 = inlined_call_operand.vmem [shape: f32[16,16], index: 11, kind: input, shape index: {}]
  %s12 = inlined_call_operand.vmem [shape: f32[1,16], index: 12, kind: input, shape index: {}]
  %s13 = inlined_call_operand.vmem [shape: f32[2250,16], index: 13, kind: output, shape index: {}]
  %s14 = sld [smem:[#allocation0]]
  $region133: #{tpu_custom_call.1} parent=0
    _
  %s16 = ssub.s32 1, %s14
  %s17 = scalar_select 0, %s16, %s14
  $region1: #{tpu_custom_call.1} parent=0
    #allocation2 [shape = 'u8[294912]{0}', space=vmem, size = 0x48000, scoped, tag = 'output window, operand 0']
    loop: start=0, step=1, limit=10
    $region2: #{tpu_custom_call.1} parent=1 // loop_pre_header
      _
    $region3: #{tpu_custom_call.1} parent=1 // loop_header
      %s19 = sphi 0, %s23
      %p20 = scmp.ge.s32.totalorder %s19, 10
      %s29 = sphi 0, %s31
      %s32 = sphi 0, %s29
      %s33 = sphi 0, %s32
      %s49 = sphi 0, %s33
      %s53 = sphi 0, %s53
      %s55 = sphi 0, %s53
      %s56 = sphi 0, %s55
      %s70 = sphi 0, %s56
      %s74 = sphi 0, %s74
      %s76 = sphi 0, %s74
      %s77 = sphi 0, %s76
      %s91 = sphi 0, %s77
      %s95 = sphi 0, %s95
      %s97 = sphi 0, %s95
      %s98 = sphi 0, %s97
      %s112 = sphi 0, %s98
      %s116 = sphi 0, %s116
      %s118 = sphi 0, %s116
      %s119 = sphi 0, %s118
      %s133 = sphi 0, %s119
      %s137 = sphi 0, %s137
      %s139 = sphi 0, %s137
      %s140 = sphi 0, %s139
      %s154 = sphi 0, %s140
      %s158 = sphi 0, %s158
      %s160 = sphi 0, %s158
      %s161 = sphi 0, %s160
      %s175 = sphi 0, %s161
      %s179 = sphi 0, %s179
      %s181 = sphi 0, %s179
      %s182 = sphi 0, %s181
      %s196 = sphi 0, %s182
      %s200 = sphi 0, %s200
      %s202 = sphi 0, %s200
      %s203 = sphi 0, %s202
      %s217 = sphi 0, %s203
      %s221 = sphi 0, %s221
      %s223 = sphi 0, %s221
      %s224 = sphi 0, %s223
      %s238 = sphi 0, %s224
      %s242 = sphi 0, %s242
      %s244 = sphi 0, %s242
      %s245 = sphi 0, %s244
      %s259 = sphi 0, %s245
      %s263 = sphi 0, %s263
      %s265 = sphi 0, %s263
      %s266 = sphi 0, %s265
      %s280 = sphi 0, %s266
      %s284 = sphi 0, %s284
      %s286 = sphi 0, %s284
      %s287 = sphi 0, %s286
      %s301 = sphi 0, %s287
      %s307 = sphi 0, %s309
      %s310 = sphi 0, %s307
      %s311 = sphi 0, %s310
      %s327 = sphi 0, %s311
    $region4: #{tpu_custom_call.1} parent=1 // loop_header_branch
      %22 = sbr.rel (%p20) target = $region8
    $region5: #{tpu_custom_call.1} parent=1 // loop_body
      %s24 = ssub.s32 %s19, 1
      %s25 = ssub.s32 %s19, 2
      %s26 = sadd.s32 %s19, 1
      %s27 = ssub.s32 %s19, %s26
      %p28 = scmp.eq.s32.totalorder %s27, 0
      %s30 = sadd.s32 %s29, 1
      %s31 = scalar_select %p28, %s29, %s30
      %p34 = pneg %p28
      %p35 = scmp.eq.s32.totalorder %s19, 7
      %p36 = por %p34, %p35
      %p37 = scmp.ne.s32.totalorder %s29, %s32
      %p38 = scmp.eq.s32.totalorder %s19, 0
      %p39 = por %p37, %p38
      %p40 = scmp.ne.s32.totalorder %s29, %s32
      %p41 = scmp.eq.s32.totalorder %s24, 7
      %p42 = por %p40, %p41
      %p43 = scmp.ne.s32.totalorder %s32, %s33
      %p44 = scmp.eq.s32.totalorder %s24, 0
      %p45 = por %p43, %p44
      %p46 = scmp.ne.s32.totalorder %s32, %s33
      %p47 = scmp.eq.s32.totalorder %s25, 7
      %p48 = por %p46, %p47
      %p50 = scmp.ne.s32.totalorder %s33, %s49
      %p51 = scmp.eq.s32.totalorder %s25, 0
      %p52 = por %p50, %p51
      %s54 = sadd.s32 %s53, 1
      %p57 = scmp.eq.s32.totalorder %s19, 7
      %p58 = scmp.ne.s32.totalorder %s53, %s55
      %p59 = scmp.eq.s32.totalorder %s19, 0
      %p60 = por %p58, %p59
      %p61 = scmp.ne.s32.totalorder %s53, %s55
      %p62 = scmp.eq.s32.totalorder %s24, 7
      %p63 = por %p61, %p62
      %p64 = scmp.ne.s32.totalorder %s55, %s56
      %p65 = scmp.eq.s32.totalorder %s24, 0
      %p66 = por %p64, %p65
      %p67 = scmp.ne.s32.totalorder %s55, %s56
      %p68 = scmp.eq.s32.totalorder %s25, 7
      %p69 = por %p67, %p68
      %p71 = scmp.ne.s32.totalorder %s56, %s70
      %p72 = scmp.eq.s32.totalorder %s25, 0
      %p73 = por %p71, %p72
      %s75 = sadd.s32 %s74, 1
      %p78 = scmp.eq.s32.totalorder %s19, 7
      %p79 = scmp.ne.s32.totalorder %s74, %s76
      %p80 = scmp.eq.s32.totalorder %s19, 0
      %p81 = por %p79, %p80
      %p82 = scmp.ne.s32.totalorder %s74, %s76
      %p83 = scmp.eq.s32.totalorder %s24, 7
      %p84 = por %p82, %p83
      %p85 = scmp.ne.s32.totalorder %s76, %s77
      %p86 = scmp.eq.s32.totalorder %s24, 0
      %p87 = por %p85, %p86
      %p88 = scmp.ne.s32.totalorder %s76, %s77
      %p89 = scmp.eq.s32.totalorder %s25, 7
      %p90 = por %p88, %p89
      %p92 = scmp.ne.s32.totalorder %s77, %s91
      %p93 = scmp.eq.s32.totalorder %s25, 0
      %p94 = por %p92, %p93
      %s96 = sadd.s32 %s95, 1
      %p99 = scmp.eq.s32.totalorder %s19, 7
      %p100 = scmp.ne.s32.totalorder %s95, %s97
      %p101 = scmp.eq.s32.totalorder %s19, 0
      %p102 = por %p100, %p101
      %p103 = scmp.ne.s32.totalorder %s95, %s97
      %p104 = scmp.eq.s32.totalorder %s24, 7
      %p105 = por %p103, %p104
      %p106 = scmp.ne.s32.totalorder %s97, %s98
      %p107 = scmp.eq.s32.totalorder %s24, 0
      %p108 = por %p106, %p107
      %p109 = scmp.ne.s32.totalorder %s97, %s98
      %p110 = scmp.eq.s32.totalorder %s25, 7
      %p111 = por %p109, %p110
      %p113 = scmp.ne.s32.totalorder %s98, %s112
      %p114 = scmp.eq.s32.totalorder %s25, 0
      %p115 = por %p113, %p114
      %s117 = sadd.s32 %s116, 1
      %p120 = scmp.eq.s32.totalorder %s19, 7
      %p121 = scmp.ne.s32.totalorder %s116, %s118
      %p122 = scmp.eq.s32.totalorder %s19, 0
      %p123 = por %p121, %p122
      %p124 = scmp.ne.s32.totalorder %s116, %s118
      %p125 = scmp.eq.s32.totalorder %s24, 7
      %p126 = por %p124, %p125
      %p127 = scmp.ne.s32.totalorder %s118, %s119
      %p128 = scmp.eq.s32.totalorder %s24, 0
      %p129 = por %p127, %p128
      %p130 = scmp.ne.s32.totalorder %s118, %s119
      %p131 = scmp.eq.s32.totalorder %s25, 7
      %p132 = por %p130, %p131
      %p134 = scmp.ne.s32.totalorder %s119, %s133
      %p135 = scmp.eq.s32.totalorder %s25, 0
      %p136 = por %p134, %p135
      %s138 = sadd.s32 %s137, 1
      %p141 = scmp.eq.s32.totalorder %s19, 7
      %p142 = scmp.ne.s32.totalorder %s137, %s139
      %p143 = scmp.eq.s32.totalorder %s19, 0
      %p144 = por %p142, %p143
      %p145 = scmp.ne.s32.totalorder %s137, %s139
      %p146 = scmp.eq.s32.totalorder %s24, 7
      %p147 = por %p145, %p146
      %p148 = scmp.ne.s32.totalorder %s139, %s140
      %p149 = scmp.eq.s32.totalorder %s24, 0
      %p150 = por %p148, %p149
      %p151 = scmp.ne.s32.totalorder %s139, %s140
      %p152 = scmp.eq.s32.totalorder %s25, 7
      %p153 = por %p151, %p152
      %p155 = scmp.ne.s32.totalorder %s140, %s154
      %p156 = scmp.eq.s32.totalorder %s25, 0
      %p157 = por %p155, %p156
      %s159 = sadd.s32 %s158, 1
      %p162 = scmp.eq.s32.totalorder %s19, 7
      %p163 = scmp.ne.s32.totalorder %s158, %s160
      %p164 = scmp.eq.s32.totalorder %s19, 0
      %p165 = por %p163, %p164
      %p166 = scmp.ne.s32.totalorder %s158, %s160
      %p167 = scmp.eq.s32.totalorder %s24, 7
      %p168 = por %p166, %p167
      %p169 = scmp.ne.s32.totalorder %s160, %s161
      %p170 = scmp.eq.s32.totalorder %s24, 0
      %p171 = por %p169, %p170
      %p172 = scmp.ne.s32.totalorder %s160, %s161
      %p173 = scmp.eq.s32.totalorder %s25, 7
      %p174 = por %p172, %p173
      %p176 = scmp.ne.s32.totalorder %s161, %s175
      %p177 = scmp.eq.s32.totalorder %s25, 0
      %p178 = por %p176, %p177
      %s180 = sadd.s32 %s179, 1
      %p183 = scmp.eq.s32.totalorder %s19, 7
      %p184 = scmp.ne.s32.totalorder %s179, %s181
      %p185 = scmp.eq.s32.totalorder %s19, 0
      %p186 = por %p184, %p185
      %p187 = scmp.ne.s32.totalorder %s179, %s181
      %p188 = scmp.eq.s32.totalorder %s24, 7
      %p189 = por %p187, %p188
      %p190 = scmp.ne.s32.totalorder %s181, %s182
      %p191 = scmp.eq.s32.totalorder %s24, 0
      %p192 = por %p190, %p191
      %p193 = scmp.ne.s32.totalorder %s181, %s182
      %p194 = scmp.eq.s32.totalorder %s25, 7
      %p195 = por %p193, %p194
      %p197 = scmp.ne.s32.totalorder %s182, %s196
      %p198 = scmp.eq.s32.totalorder %s25, 0
      %p199 = por %p197, %p198
      %s201 = sadd.s32 %s200, 1
      %p204 = scmp.eq.s32.totalorder %s19, 7
      %p205 = scmp.ne.s32.totalorder %s200, %s202
      %p206 = scmp.eq.s32.totalorder %s19, 0
      %p207 = por %p205, %p206
      %p208 = scmp.ne.s32.totalorder %s200, %s202
      %p209 = scmp.eq.s32.totalorder %s24, 7
      %p210 = por %p208, %p209
      %p211 = scmp.ne.s32.totalorder %s202, %s203
      %p212 = scmp.eq.s32.totalorder %s24, 0
      %p213 = por %p211, %p212
      %p214 = scmp.ne.s32.totalorder %s202, %s203
      %p215 = scmp.eq.s32.totalorder %s25, 7
      %p216 = por %p214, %p215
      %p218 = scmp.ne.s32.totalorder %s203, %s217
      %p219 = scmp.eq.s32.totalorder %s25, 0
      %p220 = por %p218, %p219
      %s222 = sadd.s32 %s221, 1
      %p225 = scmp.eq.s32.totalorder %s19, 7
      %p226 = scmp.ne.s32.totalorder %s221, %s223
      %p227 = scmp.eq.s32.totalorder %s19, 0
      %p228 = por %p226, %p227
      %p229 = scmp.ne.s32.totalorder %s221, %s223
      %p230 = scmp.eq.s32.totalorder %s24, 7
      %p231 = por %p229, %p230
      %p232 = scmp.ne.s32.totalorder %s223, %s224
      %p233 = scmp.eq.s32.totalorder %s24, 0
      %p234 = por %p232, %p233
      %p235 = scmp.ne.s32.totalorder %s223, %s224
      %p236 = scmp.eq.s32.totalorder %s25, 7
      %p237 = por %p235, %p236
      %p239 = scmp.ne.s32.totalorder %s224, %s238
      %p240 = scmp.eq.s32.totalorder %s25, 0
      %p241 = por %p239, %p240
      %s243 = sadd.s32 %s242, 1
      %p246 = scmp.eq.s32.totalorder %s19, 7
      %p247 = scmp.ne.s32.totalorder %s242, %s244
      %p248 = scmp.eq.s32.totalorder %s19, 0
      %p249 = por %p247, %p248
      %p250 = scmp.ne.s32.totalorder %s242, %s244
      %p251 = scmp.eq.s32.totalorder %s24, 7
      %p252 = por %p250, %p251
      %p253 = scmp.ne.s32.totalorder %s244, %s245
      %p254 = scmp.eq.s32.totalorder %s24, 0
      %p255 = por %p253, %p254
      %p256 = scmp.ne.s32.totalorder %s244, %s245
      %p257 = scmp.eq.s32.totalorder %s25, 7
      %p258 = por %p256, %p257
      %p260 = scmp.ne.s32.totalorder %s245, %s259
      %p261 = scmp.eq.s32.totalorder %s25, 0
      %p262 = por %p260, %p261
      %s264 = sadd.s32 %s263, 1
      %p267 = scmp.eq.s32.totalorder %s19, 7
      %p268 = scmp.ne.s32.totalorder %s263, %s265
      %p269 = scmp.eq.s32.totalorder %s19, 0
      %p270 = por %p268, %p269
      %p271 = scmp.ne.s32.totalorder %s263, %s265
      %p272 = scmp.eq.s32.totalorder %s24, 7
      %p273 = por %p271, %p272
      %p274 = scmp.ne.s32.totalorder %s265, %s266
      %p275 = scmp.eq.s32.totalorder %s24, 0
      %p276 = por %p274, %p275
      %p277 = scmp.ne.s32.totalorder %s265, %s266
      %p278 = scmp.eq.s32.totalorder %s25, 7
      %p279 = por %p277, %p278
      %p281 = scmp.ne.s32.totalorder %s266, %s280
      %p282 = scmp.eq.s32.totalorder %s25, 0
      %p283 = por %p281, %p282
      %s285 = sadd.s32 %s284, 1
      %p288 = scmp.eq.s32.totalorder %s19, 7
      %p289 = scmp.ne.s32.totalorder %s284, %s286
      %p290 = scmp.eq.s32.totalorder %s19, 0
      %p291 = por %p289, %p290
      %p292 = scmp.ne.s32.totalorder %s284, %s286
      %p293 = scmp.eq.s32.totalorder %s24, 7
      %p294 = por %p292, %p293
      %p295 = scmp.ne.s32.totalorder %s286, %s287
      %p296 = scmp.eq.s32.totalorder %s24, 0
      %p297 = por %p295, %p296
      %p298 = scmp.ne.s32.totalorder %s286, %s287
      %p299 = scmp.eq.s32.totalorder %s25, 7
      %p300 = por %p298, %p299
      %p302 = scmp.ne.s32.totalorder %s287, %s301
      %p303 = scmp.eq.s32.totalorder %s25, 0
      %p304 = por %p302, %p303
      %s305 = ssub.s32 %s19, %s26
      %p306 = scmp.eq.s32.totalorder %s305, 0
      %s308 = sadd.s32 %s307, 1
      %s309 = scalar_select %p306, %s307, %s308
      %p312 = pneg %p306
      %p313 = scmp.eq.s32.totalorder %s19, 7
      %p314 = por %p312, %p313
      %p315 = scmp.ne.s32.totalorder %s307, %s310
      %p316 = scmp.eq.s32.totalorder %s19, 0
      %p317 = por %p315, %p316
      %p318 = scmp.ne.s32.totalorder %s307, %s310
      %p319 = scmp.eq.s32.totalorder %s24, 7
      %p320 = por %p318, %p319
      %p321 = scmp.ne.s32.totalorder %s310, %s311
      %p322 = scmp.eq.s32.totalorder %s24, 0
      %p323 = por %p321, %p322
      %p324 = scmp.ne.s32.totalorder %s310, %s311
      %p325 = scmp.eq.s32.totalorder %s25, 7
      %p326 = por %p324, %p325
      %p328 = scmp.ne.s32.totalorder %s311, %s327
      %p329 = scmp.eq.s32.totalorder %s25, 0
      %p330 = por %p328, %p329
      %p331 = scmp.le.s32.totalorder 1, %s19
      %p332 = scmp.lt.s32.totalorder %s19, 9
      %p333 = pnand %p331, %p332
      %p334 = pneg %p333
      // Predicated region
      $region9: #{tpu_custom_call.1} parent=5 // pred_check
        _
      $region10: #{tpu_custom_call.1} parent=5 // pred_check_branch
        %336 = sbr.rel (%p333) target = $region12
      $region11: #{tpu_custom_call.1} parent=5 // pred_region
        %s337 = ssub.s32 %s19, 1
        // Predicated region
        $region13: #{tpu_custom_call.1} parent=11 // pred_check
          %p338 = pneg %p66
        $region14: #{tpu_custom_call.1} parent=11 // pred_check_branch
          %340 = sbr.rel (%p338) target = $region16
        $region15: #{tpu_custom_call.1} parent=11 // pred_region
          _
        $region16: #{tpu_custom_call.1} parent=11 // pred_fallthru
          _
        // Predicated region
        $region17: #{tpu_custom_call.1} parent=11 // pred_check
          %p341 = pneg %p87
        $region18: #{tpu_custom_call.1} parent=11 // pred_check_branch
          %343 = sbr.rel (%p341) target = $region20
        $region19: #{tpu_custom_call.1} parent=11 // pred_region
          _
        $region20: #{tpu_custom_call.1} parent=11 // pred_fallthru
          _
        // Predicated region
        $region21: #{tpu_custom_call.1} parent=11 // pred_check
          %p344 = pneg %p108
        $region22: #{tpu_custom_call.1} parent=11 // pred_check_branch
          %346 = sbr.rel (%p344) target = $region24
        $region23: #{tpu_custom_call.1} parent=11 // pred_region
          _
        $region24: #{tpu_custom_call.1} parent=11 // pred_fallthru
          _
        // Predicated region
        $region25: #{tpu_custom_call.1} parent=11 // pred_check
          %p347 = pneg %p129
        $region26: #{tpu_custom_call.1} parent=11 // pred_check_branch
          %349 = sbr.rel (%p347) target = $region28
        $region27: #{tpu_custom_call.1} parent=11 // pred_region
          _
        $region28: #{tpu_custom_call.1} parent=11 // pred_fallthru
          _
        // Predicated region
        $region29: #{tpu_custom_call.1} parent=11 // pred_check
          %p350 = pneg %p150
        $region30: #{tpu_custom_call.1} parent=11 // pred_check_branch
          %352 = sbr.rel (%p350) target = $region32
        $region31: #{tpu_custom_call.1} parent=11 // pred_region
          _
        $region32: #{tpu_custom_call.1} parent=11 // pred_fallthru
          _
        // Predicated region
        $region33: #{tpu_custom_call.1} parent=11 // pred_check
          %p353 = pneg %p171
        $region34: #{tpu_custom_call.1} parent=11 // pred_check_branch
          %355 = sbr.rel (%p353) target = $region36
        $region35: #{tpu_custom_call.1} parent=11 // pred_region
          _
        $region36: #{tpu_custom_call.1} parent=11 // pred_fallthru
          _
        // Predicated region
        $region37: #{tpu_custom_call.1} parent=11 // pred_check
          %p356 = pneg %p192
        $region38: #{tpu_custom_call.1} parent=11 // pred_check_branch
          %358 = sbr.rel (%p356) target = $region40
        $region39: #{tpu_custom_call.1} parent=11 // pred_region
          _
        $region40: #{tpu_custom_call.1} parent=11 // pred_fallthru
          _
        // Predicated region
        $region41: #{tpu_custom_call.1} parent=11 // pred_check
          %p359 = pneg %p213
        $region42: #{tpu_custom_call.1} parent=11 // pred_check_branch
          %361 = sbr.rel (%p359) target = $region44
        $region43: #{tpu_custom_call.1} parent=11 // pred_region
          _
        $region44: #{tpu_custom_call.1} parent=11 // pred_fallthru
          _
        // Predicated region
        $region45: #{tpu_custom_call.1} parent=11 // pred_check
          %p362 = pneg %p234
        $region46: #{tpu_custom_call.1} parent=11 // pred_check_branch
          %364 = sbr.rel (%p362) target = $region48
        $region47: #{tpu_custom_call.1} parent=11 // pred_region
          _
        $region48: #{tpu_custom_call.1} parent=11 // pred_fallthru
          _
        // Predicated region
        $region49: #{tpu_custom_call.1} parent=11 // pred_check
          %p365 = pneg %p255
        $region50: #{tpu_custom_call.1} parent=11 // pred_check_branch
          %367 = sbr.rel (%p365) target = $region52
        $region51: #{tpu_custom_call.1} parent=11 // pred_region
          _
        $region52: #{tpu_custom_call.1} parent=11 // pred_fallthru
          _
        // Predicated region
        $region53: #{tpu_custom_call.1} parent=11 // pred_check
          %p368 = pneg %p276
        $region54: #{tpu_custom_call.1} parent=11 // pred_check_branch
          %370 = sbr.rel (%p368) target = $region56
        $region55: #{tpu_custom_call.1} parent=11 // pred_region
          _
        $region56: #{tpu_custom_call.1} parent=11 // pred_fallthru
          _
        // Predicated region
        $region57: #{tpu_custom_call.1} parent=11 // pred_check
          %p371 = pneg %p297
        $region58: #{tpu_custom_call.1} parent=11 // pred_check_branch
          %373 = sbr.rel (%p371) target = $region60
        $region59: #{tpu_custom_call.1} parent=11 // pred_region
          _
        $region60: #{tpu_custom_call.1} parent=11 // pred_fallthru
          _
      $region12: #{tpu_custom_call.1} parent=5 // pred_fallthru
        _
      %p374 = scmp.lt.s32.totalorder %s19, 8
      // Predicated region
      $region61: #{tpu_custom_call.1} parent=5 // pred_check
        %p375 = pneg %p374
      $region62: #{tpu_custom_call.1} parent=5 // pred_check_branch
        %377 = sbr.rel (%p375) target = $region64
      $region63: #{tpu_custom_call.1} parent=5 // pred_region
        // Predicated region
        $region65: #{tpu_custom_call.1} parent=63 // pred_check
          %p378 = pneg %p39
        $region66: #{tpu_custom_call.1} parent=63 // pred_check_branch
          %380 = sbr.rel (%p378) target = $region68
        $region67: #{tpu_custom_call.1} parent=63 // pred_region
          %s381 = smul.u32 36, %s19
          %s382 = ssub.s32 282, %s381
          %p383 = scmp.lt.s32.totalorder %s382, 36
          %s384 = scalar_select %p383, %s382, 36
          %s385 = smul.u32 128, %s384
          %s386 = smul.u32 %s385, 4
          %p387 = scmp.lt.s32.totalorder %s381, 281
          %s388 = scalar_select %p387, %s381, 281
          %s389 = smul.addr %s388, 4
          %s390 = smul.addr %s389, 8
          %s391 = scalar_lea.vmem %s0, %s390
          %s392 = smul.u32 36, %s19
          %s393 = ssub.s32 282, %s392
          %p394 = scmp.lt.s32.totalorder %s393, 36
          %s395 = scalar_select %p394, %s393, 36
          %s396 = smul.u32 128, %s395
          %s397 = smul.u32 %s396, 4
        $region68: #{tpu_custom_call.1} parent=63 // pred_fallthru
          _
      $region64: #{tpu_custom_call.1} parent=5 // pred_fallthru
        _
      %p398 = scmp.le.s32.totalorder 1, %s19
      %p399 = scmp.lt.s32.totalorder %s19, 9
      %p400 = pnand %p398, %p399
      %p401 = pneg %p400
      // Predicated region
      $region69: #{tpu_custom_call.1} parent=5 // pred_check
        _
      $region70: #{tpu_custom_call.1} parent=5 // pred_check_branch
        %403 = sbr.rel (%p400) target = $region72
      $region71: #{tpu_custom_call.1} parent=5 // pred_region
        %s404 = ssub.s32 %s19, 1
        %s405 = smul.u32 36, %s24
        %s406 = ssub.s32 282, %s405
        %p407 = scmp.lt.s32.totalorder %s406, 36
        %s408 = scalar_select %p407, %s406, 36
        %s409 = smul.u32 128, %s408
        %s410 = smul.u32 %s409, 4
        %p411 = scmp.lt.s32.totalorder %s405, 281
        %s412 = scalar_select %p411, %s405, 281
        %s413 = smul.addr %s412, 4
        %s414 = smul.addr %s413, 8
        %s415 = scalar_lea.vmem %s0, %s414
        %p416 = pneg %p45
        %p417 = pneg %p42
        %p418 = pneg %p66
        %p419 = pneg %p63
        %p420 = pneg %p87
        %p421 = pneg %p84
        %p422 = pneg %p108
        %p423 = pneg %p105
        %p424 = pneg %p129
        %p425 = pneg %p126
        %p426 = pneg %p150
        %p427 = pneg %p147
        %p428 = pneg %p171
        %p429 = pneg %p168
        %p430 = pneg %p192
        %p431 = pneg %p189
        %p432 = pneg %p213
        %p433 = pneg %p210
        %p434 = pneg %p234
        %p435 = pneg %p231
        %p436 = pneg %p255
        %p437 = pneg %p252
        %p438 = pneg %p276
        %p439 = pneg %p273
        %p440 = pneg %p297
        %p441 = pneg %p294
        %p442 = pneg %p323
        %p443 = pneg %p320
        %s444 = sand.u32 %s310, 1
        %s445 = sand.u32 %s310, 1
        %s446 = smul.addr %s445, 288
        %s447 = scalar_lea.vmem [#allocation2], %s446
        %s448 = smul.u32 36, %s24
        %s449 = ssub.s32 282, %s448
        %p450 = scmp.lt.s32.totalorder %s449, 36
        %s451 = scalar_select %p450, %s449, 36
        %s452 = smul.u32 128, %s451
        %s453 = smul.u32 %s452, 4
        %p454 = scmp.lt.s32.totalorder %s448, 281
        %s455 = scalar_select %p454, %s448, 281
        %s456 = smul.addr %s455, 4
        %s457 = smul.addr %s456, 8
        %s458 = scalar_lea.vmem %s0, %s457
        %s459 = smul.u32 36, %s24
        %s460 = ssub.s32 282, %s459
        %p461 = scmp.lt.s32.totalorder %s460, 36
        %s462 = scalar_select %p461, %s460, 36
        %s463 = smul.u32 128, %s462
        %s464 = smul.u32 %s463, 4
        %s465 = smul.u32 36, %s24
        %s466 = ssub.s32 282, %s465
        %p467 = scmp.lt.s32.totalorder %s466, 36
        %s468 = scalar_select %p467, %s466, 36
        %s469 = smul.u32 128, %s468
        %v471 = vld [vmem:[%s458] sm:$0xff]
        %v472 = vld [vmem:[%s458 + $0x8] sm:$0xff]
        %v473 = vld [vmem:[%s458 + $0x10] sm:$0xff]
        %v474 = vld [vmem:[%s458 + $0x18] sm:$0xff]
        %v475 = vld [vmem:[%s458 + $0x20] sm:$0xff]
        %v476 = vld [vmem:[%s458 + $0x28] sm:$0xff]
        %v477 = vld [vmem:[%s458 + $0x30] sm:$0xff]
        %v478 = vld [vmem:[%s458 + $0x38] sm:$0xff]
        %v479 = vld [vmem:[%s458 + $0x40] sm:$0xff]
        %v480 = vld [vmem:[%s458 + $0x48] sm:$0xff]
        %v481 = vld [vmem:[%s458 + $0x50] sm:$0xff]
        %v482 = vld [vmem:[%s458 + $0x58] sm:$0xff]
        %v483 = vld [vmem:[%s458 + $0x60] sm:$0xff]
        %v484 = vld [vmem:[%s458 + $0x68] sm:$0xff]
        %v485 = vld [vmem:[%s458 + $0x70] sm:$0xff]
        %v486 = vld [vmem:[%s458 + $0x78] sm:$0xff]
        %v487 = vld [vmem:[%s458 + $0x80] sm:$0xff]
        %v488 = vld [vmem:[%s458 + $0x88] sm:$0xff]
        %v489 = vld [vmem:[%s458 + $0x90] sm:$0xff]
        %v490 = vld [vmem:[%s458 + $0x98] sm:$0xff]
        %v491 = vld [vmem:[%s458 + $0xa0] sm:$0xff]
        %v492 = vld [vmem:[%s458 + $0xa8] sm:$0xff]
        %v493 = vld [vmem:[%s458 + $0xb0] sm:$0xff]
        %v494 = vld [vmem:[%s458 + $0xb8] sm:$0xff]
        %v495 = vld [vmem:[%s458 + $0xc0] sm:$0xff]
        %v496 = vld [vmem:[%s458 + $0xc8] sm:$0xff]
        %v497 = vld [vmem:[%s458 + $0xd0] sm:$0xff]
        %v498 = vld [vmem:[%s458 + $0xd8] sm:$0xff]
        %v499 = vld [vmem:[%s458 + $0xe0] sm:$0xff]
        %v500 = vld [vmem:[%s458 + $0xe8] sm:$0xff]
        %v501 = vld [vmem:[%s458 + $0xf0] sm:$0xff]
        %v502 = vld [vmem:[%s458 + $0xf8] sm:$0xff]
        %v503 = vld [vmem:[%s458 + $0x100] sm:$0xff]
        %v504 = vld [vmem:[%s458 + $0x108] sm:$0xff]
        %v505 = vld [vmem:[%s458 + $0x110] sm:$0xff]
        %v506 = vld [vmem:[%s458 + $0x118] sm:$0xff]
        %v507 = vld [vmem:[%s458 + $0x120] sm:$0xff]
        %v508 = vld [vmem:[%s458 + $0x128] sm:$0xff]
        %v509 = vld [vmem:[%s458 + $0x130] sm:$0xff]
        %v510 = vld [vmem:[%s458 + $0x138] sm:$0xff]
        %v511 = vld [vmem:[%s458 + $0x140] sm:$0xff]
        %v512 = vld [vmem:[%s458 + $0x148] sm:$0xff]
        %v513 = vld [vmem:[%s458 + $0x150] sm:$0xff]
        %v514 = vld [vmem:[%s458 + $0x158] sm:$0xff]
        %v515 = vld [vmem:[%s458 + $0x160] sm:$0xff]
        %v516 = vld [vmem:[%s458 + $0x168] sm:$0xff]
        %v517 = vld [vmem:[%s458 + $0x170] sm:$0xff]
        %v518 = vld [vmem:[%s458 + $0x178] sm:$0xff]
        %v519 = vld [vmem:[%s458 + $0x180] sm:$0xff]
        %v520 = vld [vmem:[%s458 + $0x188] sm:$0xff]
        %v521 = vld [vmem:[%s458 + $0x190] sm:$0xff]
        %v522 = vld [vmem:[%s458 + $0x198] sm:$0xff]
        %v523 = vld [vmem:[%s458 + $0x1a0] sm:$0xff]
        %v524 = vld [vmem:[%s458 + $0x1a8] sm:$0xff]
        %v525 = vld [vmem:[%s458 + $0x1b0] sm:$0xff]
        %v526 = vld [vmem:[%s458 + $0x1b8] sm:$0xff]
        %v527 = vld [vmem:[%s458 + $0x1c0] sm:$0xff]
        %v528 = vld [vmem:[%s458 + $0x1c8] sm:$0xff]
        %v529 = vld [vmem:[%s458 + $0x1d0] sm:$0xff]
        %v530 = vld [vmem:[%s458 + $0x1d8] sm:$0xff]
        %v531 = vld [vmem:[%s458 + $0x1e0] sm:$0xff]
        %v532 = vld [vmem:[%s458 + $0x1e8] sm:$0xff]
        %v533 = vld [vmem:[%s458 + $0x1f0] sm:$0xff]
        %v534 = vld [vmem:[%s458 + $0x1f8] sm:$0xff]
        %v535 = vld [vmem:[%s458 + $0x200] sm:$0xff]
        %v536 = vld [vmem:[%s458 + $0x208] sm:$0xff]
        %v537 = vld [vmem:[%s458 + $0x210] sm:$0xff]
        %v538 = vld [vmem:[%s458 + $0x218] sm:$0xff]
        %v539 = vld [vmem:[%s458 + $0x220] sm:$0xff]
        %v540 = vld [vmem:[%s458 + $0x228] sm:$0xff]
        %v541 = vld [vmem:[%s458 + $0x230] sm:$0xff]
        %v542 = vld [vmem:[%s458 + $0x238] sm:$0xff]
        %v543 = vld [vmem:[%s458 + $0x240] sm:$0xff]
        %v544 = vld [vmem:[%s458 + $0x248] sm:$0xff]
        %v545 = vld [vmem:[%s458 + $0x250] sm:$0xff]
        %v546 = vld [vmem:[%s458 + $0x258] sm:$0xff]
        %v547 = vld [vmem:[%s458 + $0x260] sm:$0xff]
        %v548 = vld [vmem:[%s458 + $0x268] sm:$0xff]
        %v549 = vld [vmem:[%s458 + $0x270] sm:$0xff]
        %v550 = vld [vmem:[%s458 + $0x278] sm:$0xff]
        %v551 = vld [vmem:[%s458 + $0x280] sm:$0xff]
        %v552 = vld [vmem:[%s458 + $0x288] sm:$0xff]
        %v553 = vld [vmem:[%s458 + $0x290] sm:$0xff]
        %v554 = vld [vmem:[%s458 + $0x298] sm:$0xff]
        %v555 = vld [vmem:[%s458 + $0x2a0] sm:$0xff]
        %v556 = vld [vmem:[%s458 + $0x2a8] sm:$0xff]
        %v557 = vld [vmem:[%s458 + $0x2b0] sm:$0xff]
        %v558 = vld [vmem:[%s458 + $0x2b8] sm:$0xff]
        %v559 = vld [vmem:[%s458 + $0x2c0] sm:$0xff]
        %v560 = vld [vmem:[%s458 + $0x2c8] sm:$0xff]
        %v561 = vld [vmem:[%s458 + $0x2d0] sm:$0xff]
        %v562 = vld [vmem:[%s458 + $0x2d8] sm:$0xff]
        %v563 = vld [vmem:[%s458 + $0x2e0] sm:$0xff]
        %v564 = vld [vmem:[%s458 + $0x2e8] sm:$0xff]
        %v565 = vld [vmem:[%s458 + $0x2f0] sm:$0xff]
        %v566 = vld [vmem:[%s458 + $0x2f8] sm:$0xff]
        %v567 = vld [vmem:[%s458 + $0x300] sm:$0xff]
        %v568 = vld [vmem:[%s458 + $0x308] sm:$0xff]
        %v569 = vld [vmem:[%s458 + $0x310] sm:$0xff]
        %v570 = vld [vmem:[%s458 + $0x318] sm:$0xff]
        %v571 = vld [vmem:[%s458 + $0x320] sm:$0xff]
        %v572 = vld [vmem:[%s458 + $0x328] sm:$0xff]
        %v573 = vld [vmem:[%s458 + $0x330] sm:$0xff]
        %v574 = vld [vmem:[%s458 + $0x338] sm:$0xff]
        %v575 = vld [vmem:[%s458 + $0x340] sm:$0xff]
        %v576 = vld [vmem:[%s458 + $0x348] sm:$0xff]
        %v577 = vld [vmem:[%s458 + $0x350] sm:$0xff]
        %v578 = vld [vmem:[%s458 + $0x358] sm:$0xff]
        %v579 = vld [vmem:[%s458 + $0x360] sm:$0xff]
        %v580 = vld [vmem:[%s458 + $0x368] sm:$0xff]
        %v581 = vld [vmem:[%s458 + $0x370] sm:$0xff]
        %v582 = vld [vmem:[%s458 + $0x378] sm:$0xff]
        %v583 = vld [vmem:[%s458 + $0x380] sm:$0xff]
        %v584 = vld [vmem:[%s458 + $0x388] sm:$0xff]
        %v585 = vld [vmem:[%s458 + $0x390] sm:$0xff]
        %v586 = vld [vmem:[%s458 + $0x398] sm:$0xff]
        %v587 = vld [vmem:[%s458 + $0x3a0] sm:$0xff]
        %v588 = vld [vmem:[%s458 + $0x3a8] sm:$0xff]
        %v589 = vld [vmem:[%s458 + $0x3b0] sm:$0xff]
        %v590 = vld [vmem:[%s458 + $0x3b8] sm:$0xff]
        %v591 = vld [vmem:[%s458 + $0x3c0] sm:$0xff]
        %v592 = vld [vmem:[%s458 + $0x3c8] sm:$0xff]
        %v593 = vld [vmem:[%s458 + $0x3d0] sm:$0xff]
        %v594 = vld [vmem:[%s458 + $0x3d8] sm:$0xff]
        %v595 = vld [vmem:[%s458 + $0x3e0] sm:$0xff]
        %v596 = vld [vmem:[%s458 + $0x3e8] sm:$0xff]
        %v597 = vld [vmem:[%s458 + $0x3f0] sm:$0xff]
        %v598 = vld [vmem:[%s458 + $0x3f8] sm:$0xff]
        %v599 = vld [vmem:[%s458 + $0x400] sm:$0xff]
        %v600 = vld [vmem:[%s458 + $0x408] sm:$0xff]
        %v601 = vld [vmem:[%s458 + $0x410] sm:$0xff]
        %v602 = vld [vmem:[%s458 + $0x418] sm:$0xff]
        %v603 = vld [vmem:[%s458 + $0x420] sm:$0xff]
        %v604 = vld [vmem:[%s458 + $0x428] sm:$0xff]
        %v605 = vld [vmem:[%s458 + $0x430] sm:$0xff]
        %v606 = vld [vmem:[%s458 + $0x438] sm:$0xff]
        %v607 = vld [vmem:[%s458 + $0x440] sm:$0xff]
        %v608 = vld [vmem:[%s458 + $0x448] sm:$0xff]
        %v609 = vld [vmem:[%s458 + $0x450] sm:$0xff]
        %v610 = vld [vmem:[%s458 + $0x458] sm:$0xff]
        %v611 = vld [vmem:[%s458 + $0x460] sm:$0xff]
        %v612 = vld [vmem:[%s458 + $0x468] sm:$0xff]
        %v613 = vld [vmem:[%s458 + $0x470] sm:$0xff]
        %v614 = vld [vmem:[%s458 + $0x478] sm:$0xff]
        %v615 = vpack.c.bf16 %v475, %v471
        %v616 = vpack.c.bf16 %v476, %v472
        %v617 = vpack.c.bf16 %v477, %v473
        %v618 = vpack.c.bf16 %v478, %v474
        %v619 = vpack.c.bf16 %v483, %v479
        %v620 = vpack.c.bf16 %v484, %v480
        %v621 = vpack.c.bf16 %v485, %v481
        %v622 = vpack.c.bf16 %v486, %v482
        %v623 = vpack.c.bf16 %v491, %v487
        %v624 = vpack.c.bf16 %v492, %v488
        %v625 = vpack.c.bf16 %v493, %v489
        %v626 = vpack.c.bf16 %v494, %v490
        %v627 = vpack.c.bf16 %v499, %v495
        %v628 = vpack.c.bf16 %v500, %v496
        %v629 = vpack.c.bf16 %v501, %v497
        %v630 = vpack.c.bf16 %v502, %v498
        %v631 = vpack.c.bf16 %v507, %v503
        %v632 = vpack.c.bf16 %v508, %v504
        %v633 = vpack.c.bf16 %v509, %v505
        %v634 = vpack.c.bf16 %v510, %v506
        %v635 = vpack.c.bf16 %v515, %v511
        %v636 = vpack.c.bf16 %v516, %v512
        %v637 = vpack.c.bf16 %v517, %v513
        %v638 = vpack.c.bf16 %v518, %v514
        %v639 = vpack.c.bf16 %v523, %v519
        %v640 = vpack.c.bf16 %v524, %v520
        %v641 = vpack.c.bf16 %v525, %v521
        %v642 = vpack.c.bf16 %v526, %v522
        %v643 = vpack.c.bf16 %v531, %v527
        %v644 = vpack.c.bf16 %v532, %v528
        %v645 = vpack.c.bf16 %v533, %v529
        %v646 = vpack.c.bf16 %v534, %v530
        %v647 = vpack.c.bf16 %v539, %v535
        %v648 = vpack.c.bf16 %v540, %v536
        %v649 = vpack.c.bf16 %v541, %v537
        %v650 = vpack.c.bf16 %v542, %v538
        %v651 = vpack.c.bf16 %v547, %v543
        %v652 = vpack.c.bf16 %v548, %v544
        %v653 = vpack.c.bf16 %v549, %v545
        %v654 = vpack.c.bf16 %v550, %v546
        %v655 = vpack.c.bf16 %v555, %v551
        %v656 = vpack.c.bf16 %v556, %v552
        %v657 = vpack.c.bf16 %v557, %v553
        %v658 = vpack.c.bf16 %v558, %v554
        %v659 = vpack.c.bf16 %v563, %v559
        %v660 = vpack.c.bf16 %v564, %v560
        %v661 = vpack.c.bf16 %v565, %v561
        %v662 = vpack.c.bf16 %v566, %v562
        %v663 = vpack.c.bf16 %v571, %v567
        %v664 = vpack.c.bf16 %v572, %v568
        %v665 = vpack.c.bf16 %v573, %v569
        %v666 = vpack.c.bf16 %v574, %v570
        %v667 = vpack.c.bf16 %v579, %v575
        %v668 = vpack.c.bf16 %v580, %v576
        %v669 = vpack.c.bf16 %v581, %v577
        %v670 = vpack.c.bf16 %v582, %v578
        %v671 = vpack.c.bf16 %v587, %v583
        %v672 = vpack.c.bf16 %v588, %v584
        %v673 = vpack.c.bf16 %v589, %v585
        %v674 = vpack.c.bf16 %v590, %v586
        %v675 = vpack.c.bf16 %v595, %v591
        %v676 = vpack.c.bf16 %v596, %v592
        %v677 = vpack.c.bf16 %v597, %v593
        %v678 = vpack.c.bf16 %v598, %v594
        %v679 = vpack.c.bf16 %v603, %v599
        %v680 = vpack.c.bf16 %v604, %v600
        %v681 = vpack.c.bf16 %v605, %v601
        %v682 = vpack.c.bf16 %v606, %v602
        %v683 = vpack.c.bf16 %v611, %v607
        %v684 = vpack.c.bf16 %v612, %v608
        %v685 = vpack.c.bf16 %v613, %v609
        %v686 = vpack.c.bf16 %v614, %v610
        %v687 = vld [vmem:[%s1] sm:$0xf]
        %v688 = vld [vmem:[%s1 + $0x4] sm:$0xf]
        %v689 = vld [vmem:[%s1 + $0x8] sm:$0xf]
        %v690 = vld [vmem:[%s1 + $0xc] sm:$0xf]
        %v691 = vld [vmem:[%s1 + $0x10] sm:$0xf]
        %v692 = vld [vmem:[%s1 + $0x14] sm:$0xf]
        %v693 = vld [vmem:[%s1 + $0x18] sm:$0xf]
        %v694 = vld [vmem:[%s1 + $0x1c] sm:$0xf]
        %v695 = vld [vmem:[%s1 + $0x20] sm:$0xf]
        %v696 = vld [vmem:[%s1 + $0x24] sm:$0xf]
        %v697 = vld [vmem:[%s1 + $0x28] sm:$0xf]
        %v698 = vld [vmem:[%s1 + $0x2c] sm:$0xf]
        %v699 = vld [vmem:[%s1 + $0x30] sm:$0xf]
        %v700 = vld [vmem:[%s1 + $0x34] sm:$0xf]
        %v701 = vld [vmem:[%s1 + $0x38] sm:$0xf]
        %v702 = vld [vmem:[%s1 + $0x3c] sm:$0xf]
        %v703 = vld [vmem:[%s1 + $0x40] sm:$0xf]
        %v704 = vld [vmem:[%s1 + $0x44] sm:$0xf]
        %v705 = vld [vmem:[%s1 + $0x48] sm:$0xf]
        %v706 = vld [vmem:[%s1 + $0x4c] sm:$0xf]
        %v707 = vld [vmem:[%s1 + $0x50] sm:$0xf]
        %v708 = vld [vmem:[%s1 + $0x54] sm:$0xf]
        %v709 = vld [vmem:[%s1 + $0x58] sm:$0xf]
        %v710 = vld [vmem:[%s1 + $0x5c] sm:$0xf]
        %v711 = vld [vmem:[%s1 + $0x60] sm:$0xf]
        %v712 = vld [vmem:[%s1 + $0x64] sm:$0xf]
        %v713 = vld [vmem:[%s1 + $0x68] sm:$0xf]
        %v714 = vld [vmem:[%s1 + $0x6c] sm:$0xf]
        %v715 = vld [vmem:[%s1 + $0x70] sm:$0xf]
        %v716 = vld [vmem:[%s1 + $0x74] sm:$0xf]
        %v717 = vld [vmem:[%s1 + $0x78] sm:$0xf]
        %v718 = vld [vmem:[%s1 + $0x7c] sm:$0xf]
        %v719 = vld [vmem:[%s1 + $0x80] sm:$0xf]
        %v720 = vld [vmem:[%s1 + $0x84] sm:$0xf]
        %v721 = vld [vmem:[%s1 + $0x88] sm:$0xf]
        %v722 = vld [vmem:[%s1 + $0x8c] sm:$0xf]
        %v723 = vld [vmem:[%s1 + $0x90] sm:$0xf]
        %v724 = vld [vmem:[%s1 + $0x94] sm:$0xf]
        %v725 = vld [vmem:[%s1 + $0x98] sm:$0xf]
        %v726 = vld [vmem:[%s1 + $0x9c] sm:$0xf]
        %v727 = vld [vmem:[%s1 + $0xa0] sm:$0xf]
        %v728 = vld [vmem:[%s1 + $0xa4] sm:$0xf]
        %v729 = vld [vmem:[%s1 + $0xa8] sm:$0xf]
        %v730 = vld [vmem:[%s1 + $0xac] sm:$0xf]
        %v731 = vld [vmem:[%s1 + $0xb0] sm:$0xf]
        %v732 = vld [vmem:[%s1 + $0xb4] sm:$0xf]
        %v733 = vld [vmem:[%s1 + $0xb8] sm:$0xf]
        %v734 = vld [vmem:[%s1 + $0xbc] sm:$0xf]
        %v735 = vld [vmem:[%s1 + $0xc0] sm:$0xf]
        %v736 = vld [vmem:[%s1 + $0xc4] sm:$0xf]
        %v737 = vld [vmem:[%s2] sm:$0x1]
        %v739 = vlaneseq
        %v740 = vshrl.u32 %v739, 7
        %v741 = vsub.s32 0, %v740
        %v742 = vrot.slane %v737, %v741
        %v794 = vunpack.c.l.b16 %v687
        %v795 = vunpack.c.l.b16 %v688
        %v796 = vunpack.c.l.b16 %v689
        %v797 = vunpack.c.l.b16 %v690
        %v798 = vunpack.c.l.b16 %v691
        %v799 = vunpack.c.l.b16 %v692
        %v800 = vunpack.c.l.b16 %v693
        %v801 = vunpack.c.l.b16 %v694
        %v802 = vunpack.c.l.b16 %v695
        %v803 = vunpack.c.l.b16 %v696
        %v804 = vunpack.c.l.b16 %v697
        %v805 = vunpack.c.l.b16 %v698
        %v806 = vunpack.c.l.b16 %v699
        %v807 = vunpack.c.l.b16 %v700
        %v808 = vunpack.c.l.b16 %v701
        %v809 = vunpack.c.l.b16 %v702
        %v810 = vunpack.c.l.b16 %v703
        %v811 = vunpack.c.l.b16 %v704
        %v812 = vunpack.c.l.b16 %v705
        %v813 = vunpack.c.l.b16 %v706
        %v814 = vunpack.c.l.b16 %v707
        %v815 = vunpack.c.l.b16 %v708
        %v816 = vunpack.c.l.b16 %v709
        %v817 = vunpack.c.l.b16 %v710
        %v818 = vunpack.c.l.b16 %v711
        %v819 = vunpack.c.l.b16 %v712
        %v820 = vunpack.c.l.b16 %v713
        %v821 = vunpack.c.l.b16 %v714
        %v822 = vunpack.c.l.b16 %v715
        %v823 = vunpack.c.l.b16 %v716
        %v824 = vunpack.c.l.b16 %v717
        %v825 = vunpack.c.l.b16 %v718
        %v826 = vunpack.c.l.b16 %v719
        %v827 = vunpack.c.l.b16 %v720
        %v828 = vunpack.c.l.b16 %v721
        %v829 = vunpack.c.l.b16 %v722
        %v830 = vunpack.c.l.b16 %v723
        %v831 = vunpack.c.l.b16 %v724
        %v832 = vunpack.c.l.b16 %v725
        %v833 = vunpack.c.l.b16 %v726
        %v834 = vunpack.c.l.b16 %v727
        %v835 = vunpack.c.l.b16 %v728
        %v836 = vunpack.c.l.b16 %v729
        %v837 = vunpack.c.l.b16 %v730
        %v838 = vunpack.c.l.b16 %v731
        %v839 = vunpack.c.l.b16 %v732
        %v840 = vunpack.c.l.b16 %v733
        %v841 = vunpack.c.l.b16 %v734
        %v842 = vunpack.c.l.b16 %v735
        %v843 = vunpack.c.l.b16 %v736
        %v844 = vpack.c.b16 %v795, %v794
        %v845 = vpack.c.b16 %v797, %v796
        %v846 = vpack.c.b16 %v799, %v798
        %v847 = vpack.c.b16 %v801, %v800
        %v848 = vpack.c.b16 %v803, %v802
        %v849 = vpack.c.b16 %v805, %v804
        %v850 = vpack.c.b16 %v807, %v806
        %v851 = vpack.c.b16 %v809, %v808
        %v852 = vpack.c.b16 %v811, %v810
        %v853 = vpack.c.b16 %v813, %v812
        %v854 = vpack.c.b16 %v815, %v814
        %v855 = vpack.c.b16 %v817, %v816
        %v856 = vpack.c.b16 %v819, %v818
        %v857 = vpack.c.b16 %v821, %v820
        %v858 = vpack.c.b16 %v823, %v822
        %v859 = vpack.c.b16 %v825, %v824
        %v860 = vpack.c.b16 %v827, %v826
        %v861 = vpack.c.b16 %v829, %v828
        %v862 = vpack.c.b16 %v831, %v830
        %v863 = vpack.c.b16 %v833, %v832
        %v864 = vpack.c.b16 %v835, %v834
        %v865 = vpack.c.b16 %v837, %v836
        %v866 = vpack.c.b16 %v839, %v838
        %v867 = vpack.c.b16 %v841, %v840
        %v868 = vpack.c.b16 %v843, %v842
        %vm893 = vcmask 121856
        %v895 = vsel %vm893, %v618, 0
        %v898 = vsel %vm893, %v622, 0
        %v901 = vsel %vm893, %v626, 0
        %v904 = vsel %vm893, %v630, 0
        %v907 = vsel %vm893, %v634, 0
        %v910 = vsel %vm893, %v638, 0
        %v913 = vsel %vm893, %v642, 0
        %v916 = vsel %vm893, %v646, 0
        %v919 = vsel %vm893, %v650, 0
        %v922 = vsel %vm893, %v654, 0
        %v925 = vsel %vm893, %v658, 0
        %v928 = vsel %vm893, %v662, 0
        %v931 = vsel %vm893, %v666, 0
        %v934 = vsel %vm893, %v670, 0
        %v937 = vsel %vm893, %v674, 0
        %v940 = vsel %vm893, %v678, 0
        %v943 = vsel %vm893, %v682, 0
        %v946 = vsel %vm893, %v686, 0
        %vm948 = vcmask 1046528
        %vm949 = vcmask 1047552
        %v950 = vsel %vm948, 4294967295, 65535
        %v951 = vsel %vm949, %v950, 0
        %v953 = vand.u32 %v868, %v951
        %955 = vmatprep.subr.bf16.mxu0 0
        %956 = vmatpush1.bf16.msra.mxu0 %v844
        %957 = vmatprep.subr.bf16.mxu0 0
        %958 = vmatpush1.bf16.msra.mxu0 %v845
        %959 = vmatprep.subr.bf16.mxu0 0
        %960 = vmatpush1.bf16.msra.mxu0 %v846
        %961 = vmatprep.subr.bf16.mxu0 0
        %962 = vmatpush1.bf16.msra.mxu0 %v847
        %963 = vmatprep.subr.bf16.mxu0 0
        %964 = vmatpush1.bf16.msra.mxu0 %v848
        %965 = vmatprep.subr.bf16.mxu0 0
        %966 = vmatpush1.bf16.msra.mxu0 %v849
        %967 = vmatprep.subr.bf16.mxu0 0
        %968 = vmatpush1.bf16.msra.mxu0 %v850
        %969 = vmatprep.subr.bf16.mxu0 0
        %970 = vmatpush1.bf16.msra.mxu0 %v851
        %971 = vmatprep.subr.bf16.mxu0 0
        %972 = vmatpush1.bf16.msra.mxu0 %v852
        %973 = vmatprep.subr.bf16.mxu0 0
        %974 = vmatpush1.bf16.msra.mxu0 %v853
        %975 = vmatprep.subr.bf16.mxu0 0
        %976 = vmatpush1.bf16.msra.mxu0 %v854
        %977 = vmatprep.subr.bf16.mxu0 0
        %978 = vmatpush1.bf16.msra.mxu0 %v855
        %979 = vmatprep.subr.bf16.mxu0 0
        %980 = vmatpush1.bf16.msra.mxu0 %v856
        %981 = vmatprep.subr.bf16.mxu0 0
        %982 = vmatpush1.bf16.msra.mxu0 %v857
        %983 = vmatprep.subr.bf16.mxu0 0
        %984 = vmatpush1.bf16.msra.mxu0 %v858
        %985 = vmatprep.subr.bf16.mxu0 0
        %986 = vmatpush1.bf16.msra.mxu0 %v859
        %987 = vmatprep.mubr.bf16.mxu0 %v616
        %988 = vmatmul.mubr.bf16.gmra.mrb[0].mxu0 %v615
        %v989 = vpop.f32.mrb[0].mxu0
        %v990 = vadd.f32 %v742, %v989
        %v991 = vpop.f32.mrb[0].mxu0
        %v992 = vpop.f32.mrb[0].mxu0
        %v993 = vadd.f32 %v742, %v992
        %v994 = vpop.f32.mrb[0].mxu0
        %995 = vmatprep.mubr.bf16.mxu0 %v620
        %996 = vmatmul.mubr.bf16.gmra.mrb[0].mxu0 %v619
        %v997 = vpop.f32.mrb[0].mxu0
        %v998 = vadd.f32 %v742, %v997
        %v999 = vpop.f32.mrb[0].mxu0
        %v1000 = vpop.f32.mrb[0].mxu0
        %v1001 = vadd.f32 %v742, %v1000
        %v1002 = vpop.f32.mrb[0].mxu0
        %1003 = vmatprep.mubr.bf16.mxu0 %v624
        %1004 = vmatmul.mubr.bf16.gmra.mrb[0].mxu0 %v623
        %v1005 = vpop.f32.mrb[0].mxu0
        %v1006 = vadd.f32 %v742, %v1005
        %v1007 = vpop.f32.mrb[0].mxu0
        %v1008 = vpop.f32.mrb[0].mxu0
        %v1009 = vadd.f32 %v742, %v1008
        %v1010 = vpop.f32.mrb[0].mxu0
        %1011 = vmatprep.mubr.bf16.mxu0 %v628
        %1012 = vmatmul.mubr.bf16.gmra.mrb[0].mxu0 %v627
        %v1013 = vpop.f32.mrb[0].mxu0
        %v1014 = vadd.f32 %v742, %v1013
        %v1015 = vpop.f32.mrb[0].mxu0
        %v1016 = vpop.f32.mrb[0].mxu0
        %v1017 = vadd.f32 %v742, %v1016
        %v1018 = vpop.f32.mrb[0].mxu0
        %1019 = vmatprep.mubr.bf16.mxu0 %v632
        %1020 = vmatmul.mubr.bf16.gmra.mrb[0].mxu0 %v631
        %v1021 = vpop.f32.mrb[0].mxu0
        %v1022 = vadd.f32 %v742, %v1021
        %v1023 = vpop.f32.mrb[0].mxu0
        %v1024 = vpop.f32.mrb[0].mxu0
        %v1025 = vadd.f32 %v742, %v1024
        %v1026 = vpop.f32.mrb[0].mxu0
        %1027 = vmatprep.mubr.bf16.mxu0 %v636
        %1028 = vmatmul.mubr.bf16.gmra.mrb[0].mxu0 %v635
        %v1029 = vpop.f32.mrb[0].mxu0
        %v1030 = vadd.f32 %v742, %v1029
        %v1031 = vpop.f32.mrb[0].mxu0
        %v1032 = vpop.f32.mrb[0].mxu0
        %v1033 = vadd.f32 %v742, %v1032
        %v1034 = vpop.f32.mrb[0].mxu0
        %1035 = vmatprep.mubr.bf16.mxu0 %v640
        %1036 = vmatmul.mubr.bf16.gmra.mrb[0].mxu0 %v639
        %v1037 = vpop.f32.mrb[0].mxu0
        %v1038 = vadd.f32 %v742, %v1037
        %v1039 = vpop.f32.mrb[0].mxu0
        %v1040 = vpop.f32.mrb[0].mxu0
        %v1041 = vadd.f32 %v742, %v1040
        %v1042 = vpop.f32.mrb[0].mxu0
        %1043 = vmatprep.mubr.bf16.mxu0 %v644
        %1044 = vmatmul.mubr.bf16.gmra.mrb[0].mxu0 %v643
        %v1045 = vpop.f32.mrb[0].mxu0
        %v1046 = vadd.f32 %v742, %v1045
        %v1047 = vpop.f32.mrb[0].mxu0
        %v1048 = vpop.f32.mrb[0].mxu0
        %v1049 = vadd.f32 %v742, %v1048
        %v1050 = vpop.f32.mrb[0].mxu0
        %1051 = vmatprep.mubr.bf16.mxu0 %v648
        %1052 = vmatmul.mubr.bf16.gmra.mrb[0].mxu0 %v647
        %v1053 = vpop.f32.mrb[0].mxu0
        %v1054 = vadd.f32 %v742, %v1053
        %v1055 = vpop.f32.mrb[0].mxu0
        %v1056 = vpop.f32.mrb[0].mxu0
        %v1057 = vadd.f32 %v742, %v1056
        %v1058 = vpop.f32.mrb[0].mxu0
        %1059 = vmatprep.mubr.bf16.mxu0 %v652
        %1060 = vmatmul.mubr.bf16.gmra.mrb[0].mxu0 %v651
        %v1061 = vpop.f32.mrb[0].mxu0
        %v1062 = vadd.f32 %v742, %v1061
        %v1063 = vpop.f32.mrb[0].mxu0
        %v1064 = vpop.f32.mrb[0].mxu0
        %v1065 = vadd.f32 %v742, %v1064
        %v1066 = vpop.f32.mrb[0].mxu0
        %1067 = vmatprep.mubr.bf16.mxu0 %v656
        %1068 = vmatmul.mubr.bf16.gmra.mrb[0].mxu0 %v655
        %v1069 = vpop.f32.mrb[0].mxu0
        %v1070 = vadd.f32 %v742, %v1069
        %v1071 = vpop.f32.mrb[0].mxu0
        %v1072 = vpop.f32.mrb[0].mxu0
        %v1073 = vadd.f32 %v742, %v1072
        %v1074 = vpop.f32.mrb[0].mxu0
        %1075 = vmatprep.mubr.bf16.mxu0 %v660
        %1076 = vmatmul.mubr.bf16.gmra.mrb[0].mxu0 %v659
        %v1077 = vpop.f32.mrb[0].mxu0
        %v1078 = vadd.f32 %v742, %v1077
        %v1079 = vpop.f32.mrb[0].mxu0
        %v1080 = vpop.f32.mrb[0].mxu0
        %v1081 = vadd.f32 %v742, %v1080
        %v1082 = vpop.f32.mrb[0].mxu0
        %1083 = vmatprep.mubr.bf16.mxu0 %v664
        %1084 = vmatmul.mubr.bf16.gmra.mrb[0].mxu0 %v663
        %v1085 = vpop.f32.mrb[0].mxu0
        %v1086 = vadd.f32 %v742, %v1085
        %v1087 = vpop.f32.mrb[0].mxu0
        %v1088 = vpop.f32.mrb[0].mxu0
        %v1089 = vadd.f32 %v742, %v1088
        %v1090 = vpop.f32.mrb[0].mxu0
        %1091 = vmatprep.mubr.bf16.mxu0 %v668
        %1092 = vmatmul.mubr.bf16.gmra.mrb[0].mxu0 %v667
        %v1093 = vpop.f32.mrb[0].mxu0
        %v1094 = vadd.f32 %v742, %v1093
        %v1095 = vpop.f32.mrb[0].mxu0
        %v1096 = vpop.f32.mrb[0].mxu0
        %v1097 = vadd.f32 %v742, %v1096
        %v1098 = vpop.f32.mrb[0].mxu0
        %1099 = vmatprep.mubr.bf16.mxu0 %v672
        %1100 = vmatmul.mubr.bf16.gmra.mrb[0].mxu0 %v671
        %v1101 = vpop.f32.mrb[0].mxu0
        %v1102 = vadd.f32 %v742, %v1101
        %v1103 = vpop.f32.mrb[0].mxu0
        %v1104 = vpop.f32.mrb[0].mxu0
        %v1105 = vadd.f32 %v742, %v1104
        %v1106 = vpop.f32.mrb[0].mxu0
        %1107 = vmatprep.mubr.bf16.mxu0 %v676
        %1108 = vmatmul.mubr.bf16.gmra.mrb[0].mxu0 %v675
        %v1109 = vpop.f32.mrb[0].mxu0
        %v1110 = vadd.f32 %v742, %v1109
        %v1111 = vpop.f32.mrb[0].mxu0
        %v1112 = vpop.f32.mrb[0].mxu0
        %v1113 = vadd.f32 %v742, %v1112
        %v1114 = vpop.f32.mrb[0].mxu0
        %1115 = vmatprep.mubr.bf16.mxu0 %v680
        %1116 = vmatmul.mubr.bf16.gmra.mrb[0].mxu0 %v679
        %v1117 = vpop.f32.mrb[0].mxu0
        %v1118 = vadd.f32 %v742, %v1117
        %v1119 = vpop.f32.mrb[0].mxu0
        %v1120 = vpop.f32.mrb[0].mxu0
        %v1121 = vadd.f32 %v742, %v1120
        %v1122 = vpop.f32.mrb[0].mxu0
        %1123 = vmatprep.mubr.bf16.mxu0 %v684
        %1124 = vmatmul.mubr.bf16.gmra.mrb[0].mxu0 %v683
        %v1125 = vpop.f32.mrb[0].mxu0
        %v1126 = vadd.f32 %v742, %v1125
        %v1127 = vpop.f32.mrb[0].mxu0
        %v1128 = vpop.f32.mrb[0].mxu0
        %v1129 = vadd.f32 %v742, %v1128
        %v1130 = vpop.f32.mrb[0].mxu0
        %1131 = vdwg.mxu0
        %1132 = vmatprep.subr.bf16.mxu0 0
        %1133 = vmatpush1.bf16.msra.mxu0 %v860
        %1134 = vmatprep.subr.bf16.mxu0 0
        %1135 = vmatpush1.bf16.msra.mxu0 %v861
        %1136 = vmatprep.subr.bf16.mxu0 0
        %1137 = vmatpush1.bf16.msra.mxu0 %v862
        %1138 = vmatprep.subr.bf16.mxu0 0
        %1139 = vmatpush1.bf16.msra.mxu0 %v863
        %1140 = vmatprep.subr.bf16.mxu0 0
        %1141 = vmatpush1.bf16.msra.mxu0 %v864
        %1142 = vmatprep.subr.bf16.mxu0 0
        %1143 = vmatpush1.bf16.msra.mxu0 %v865
        %1144 = vmatprep.subr.bf16.mxu0 0
        %1145 = vmatpush1.bf16.msra.mxu0 %v866
        %1146 = vmatprep.subr.bf16.mxu0 0
        %1147 = vmatpush1.bf16.msra.mxu0 %v867
        %1148 = vmatprep.subr.bf16.mxu0 0
        %1149 = vmatpush1.bf16.msra.mxu0 %v953
        %1150 = vmatprep.subr.bf16.mxu0 0
        %1151 = vmatpush1.bf16.msra.mxu0 0
        %1152 = vmatprep.subr.bf16.mxu0 0
        %1153 = vmatpush1.bf16.msra.mxu0 0
        %1154 = vmatprep.subr.bf16.mxu0 0
        %1155 = vmatpush1.bf16.msra.mxu0 0
        %1156 = vmatprep.subr.bf16.mxu0 0
        %1157 = vmatpush1.bf16.msra.mxu0 0
        %1158 = vmatprep.subr.bf16.mxu0 0
        %1159 = vmatpush1.bf16.msra.mxu0 0
        %1160 = vmatprep.subr.bf16.mxu0 0
        %1161 = vmatpush1.bf16.msra.mxu0 0
        %1162 = vmatprep.subr.bf16.mxu0 0
        %1163 = vmatpush1.bf16.msra.mxu0 0
        %1164 = vmatprep.mubr.bf16.mxu0 %v895
        %1165 = vmatmul.mubr.bf16.gmra.mrb[0].mxu0 %v617
        %v1166 = vpop.f32.mrb[0].mxu0
        %v1167 = vadd.f32 %v990, %v1166
        %v1168 = vpop.f32.mrb[0].mxu0
        %v1169 = vpop.f32.mrb[0].mxu0
        %v1170 = vadd.f32 %v993, %v1169
        %v1171 = vpop.f32.mrb[0].mxu0
        %1172 = vmatprep.mubr.bf16.mxu0 %v898
        %1173 = vmatmul.mubr.bf16.gmra.mrb[0].mxu0 %v621
        %v1174 = vpop.f32.mrb[0].mxu0
        %v1175 = vadd.f32 %v998, %v1174
        %v1176 = vpop.f32.mrb[0].mxu0
        %v1177 = vpop.f32.mrb[0].mxu0
        %v1178 = vadd.f32 %v1001, %v1177
        %v1179 = vpop.f32.mrb[0].mxu0
        %1180 = vmatprep.mubr.bf16.mxu0 %v901
        %1181 = vmatmul.mubr.bf16.gmra.mrb[0].mxu0 %v625
        %v1182 = vpop.f32.mrb[0].mxu0
        %v1183 = vadd.f32 %v1006, %v1182
        %v1184 = vpop.f32.mrb[0].mxu0
        %v1185 = vpop.f32.mrb[0].mxu0
        %v1186 = vadd.f32 %v1009, %v1185
        %v1187 = vpop.f32.mrb[0].mxu0
        %1188 = vmatprep.mubr.bf16.mxu0 %v904
        %1189 = vmatmul.mubr.bf16.gmra.mrb[0].mxu0 %v629
        %v1190 = vpop.f32.mrb[0].mxu0
        %v1191 = vadd.f32 %v1014, %v1190
        %v1192 = vpop.f32.mrb[0].mxu0
        %v1193 = vpop.f32.mrb[0].mxu0
        %v1194 = vadd.f32 %v1017, %v1193
        %v1195 = vpop.f32.mrb[0].mxu0
        %1196 = vmatprep.mubr.bf16.mxu0 %v907
        %1197 = vmatmul.mubr.bf16.gmra.mrb[0].mxu0 %v633
        %v1198 = vpop.f32.mrb[0].mxu0
        %v1199 = vadd.f32 %v1022, %v1198
        %v1200 = vpop.f32.mrb[0].mxu0
        %v1201 = vpop.f32.mrb[0].mxu0
        %v1202 = vadd.f32 %v1025, %v1201
        %v1203 = vpop.f32.mrb[0].mxu0
        %1204 = vmatprep.mubr.bf16.mxu0 %v910
        %1205 = vmatmul.mubr.bf16.gmra.mrb[0].mxu0 %v637
        %v1206 = vpop.f32.mrb[0].mxu0
        %v1207 = vadd.f32 %v1030, %v1206
        %v1208 = vpop.f32.mrb[0].mxu0
        %v1209 = vpop.f32.mrb[0].mxu0
        %v1210 = vadd.f32 %v1033, %v1209
        %v1211 = vpop.f32.mrb[0].mxu0
        %1212 = vmatprep.mubr.bf16.mxu0 %v913
        %1213 = vmatmul.mubr.bf16.gmra.mrb[0].mxu0 %v641
        %v1214 = vpop.f32.mrb[0].mxu0
        %v1215 = vadd.f32 %v1038, %v1214
        %v1216 = vpop.f32.mrb[0].mxu0
        %v1217 = vpop.f32.mrb[0].mxu0
        %v1218 = vadd.f32 %v1041, %v1217
        %v1219 = vpop.f32.mrb[0].mxu0
        %1220 = vmatprep.mubr.bf16.mxu0 %v916
        %1221 = vmatmul.mubr.bf16.gmra.mrb[0].mxu0 %v645
        %v1222 = vpop.f32.mrb[0].mxu0
        %v1223 = vadd.f32 %v1046, %v1222
        %v1224 = vpop.f32.mrb[0].mxu0
        %v1225 = vpop.f32.mrb[0].mxu0
        %v1226 = vadd.f32 %v1049, %v1225
        %v1227 = vpop.f32.mrb[0].mxu0
        %1228 = vmatprep.mubr.bf16.mxu0 %v919
        %1229 = vmatmul.mubr.bf16.gmra.mrb[0].mxu0 %v649
        %v1230 = vpop.f32.mrb[0].mxu0
        %v1231 = vadd.f32 %v1054, %v1230
        %v1232 = vpop.f32.mrb[0].mxu0
        %v1233 = vpop.f32.mrb[0].mxu0
        %v1234 = vadd.f32 %v1057, %v1233
        %v1235 = vpop.f32.mrb[0].mxu0
        %1236 = vmatprep.mubr.bf16.mxu0 %v922
        %1237 = vmatmul.mubr.bf16.gmra.mrb[0].mxu0 %v653
        %v1238 = vpop.f32.mrb[0].mxu0
        %v1239 = vadd.f32 %v1062, %v1238
        %v1240 = vpop.f32.mrb[0].mxu0
        %v1241 = vpop.f32.mrb[0].mxu0
        %v1242 = vadd.f32 %v1065, %v1241
        %v1243 = vpop.f32.mrb[0].mxu0
        %1244 = vmatprep.mubr.bf16.mxu0 %v925
        %1245 = vmatmul.mubr.bf16.gmra.mrb[0].mxu0 %v657
        %v1246 = vpop.f32.mrb[0].mxu0
        %v1247 = vadd.f32 %v1070, %v1246
        %v1248 = vpop.f32.mrb[0].mxu0
        %v1249 = vpop.f32.mrb[0].mxu0
        %v1250 = vadd.f32 %v1073, %v1249
        %v1251 = vpop.f32.mrb[0].mxu0
        %1252 = vmatprep.mubr.bf16.mxu0 %v928
        %1253 = vmatmul.mubr.bf16.gmra.mrb[0].mxu0 %v661
        %v1254 = vpop.f32.mrb[0].mxu0
        %v1255 = vadd.f32 %v1078, %v1254
        %v1256 = vpop.f32.mrb[0].mxu0
        %v1257 = vpop.f32.mrb[0].mxu0
        %v1258 = vadd.f32 %v1081, %v1257
        %v1259 = vpop.f32.mrb[0].mxu0
        %1260 = vmatprep.mubr.bf16.mxu0 %v931
        %1261 = vmatmul.mubr.bf16.gmra.mrb[0].mxu0 %v665
        %v1262 = vpop.f32.mrb[0].mxu0
        %v1263 = vadd.f32 %v1086, %v1262
        %v1264 = vpop.f32.mrb[0].mxu0
        %v1265 = vpop.f32.mrb[0].mxu0
        %v1266 = vadd.f32 %v1089, %v1265
        %v1267 = vpop.f32.mrb[0].mxu0
        %1268 = vmatprep.mubr.bf16.mxu0 %v934
        %1269 = vmatmul.mubr.bf16.gmra.mrb[0].mxu0 %v669
        %v1270 = vpop.f32.mrb[0].mxu0
        %v1271 = vadd.f32 %v1094, %v1270
        %v1272 = vpop.f32.mrb[0].mxu0
        %v1273 = vpop.f32.mrb[0].mxu0
        %v1274 = vadd.f32 %v1097, %v1273
        %v1275 = vpop.f32.mrb[0].mxu0
        %1276 = vmatprep.mubr.bf16.mxu0 %v937
        %1277 = vmatmul.mubr.bf16.gmra.mrb[0].mxu0 %v673
        %v1278 = vpop.f32.mrb[0].mxu0
        %v1279 = vadd.f32 %v1102, %v1278
        %v1280 = vpop.f32.mrb[0].mxu0
        %v1281 = vpop.f32.mrb[0].mxu0
        %v1282 = vadd.f32 %v1105, %v1281
        %v1283 = vpop.f32.mrb[0].mxu0
        %1284 = vmatprep.mubr.bf16.mxu0 %v940
        %1285 = vmatmul.mubr.bf16.gmra.mrb[0].mxu0 %v677
        %v1286 = vpop.f32.mrb[0].mxu0
        %v1287 = vadd.f32 %v1110, %v1286
        %v1288 = vpop.f32.mrb[0].mxu0
        %v1289 = vpop.f32.mrb[0].mxu0
        %v1290 = vadd.f32 %v1113, %v1289
        %v1291 = vpop.f32.mrb[0].mxu0
        %1292 = vmatprep.mubr.bf16.mxu0 %v943
        %1293 = vmatmul.mubr.bf16.gmra.mrb[0].mxu0 %v681
        %v1294 = vpop.f32.mrb[0].mxu0
        %v1295 = vadd.f32 %v1118, %v1294
        %v1296 = vpop.f32.mrb[0].mxu0
        %v1297 = vpop.f32.mrb[0].mxu0
        %v1298 = vadd.f32 %v1121, %v1297
        %v1299 = vpop.f32.mrb[0].mxu0
        %1300 = vmatprep.mubr.bf16.mxu0 %v946
        %1301 = vmatmul.mubr.bf16.gmra.mrb[0].mxu0 %v685
        %v1302 = vpop.f32.mrb[0].mxu0
        %v1303 = vadd.f32 %v1126, %v1302
        %v1304 = vpop.f32.mrb[0].mxu0
        %v1305 = vpop.f32.mrb[0].mxu0
        %v1306 = vadd.f32 %v1129, %v1305
        %v1307 = vpop.f32.mrb[0].mxu0
        %1308 = vdwg.mxu0
        %v1309 = vmul.f32 %v1167, 0.01
        %v1310 = vmul.f32 %v1170, 0.01
        %v1311 = vmul.f32 %v1175, 0.01
        %v1312 = vmul.f32 %v1178, 0.01
        %v1313 = vmul.f32 %v1183, 0.01
        %v1314 = vmul.f32 %v1186, 0.01
        %v1315 = vmul.f32 %v1191, 0.01
        %v1316 = vmul.f32 %v1194, 0.01
        %v1317 = vmul.f32 %v1199, 0.01
        %v1318 = vmul.f32 %v1202, 0.01
        %v1319 = vmul.f32 %v1207, 0.01
        %v1320 = vmul.f32 %v1210, 0.01
        %v1321 = vmul.f32 %v1215, 0.01
        %v1322 = vmul.f32 %v1218, 0.01
        %v1323 = vmul.f32 %v1223, 0.01
        %v1324 = vmul.f32 %v1226, 0.01
        %v1325 = vmul.f32 %v1231, 0.01
        %v1326 = vmul.f32 %v1234, 0.01
        %v1327 = vmul.f32 %v1239, 0.01
        %v1328 = vmul.f32 %v1242, 0.01
        %v1329 = vmul.f32 %v1247, 0.01
        %v1330 = vmul.f32 %v1250, 0.01
        %v1331 = vmul.f32 %v1255, 0.01
        %v1332 = vmul.f32 %v1258, 0.01
        %v1333 = vmul.f32 %v1263, 0.01
        %v1334 = vmul.f32 %v1266, 0.01
        %v1335 = vmul.f32 %v1271, 0.01
        %v1336 = vmul.f32 %v1274, 0.01
        %v1337 = vmul.f32 %v1279, 0.01
        %v1338 = vmul.f32 %v1282, 0.01
        %v1339 = vmul.f32 %v1287, 0.01
        %v1340 = vmul.f32 %v1290, 0.01
        %v1341 = vmul.f32 %v1295, 0.01
        %v1342 = vmul.f32 %v1298, 0.01
        %v1343 = vmul.f32 %v1303, 0.01
        %v1344 = vmul.f32 %v1306, 0.01
        %v1345 = vmax.f32 %v1167, %v1309
        %v1346 = vmax.f32 %v1170, %v1310
        %v1347 = vmax.f32 %v1175, %v1311
        %v1348 = vmax.f32 %v1178, %v1312
        %v1349 = vmax.f32 %v1183, %v1313
        %v1350 = vmax.f32 %v1186, %v1314
        %v1351 = vmax.f32 %v1191, %v1315
        %v1352 = vmax.f32 %v1194, %v1316
        %v1353 = vmax.f32 %v1199, %v1317
        %v1354 = vmax.f32 %v1202, %v1318
        %v1355 = vmax.f32 %v1207, %v1319
        %v1356 = vmax.f32 %v1210, %v1320
        %v1357 = vmax.f32 %v1215, %v1321
        %v1358 = vmax.f32 %v1218, %v1322
        %v1359 = vmax.f32 %v1223, %v1323
        %v1360 = vmax.f32 %v1226, %v1324
        %v1361 = vmax.f32 %v1231, %v1325
        %v1362 = vmax.f32 %v1234, %v1326
        %v1363 = vmax.f32 %v1239, %v1327
        %v1364 = vmax.f32 %v1242, %v1328
        %v1365 = vmax.f32 %v1247, %v1329
        %v1366 = vmax.f32 %v1250, %v1330
        %v1367 = vmax.f32 %v1255, %v1331
        %v1368 = vmax.f32 %v1258, %v1332
        %v1369 = vmax.f32 %v1263, %v1333
        %v1370 = vmax.f32 %v1266, %v1334
        %v1371 = vmax.f32 %v1271, %v1335
        %v1372 = vmax.f32 %v1274, %v1336
        %v1373 = vmax.f32 %v1279, %v1337
        %v1374 = vmax.f32 %v1282, %v1338
        %v1375 = vmax.f32 %v1287, %v1339
        %v1376 = vmax.f32 %v1290, %v1340
        %v1377 = vmax.f32 %v1295, %v1341
        %v1378 = vmax.f32 %v1298, %v1342
        %v1379 = vmax.f32 %v1303, %v1343
        %v1380 = vmax.f32 %v1306, %v1344
        %v1381 = vld [vmem:[%s3] sm:$0xff]
        %v1382 = vld [vmem:[%s3 + $0x8] sm:$0xff]
        %v1383 = vld [vmem:[%s3 + $0x10] sm:$0xff]
        %v1384 = vld [vmem:[%s3 + $0x18] sm:$0xff]
        %v1385 = vld [vmem:[%s4] sm:$0x1]
        %v1387 = vlaneseq
        %v1388 = vshrl.u32 %v1387, 7
        %v1389 = vsub.s32 0, %v1388
        %v1390 = vrot.slane %v1385, %v1389
        %vm1392 = vcmask 261120
        %v1394 = vsel %vm1392, %v1345, 0
        %v1397 = vsel %vm1392, %v1346, 0
        %v1400 = vsel %vm1392, %v1347, 0
        %v1403 = vsel %vm1392, %v1348, 0
        %v1406 = vsel %vm1392, %v1349, 0
        %v1409 = vsel %vm1392, %v1350, 0
        %v1412 = vsel %vm1392, %v1351, 0
        %v1415 = vsel %vm1392, %v1352, 0
        %v1418 = vsel %vm1392, %v1353, 0
        %v1421 = vsel %vm1392, %v1354, 0
        %v1424 = vsel %vm1392, %v1355, 0
        %v1427 = vsel %vm1392, %v1356, 0
        %v1430 = vsel %vm1392, %v1357, 0
        %v1433 = vsel %vm1392, %v1358, 0
        %v1436 = vsel %vm1392, %v1359, 0
        %v1439 = vsel %vm1392, %v1360, 0
        %v1442 = vsel %vm1392, %v1361, 0
        %v1445 = vsel %vm1392, %v1362, 0
        %v1448 = vsel %vm1392, %v1363, 0
        %v1451 = vsel %vm1392, %v1364, 0
        %v1454 = vsel %vm1392, %v1365, 0
        %v1457 = vsel %vm1392, %v1366, 0
        %v1460 = vsel %vm1392, %v1367, 0
        %v1463 = vsel %vm1392, %v1368, 0
        %v1466 = vsel %vm1392, %v1369, 0
        %v1469 = vsel %vm1392, %v1370, 0
        %v1472 = vsel %vm1392, %v1371, 0
        %v1475 = vsel %vm1392, %v1372, 0
        %v1478 = vsel %vm1392, %v1373, 0
        %v1481 = vsel %vm1392, %v1374, 0
        %v1484 = vsel %vm1392, %v1375, 0
        %v1487 = vsel %vm1392, %v1376, 0
        %v1490 = vsel %vm1392, %v1377, 0
        %v1493 = vsel %vm1392, %v1378, 0
        %v1496 = vsel %vm1392, %v1379, 0
        %v1499 = vsel %vm1392, %v1380, 0
        %1501 = vmatprep.subr.mxu0 0.0
        %1502 = vmatpush1.msra.mxu0 %v1381
        %1503 = vmatprep.subr.mxu0 0.0
        %1504 = vmatpush1.msra.mxu0 %v1382
        %1505 = vmatprep.subr.mxu0 0.0
        %1506 = vmatpush1.msra.mxu0 %v1383
        %1507 = vmatprep.subr.mxu0 0.0
        %1508 = vmatpush1.msra.mxu0 %v1384
        %1509 = vmatprep.subr.mxu0 0.0
        %1510 = vmatpush1.msra.mxu0 0.0
        %1511 = vmatprep.subr.mxu0 0.0
        %1512 = vmatpush1.msra.mxu0 0.0
        %1513 = vmatprep.subr.mxu0 0.0
        %1514 = vmatpush1.msra.mxu0 0.0
        %1515 = vmatprep.subr.mxu0 0.0
        %1516 = vmatpush1.msra.mxu0 0.0
        %1517 = vmatprep.subr.mxu0 0.0
        %1518 = vmatpush1.msra.mxu0 0.0
        %1519 = vmatprep.subr.mxu0 0.0
        %1520 = vmatpush1.msra.mxu0 0.0
        %1521 = vmatprep.subr.mxu0 0.0
        %1522 = vmatpush1.msra.mxu0 0.0
        %1523 = vmatprep.subr.mxu0 0.0
        %1524 = vmatpush1.msra.mxu0 0.0
        %1525 = vmatprep.subr.mxu0 0.0
        %1526 = vmatpush1.msra.mxu0 0.0
        %1527 = vmatprep.subr.mxu0 0.0
        %1528 = vmatpush1.msra.mxu0 0.0
        %1529 = vmatprep.subr.mxu0 0.0
        %1530 = vmatpush1.msra.mxu0 0.0
        %1531 = vmatprep.subr.mxu0 0.0
        %1532 = vmatpush1.msra.mxu0 0.0
        %1533 = vmatprep.subr.mxu0 0.0
        %1534 = vmatpush1.msra.mxu0 0.0
        %1535 = vmatprep.subr.mxu0 0.0
        %1536 = vmatpush1.msra.mxu0 0.0
        %1537 = vmatprep.subr.mxu0 0.0
        %1538 = vmatpush1.msra.mxu0 0.0
        %1539 = vmatprep.subr.mxu0 0.0
        %1540 = vmatpush1.msra.mxu0 0.0
        %1541 = vmatprep.subr.mxu0 0.0
        %1542 = vmatpush1.msra.mxu0 0.0
        %1543 = vmatprep.subr.mxu0 0.0
        %1544 = vmatpush1.msra.mxu0 0.0
        %1545 = vmatprep.subr.mxu0 0.0
        %1546 = vmatpush1.msra.mxu0 0.0
        %1547 = vmatprep.subr.mxu0 0.0
        %1548 = vmatpush1.msra.mxu0 0.0
        %1549 = vmatprep.subr.mxu0 0.0
        %1550 = vmatpush1.msra.mxu0 0.0
        %1551 = vmatprep.subr.mxu0 0.0
        %1552 = vmatpush1.msra.mxu0 0.0
        %1553 = vmatprep.subr.mxu0 0.0
        %1554 = vmatpush1.msra.mxu0 0.0
        %1555 = vmatprep.subr.mxu0 0.0
        %1556 = vmatpush1.msra.mxu0 0.0
        %1557 = vmatprep.subr.mxu0 0.0
        %1558 = vmatpush1.msra.mxu0 0.0
        %1559 = vmatprep.subr.mxu0 0.0
        %1560 = vmatpush1.msra.mxu0 0.0
        %1561 = vmatprep.subr.mxu0 0.0
        %1562 = vmatpush1.msra.mxu0 0.0
        %1563 = vmatprep.subr.mxu0 0.0
        %1564 = vmatpush1.msra.mxu0 0.0
        %1565 = vmatprep.mubr.f32.mxu0 0.0
        %1566 = vmatmul.mubr.f32.gmra.mrb[0].mxu0 %v1394
        %v1567 = vpop.f32.mrb[0].mxu0
        %v1568 = vadd.f32 %v1390, %v1567
        %v1569 = vpop.f32.mrb[0].mxu0
        %1570 = vmatprep.mubr.f32.mxu0 0.0
        %1571 = vmatmul.mubr.f32.gmra.mrb[0].mxu0 %v1397
        %v1572 = vpop.f32.mrb[0].mxu0
        %v1573 = vadd.f32 %v1390, %v1572
        %v1574 = vpop.f32.mrb[0].mxu0
        %1575 = vmatprep.mubr.f32.mxu0 0.0
        %1576 = vmatmul.mubr.f32.gmra.mrb[0].mxu0 %v1400
        %v1577 = vpop.f32.mrb[0].mxu0
        %v1578 = vadd.f32 %v1390, %v1577
        %v1579 = vpop.f32.mrb[0].mxu0
        %1580 = vmatprep.mubr.f32.mxu0 0.0
        %1581 = vmatmul.mubr.f32.gmra.mrb[0].mxu0 %v1403
        %v1582 = vpop.f32.mrb[0].mxu0
        %v1583 = vadd.f32 %v1390, %v1582
        %v1584 = vpop.f32.mrb[0].mxu0
        %1585 = vmatprep.mubr.f32.mxu0 0.0
        %1586 = vmatmul.mubr.f32.gmra.mrb[0].mxu0 %v1406
        %v1587 = vpop.f32.mrb[0].mxu0
        %v1588 = vadd.f32 %v1390, %v1587
        %v1589 = vpop.f32.mrb[0].mxu0
        %1590 = vmatprep.mubr.f32.mxu0 0.0
        %1591 = vmatmul.mubr.f32.gmra.mrb[0].mxu0 %v1409
        %v1592 = vpop.f32.mrb[0].mxu0
        %v1593 = vadd.f32 %v1390, %v1592
        %v1594 = vpop.f32.mrb[0].mxu0
        %1595 = vmatprep.mubr.f32.mxu0 0.0
        %1596 = vmatmul.mubr.f32.gmra.mrb[0].mxu0 %v1412
        %v1597 = vpop.f32.mrb[0].mxu0
        %v1598 = vadd.f32 %v1390, %v1597
        %v1599 = vpop.f32.mrb[0].mxu0
        %1600 = vmatprep.mubr.f32.mxu0 0.0
        %1601 = vmatmul.mubr.f32.gmra.mrb[0].mxu0 %v1415
        %v1602 = vpop.f32.mrb[0].mxu0
        %v1603 = vadd.f32 %v1390, %v1602
        %v1604 = vpop.f32.mrb[0].mxu0
        %1605 = vmatprep.mubr.f32.mxu0 0.0
        %1606 = vmatmul.mubr.f32.gmra.mrb[0].mxu0 %v1418
        %v1607 = vpop.f32.mrb[0].mxu0
        %v1608 = vadd.f32 %v1390, %v1607
        %v1609 = vpop.f32.mrb[0].mxu0
        %1610 = vmatprep.mubr.f32.mxu0 0.0
        %1611 = vmatmul.mubr.f32.gmra.mrb[0].mxu0 %v1421
        %v1612 = vpop.f32.mrb[0].mxu0
        %v1613 = vadd.f32 %v1390, %v1612
        %v1614 = vpop.f32.mrb[0].mxu0
        %1615 = vmatprep.mubr.f32.mxu0 0.0
        %1616 = vmatmul.mubr.f32.gmra.mrb[0].mxu0 %v1424
        %v1617 = vpop.f32.mrb[0].mxu0
        %v1618 = vadd.f32 %v1390, %v1617
        %v1619 = vpop.f32.mrb[0].mxu0
        %1620 = vmatprep.mubr.f32.mxu0 0.0
        %1621 = vmatmul.mubr.f32.gmra.mrb[0].mxu0 %v1427
        %v1622 = vpop.f32.mrb[0].mxu0
        %v1623 = vadd.f32 %v1390, %v1622
        %v1624 = vpop.f32.mrb[0].mxu0
        %1625 = vmatprep.mubr.f32.mxu0 0.0
        %1626 = vmatmul.mubr.f32.gmra.mrb[0].mxu0 %v1430
        %v1627 = vpop.f32.mrb[0].mxu0
        %v1628 = vadd.f32 %v1390, %v1627
        %v1629 = vpop.f32.mrb[0].mxu0
        %1630 = vmatprep.mubr.f32.mxu0 0.0
        %1631 = vmatmul.mubr.f32.gmra.mrb[0].mxu0 %v1433
        %v1632 = vpop.f32.mrb[0].mxu0
        %v1633 = vadd.f32 %v1390, %v1632
        %v1634 = vpop.f32.mrb[0].mxu0
        %1635 = vmatprep.mubr.f32.mxu0 0.0
        %1636 = vmatmul.mubr.f32.gmra.mrb[0].mxu0 %v1436
        %v1637 = vpop.f32.mrb[0].mxu0
        %v1638 = vadd.f32 %v1390, %v1637
        %v1639 = vpop.f32.mrb[0].mxu0
        %1640 = vmatprep.mubr.f32.mxu0 0.0
        %1641 = vmatmul.mubr.f32.gmra.mrb[0].mxu0 %v1439
        %v1642 = vpop.f32.mrb[0].mxu0
        %v1643 = vadd.f32 %v1390, %v1642
        %v1644 = vpop.f32.mrb[0].mxu0
        %1645 = vmatprep.mubr.f32.mxu0 0.0
        %1646 = vmatmul.mubr.f32.gmra.mrb[0].mxu0 %v1442
        %v1647 = vpop.f32.mrb[0].mxu0
        %v1648 = vadd.f32 %v1390, %v1647
        %v1649 = vpop.f32.mrb[0].mxu0
        %1650 = vmatprep.mubr.f32.mxu0 0.0
        %1651 = vmatmul.mubr.f32.gmra.mrb[0].mxu0 %v1445
        %v1652 = vpop.f32.mrb[0].mxu0
        %v1653 = vadd.f32 %v1390, %v1652
        %v1654 = vpop.f32.mrb[0].mxu0
        %1655 = vmatprep.mubr.f32.mxu0 0.0
        %1656 = vmatmul.mubr.f32.gmra.mrb[0].mxu0 %v1448
        %v1657 = vpop.f32.mrb[0].mxu0
        %v1658 = vadd.f32 %v1390, %v1657
        %v1659 = vpop.f32.mrb[0].mxu0
        %1660 = vmatprep.mubr.f32.mxu0 0.0
        %1661 = vmatmul.mubr.f32.gmra.mrb[0].mxu0 %v1451
        %v1662 = vpop.f32.mrb[0].mxu0
        %v1663 = vadd.f32 %v1390, %v1662
        %v1664 = vpop.f32.mrb[0].mxu0
        %1665 = vmatprep.mubr.f32.mxu0 0.0
        %1666 = vmatmul.mubr.f32.gmra.mrb[0].mxu0 %v1454
        %v1667 = vpop.f32.mrb[0].mxu0
        %v1668 = vadd.f32 %v1390, %v1667
        %v1669 = vpop.f32.mrb[0].mxu0
        %1670 = vmatprep.mubr.f32.mxu0 0.0
        %1671 = vmatmul.mubr.f32.gmra.mrb[0].mxu0 %v1457
        %v1672 = vpop.f32.mrb[0].mxu0
        %v1673 = vadd.f32 %v1390, %v1672
        %v1674 = vpop.f32.mrb[0].mxu0
        %1675 = vmatprep.mubr.f32.mxu0 0.0
        %1676 = vmatmul.mubr.f32.gmra.mrb[0].mxu0 %v1460
        %v1677 = vpop.f32.mrb[0].mxu0
        %v1678 = vadd.f32 %v1390, %v1677
        %v1679 = vpop.f32.mrb[0].mxu0
        %1680 = vmatprep.mubr.f32.mxu0 0.0
        %1681 = vmatmul.mubr.f32.gmra.mrb[0].mxu0 %v1463
        %v1682 = vpop.f32.mrb[0].mxu0
        %v1683 = vadd.f32 %v1390, %v1682
        %v1684 = vpop.f32.mrb[0].mxu0
        %1685 = vmatprep.mubr.f32.mxu0 0.0
        %1686 = vmatmul.mubr.f32.gmra.mrb[0].mxu0 %v1466
        %v1687 = vpop.f32.mrb[0].mxu0
        %v1688 = vadd.f32 %v1390, %v1687
        %v1689 = vpop.f32.mrb[0].mxu0
        %1690 = vmatprep.mubr.f32.mxu0 0.0
        %1691 = vmatmul.mubr.f32.gmra.mrb[0].mxu0 %v1469
        %v1692 = vpop.f32.mrb[0].mxu0
        %v1693 = vadd.f32 %v1390, %v1692
        %v1694 = vpop.f32.mrb[0].mxu0
        %1695 = vmatprep.mubr.f32.mxu0 0.0
        %1696 = vmatmul.mubr.f32.gmra.mrb[0].mxu0 %v1472
        %v1697 = vpop.f32.mrb[0].mxu0
        %v1698 = vadd.f32 %v1390, %v1697
        %v1699 = vpop.f32.mrb[0].mxu0
        %1700 = vmatprep.mubr.f32.mxu0 0.0
        %1701 = vmatmul.mubr.f32.gmra.mrb[0].mxu0 %v1475
        %v1702 = vpop.f32.mrb[0].mxu0
        %v1703 = vadd.f32 %v1390, %v1702
        %v1704 = vpop.f32.mrb[0].mxu0
        %1705 = vmatprep.mubr.f32.mxu0 0.0
        %1706 = vmatmul.mubr.f32.gmra.mrb[0].mxu0 %v1478
        %v1707 = vpop.f32.mrb[0].mxu0
        %v1708 = vadd.f32 %v1390, %v1707
        %v1709 = vpop.f32.mrb[0].mxu0
        %1710 = vmatprep.mubr.f32.mxu0 0.0
        %1711 = vmatmul.mubr.f32.gmra.mrb[0].mxu0 %v1481
        %v1712 = vpop.f32.mrb[0].mxu0
        %v1713 = vadd.f32 %v1390, %v1712
        %v1714 = vpop.f32.mrb[0].mxu0
        %1715 = vmatprep.mubr.f32.mxu0 0.0
        %1716 = vmatmul.mubr.f32.gmra.mrb[0].mxu0 %v1484
        %v1717 = vpop.f32.mrb[0].mxu0
        %v1718 = vadd.f32 %v1390, %v1717
        %v1719 = vpop.f32.mrb[0].mxu0
        %1720 = vmatprep.mubr.f32.mxu0 0.0
        %1721 = vmatmul.mubr.f32.gmra.mrb[0].mxu0 %v1487
        %v1722 = vpop.f32.mrb[0].mxu0
        %v1723 = vadd.f32 %v1390, %v1722
        %v1724 = vpop.f32.mrb[0].mxu0
        %1725 = vmatprep.mubr.f32.mxu0 0.0
        %1726 = vmatmul.mubr.f32.gmra.mrb[0].mxu0 %v1490
        %v1727 = vpop.f32.mrb[0].mxu0
        %v1728 = vadd.f32 %v1390, %v1727
        %v1729 = vpop.f32.mrb[0].mxu0
        %1730 = vmatprep.mubr.f32.mxu0 0.0
        %1731 = vmatmul.mubr.f32.gmra.mrb[0].mxu0 %v1493
        %v1732 = vpop.f32.mrb[0].mxu0
        %v1733 = vadd.f32 %v1390, %v1732
        %v1734 = vpop.f32.mrb[0].mxu0
        %1735 = vmatprep.mubr.f32.mxu0 0.0
        %1736 = vmatmul.mubr.f32.gmra.mrb[0].mxu0 %v1496
        %v1737 = vpop.f32.mrb[0].mxu0
        %v1738 = vadd.f32 %v1390, %v1737
        %v1739 = vpop.f32.mrb[0].mxu0
        %1740 = vmatprep.mubr.f32.mxu0 0.0
        %1741 = vmatmul.mubr.f32.gmra.mrb[0].mxu0 %v1499
        %v1742 = vpop.f32.mrb[0].mxu0
        %v1743 = vadd.f32 %v1390, %v1742
        %v1744 = vpop.f32.mrb[0].mxu0
        %1745 = vdwg.mxu0
        %v1746 = vmul.f32 %v1568, 0.01
        %v1747 = vmul.f32 %v1573, 0.01
        %v1748 = vmul.f32 %v1578, 0.01
        %v1749 = vmul.f32 %v1583, 0.01
        %v1750 = vmul.f32 %v1588, 0.01
        %v1751 = vmul.f32 %v1593, 0.01
        %v1752 = vmul.f32 %v1598, 0.01
        %v1753 = vmul.f32 %v1603, 0.01
        %v1754 = vmul.f32 %v1608, 0.01
        %v1755 = vmul.f32 %v1613, 0.01
        %v1756 = vmul.f32 %v1618, 0.01
        %v1757 = vmul.f32 %v1623, 0.01
        %v1758 = vmul.f32 %v1628, 0.01
        %v1759 = vmul.f32 %v1633, 0.01
        %v1760 = vmul.f32 %v1638, 0.01
        %v1761 = vmul.f32 %v1643, 0.01
        %v1762 = vmul.f32 %v1648, 0.01
        %v1763 = vmul.f32 %v1653, 0.01
        %v1764 = vmul.f32 %v1658, 0.01
        %v1765 = vmul.f32 %v1663, 0.01
        %v1766 = vmul.f32 %v1668, 0.01
        %v1767 = vmul.f32 %v1673, 0.01
        %v1768 = vmul.f32 %v1678, 0.01
        %v1769 = vmul.f32 %v1683, 0.01
        %v1770 = vmul.f32 %v1688, 0.01
        %v1771 = vmul.f32 %v1693, 0.01
        %v1772 = vmul.f32 %v1698, 0.01
        %v1773 = vmul.f32 %v1703, 0.01
        %v1774 = vmul.f32 %v1708, 0.01
        %v1775 = vmul.f32 %v1713, 0.01
        %v1776 = vmul.f32 %v1718, 0.01
        %v1777 = vmul.f32 %v1723, 0.01
        %v1778 = vmul.f32 %v1728, 0.01
        %v1779 = vmul.f32 %v1733, 0.01
        %v1780 = vmul.f32 %v1738, 0.01
        %v1781 = vmul.f32 %v1743, 0.01
        %v1782 = vmax.f32 %v1568, %v1746
        %v1783 = vmax.f32 %v1573, %v1747
        %v1784 = vmax.f32 %v1578, %v1748
        %v1785 = vmax.f32 %v1583, %v1749
        %v1786 = vmax.f32 %v1588, %v1750
        %v1787 = vmax.f32 %v1593, %v1751
        %v1788 = vmax.f32 %v1598, %v1752
        %v1789 = vmax.f32 %v1603, %v1753
        %v1790 = vmax.f32 %v1608, %v1754
        %v1791 = vmax.f32 %v1613, %v1755
        %v1792 = vmax.f32 %v1618, %v1756
        %v1793 = vmax.f32 %v1623, %v1757
        %v1794 = vmax.f32 %v1628, %v1758
        %v1795 = vmax.f32 %v1633, %v1759
        %v1796 = vmax.f32 %v1638, %v1760
        %v1797 = vmax.f32 %v1643, %v1761
        %v1798 = vmax.f32 %v1648, %v1762
        %v1799 = vmax.f32 %v1653, %v1763
        %v1800 = vmax.f32 %v1658, %v1764
        %v1801 = vmax.f32 %v1663, %v1765
        %v1802 = vmax.f32 %v1668, %v1766
        %v1803 = vmax.f32 %v1673, %v1767
        %v1804 = vmax.f32 %v1678, %v1768
        %v1805 = vmax.f32 %v1683, %v1769
        %v1806 = vmax.f32 %v1688, %v1770
        %v1807 = vmax.f32 %v1693, %v1771
        %v1808 = vmax.f32 %v1698, %v1772
        %v1809 = vmax.f32 %v1703, %v1773
        %v1810 = vmax.f32 %v1708, %v1774
        %v1811 = vmax.f32 %v1713, %v1775
        %v1812 = vmax.f32 %v1718, %v1776
        %v1813 = vmax.f32 %v1723, %v1777
        %v1814 = vmax.f32 %v1728, %v1778
        %v1815 = vmax.f32 %v1733, %v1779
        %v1816 = vmax.f32 %v1738, %v1780
        %v1817 = vmax.f32 %v1743, %v1781
        %v1818 = vld [vmem:[%s5] sm:$0xff]
        %v1819 = vld [vmem:[%s5 + $0x8] sm:$0xff]
        %v1820 = vld [vmem:[%s5 + $0x10] sm:$0xff]
        %v1821 = vld [vmem:[%s5 + $0x18] sm:$0xff]
        %v1822 = vld [vmem:[%s6] sm:$0x1]
        %v1824 = vlaneseq
        %v1825 = vshrl.u32 %v1824, 7
        %v1826 = vsub.s32 0, %v1825
        %v1827 = vrot.slane %v1822, %v1826
        %v1830 = vsel %vm1392, %v1782, 0
        %v1833 = vsel %vm1392, %v1783, 0
        %v1836 = vsel %vm1392, %v1784, 0
        %v1839 = vsel %vm1392, %v1785, 0
        %v1842 = vsel %vm1392, %v1786, 0
        %v1845 = vsel %vm1392, %v1787, 0
        %v1848 = vsel %vm1392, %v1788, 0
        %v1851 = vsel %vm1392, %v1789, 0
        %v1854 = vsel %vm1392, %v1790, 0
        %v1857 = vsel %vm1392, %v1791, 0
        %v1860 = vsel %vm1392, %v1792, 0
        %v1863 = vsel %vm1392, %v1793, 0
        %v1866 = vsel %vm1392, %v1794, 0
        %v1869 = vsel %vm1392, %v1795, 0
        %v1872 = vsel %vm1392, %v1796, 0
        %v1875 = vsel %vm1392, %v1797, 0
        %v1878 = vsel %vm1392, %v1798, 0
        %v1881 = vsel %vm1392, %v1799, 0
        %v1884 = vsel %vm1392, %v1800, 0
        %v1887 = vsel %vm1392, %v1801, 0
        %v1890 = vsel %vm1392, %v1802, 0
        %v1893 = vsel %vm1392, %v1803, 0
        %v1896 = vsel %vm1392, %v1804, 0
        %v1899 = vsel %vm1392, %v1805, 0
        %v1902 = vsel %vm1392, %v1806, 0
        %v1905 = vsel %vm1392, %v1807, 0
        %v1908 = vsel %vm1392, %v1808, 0
        %v1911 = vsel %vm1392, %v1809, 0
        %v1914 = vsel %vm1392, %v1810, 0
        %v1917 = vsel %vm1392, %v1811, 0
        %v1920 = vsel %vm1392, %v1812, 0
        %v1923 = vsel %vm1392, %v1813, 0
        %v1926 = vsel %vm1392, %v1814, 0
        %v1929 = vsel %vm1392, %v1815, 0
        %v1932 = vsel %vm1392, %v1816, 0
        %v1935 = vsel %vm1392, %v1817, 0
        %1937 = vmatprep.subr.mxu0 0.0
        %1938 = vmatpush1.msra.mxu0 %v1818
        %1939 = vmatprep.subr.mxu0 0.0
        %1940 = vmatpush1.msra.mxu0 %v1819
        %1941 = vmatprep.subr.mxu0 0.0
        %1942 = vmatpush1.msra.mxu0 %v1820
        %1943 = vmatprep.subr.mxu0 0.0
        %1944 = vmatpush1.msra.mxu0 %v1821
        %1945 = vmatprep.subr.mxu0 0.0
        %1946 = vmatpush1.msra.mxu0 0.0
        %1947 = vmatprep.subr.mxu0 0.0
        %1948 = vmatpush1.msra.mxu0 0.0
        %1949 = vmatprep.subr.mxu0 0.0
        %1950 = vmatpush1.msra.mxu0 0.0
        %1951 = vmatprep.subr.mxu0 0.0
        %1952 = vmatpush1.msra.mxu0 0.0
        %1953 = vmatprep.subr.mxu0 0.0
        %1954 = vmatpush1.msra.mxu0 0.0
        %1955 = vmatprep.subr.mxu0 0.0
        %1956 = vmatpush1.msra.mxu0 0.0
        %1957 = vmatprep.subr.mxu0 0.0
        %1958 = vmatpush1.msra.mxu0 0.0
        %1959 = vmatprep.subr.mxu0 0.0
        %1960 = vmatpush1.msra.mxu0 0.0
        %1961 = vmatprep.subr.mxu0 0.0
        %1962 = vmatpush1.msra.mxu0 0.0
        %1963 = vmatprep.subr.mxu0 0.0
        %1964 = vmatpush1.msra.mxu0 0.0
        %1965 = vmatprep.subr.mxu0 0.0
        %1966 = vmatpush1.msra.mxu0 0.0
        %1967 = vmatprep.subr.mxu0 0.0
        %1968 = vmatpush1.msra.mxu0 0.0
        %1969 = vmatprep.subr.mxu0 0.0
        %1970 = vmatpush1.msra.mxu0 0.0
        %1971 = vmatprep.subr.mxu0 0.0
        %1972 = vmatpush1.msra.mxu0 0.0
        %1973 = vmatprep.subr.mxu0 0.0
        %1974 = vmatpush1.msra.mxu0 0.0
        %1975 = vmatprep.subr.mxu0 0.0
        %1976 = vmatpush1.msra.mxu0 0.0
        %1977 = vmatprep.subr.mxu0 0.0
        %1978 = vmatpush1.msra.mxu0 0.0
        %1979 = vmatprep.subr.mxu0 0.0
        %1980 = vmatpush1.msra.mxu0 0.0
        %1981 = vmatprep.subr.mxu0 0.0
        %1982 = vmatpush1.msra.mxu0 0.0
        %1983 = vmatprep.subr.mxu0 0.0
        %1984 = vmatpush1.msra.mxu0 0.0
        %1985 = vmatprep.subr.mxu0 0.0
        %1986 = vmatpush1.msra.mxu0 0.0
        %1987 = vmatprep.subr.mxu0 0.0
        %1988 = vmatpush1.msra.mxu0 0.0
        %1989 = vmatprep.subr.mxu0 0.0
        %1990 = vmatpush1.msra.mxu0 0.0
        %1991 = vmatprep.subr.mxu0 0.0
        %1992 = vmatpush1.msra.mxu0 0.0
        %1993 = vmatprep.subr.mxu0 0.0
        %1994 = vmatpush1.msra.mxu0 0.0
        %1995 = vmatprep.subr.mxu0 0.0
        %1996 = vmatpush1.msra.mxu0 0.0
        %1997 = vmatprep.subr.mxu0 0.0
        %1998 = vmatpush1.msra.mxu0 0.0
        %1999 = vmatprep.subr.mxu0 0.0
        %2000 = vmatpush1.msra.mxu0 0.0
        %2001 = vmatprep.mubr.f32.mxu0 0.0
        %2002 = vmatmul.mubr.f32.gmra.mrb[0].mxu0 %v1830
        %v2003 = vpop.f32.mrb[0].mxu0
        %v2004 = vadd.f32 %v1827, %v2003
        %v2005 = vpop.f32.mrb[0].mxu0
        %2006 = vmatprep.mubr.f32.mxu0 0.0
        %2007 = vmatmul.mubr.f32.gmra.mrb[0].mxu0 %v1833
        %v2008 = vpop.f32.mrb[0].mxu0
        %v2009 = vadd.f32 %v1827, %v2008
        %v2010 = vpop.f32.mrb[0].mxu0
        %2011 = vmatprep.mubr.f32.mxu0 0.0
        %2012 = vmatmul.mubr.f32.gmra.mrb[0].mxu0 %v1836
        %v2013 = vpop.f32.mrb[0].mxu0
        %v2014 = vadd.f32 %v1827, %v2013
        %v2015 = vpop.f32.mrb[0].mxu0
        %2016 = vmatprep.mubr.f32.mxu0 0.0
        %2017 = vmatmul.mubr.f32.gmra.mrb[0].mxu0 %v1839
        %v2018 = vpop.f32.mrb[0].mxu0
        %v2019 = vadd.f32 %v1827, %v2018
        %v2020 = vpop.f32.mrb[0].mxu0
        %2021 = vmatprep.mubr.f32.mxu0 0.0
        %2022 = vmatmul.mubr.f32.gmra.mrb[0].mxu0 %v1842
        %v2023 = vpop.f32.mrb[0].mxu0
        %v2024 = vadd.f32 %v1827, %v2023
        %v2025 = vpop.f32.mrb[0].mxu0
        %2026 = vmatprep.mubr.f32.mxu0 0.0
        %2027 = vmatmul.mubr.f32.gmra.mrb[0].mxu0 %v1845
        %v2028 = vpop.f32.mrb[0].mxu0
        %v2029 = vadd.f32 %v1827, %v2028
        %v2030 = vpop.f32.mrb[0].mxu0
        %2031 = vmatprep.mubr.f32.mxu0 0.0
        %2032 = vmatmul.mubr.f32.gmra.mrb[0].mxu0 %v1848
        %v2033 = vpop.f32.mrb[0].mxu0
        %v2034 = vadd.f32 %v1827, %v2033
        %v2035 = vpop.f32.mrb[0].mxu0
        %2036 = vmatprep.mubr.f32.mxu0 0.0
        %2037 = vmatmul.mubr.f32.gmra.mrb[0].mxu0 %v1851
        %v2038 = vpop.f32.mrb[0].mxu0
        %v2039 = vadd.f32 %v1827, %v2038
        %v2040 = vpop.f32.mrb[0].mxu0
        %2041 = vmatprep.mubr.f32.mxu0 0.0
        %2042 = vmatmul.mubr.f32.gmra.mrb[0].mxu0 %v1854
        %v2043 = vpop.f32.mrb[0].mxu0
        %v2044 = vadd.f32 %v1827, %v2043
        %v2045 = vpop.f32.mrb[0].mxu0
        %2046 = vmatprep.mubr.f32.mxu0 0.0
        %2047 = vmatmul.mubr.f32.gmra.mrb[0].mxu0 %v1857
        %v2048 = vpop.f32.mrb[0].mxu0
        %v2049 = vadd.f32 %v1827, %v2048
        %v2050 = vpop.f32.mrb[0].mxu0
        %2051 = vmatprep.mubr.f32.mxu0 0.0
        %2052 = vmatmul.mubr.f32.gmra.mrb[0].mxu0 %v1860
        %v2053 = vpop.f32.mrb[0].mxu0
        %v2054 = vadd.f32 %v1827, %v2053
        %v2055 = vpop.f32.mrb[0].mxu0
        %2056 = vmatprep.mubr.f32.mxu0 0.0
        %2057 = vmatmul.mubr.f32.gmra.mrb[0].mxu0 %v1863
        %v2058 = vpop.f32.mrb[0].mxu0
        %v2059 = vadd.f32 %v1827, %v2058
        %v2060 = vpop.f32.mrb[0].mxu0
        %2061 = vmatprep.mubr.f32.mxu0 0.0
        %2062 = vmatmul.mubr.f32.gmra.mrb[0].mxu0 %v1866
        %v2063 = vpop.f32.mrb[0].mxu0
        %v2064 = vadd.f32 %v1827, %v2063
        %v2065 = vpop.f32.mrb[0].mxu0
        %2066 = vmatprep.mubr.f32.mxu0 0.0
        %2067 = vmatmul.mubr.f32.gmra.mrb[0].mxu0 %v1869
        %v2068 = vpop.f32.mrb[0].mxu0
        %v2069 = vadd.f32 %v1827, %v2068
        %v2070 = vpop.f32.mrb[0].mxu0
        %2071 = vmatprep.mubr.f32.mxu0 0.0
        %2072 = vmatmul.mubr.f32.gmra.mrb[0].mxu0 %v1872
        %v2073 = vpop.f32.mrb[0].mxu0
        %v2074 = vadd.f32 %v1827, %v2073
        %v2075 = vpop.f32.mrb[0].mxu0
        %2076 = vmatprep.mubr.f32.mxu0 0.0
        %2077 = vmatmul.mubr.f32.gmra.mrb[0].mxu0 %v1875
        %v2078 = vpop.f32.mrb[0].mxu0
        %v2079 = vadd.f32 %v1827, %v2078
        %v2080 = vpop.f32.mrb[0].mxu0
        %2081 = vmatprep.mubr.f32.mxu0 0.0
        %2082 = vmatmul.mubr.f32.gmra.mrb[0].mxu0 %v1878
        %v2083 = vpop.f32.mrb[0].mxu0
        %v2084 = vadd.f32 %v1827, %v2083
        %v2085 = vpop.f32.mrb[0].mxu0
        %2086 = vmatprep.mubr.f32.mxu0 0.0
        %2087 = vmatmul.mubr.f32.gmra.mrb[0].mxu0 %v1881
        %v2088 = vpop.f32.mrb[0].mxu0
        %v2089 = vadd.f32 %v1827, %v2088
        %v2090 = vpop.f32.mrb[0].mxu0
        %2091 = vmatprep.mubr.f32.mxu0 0.0
        %2092 = vmatmul.mubr.f32.gmra.mrb[0].mxu0 %v1884
        %v2093 = vpop.f32.mrb[0].mxu0
        %v2094 = vadd.f32 %v1827, %v2093
        %v2095 = vpop.f32.mrb[0].mxu0
        %2096 = vmatprep.mubr.f32.mxu0 0.0
        %2097 = vmatmul.mubr.f32.gmra.mrb[0].mxu0 %v1887
        %v2098 = vpop.f32.mrb[0].mxu0
        %v2099 = vadd.f32 %v1827, %v2098
        %v2100 = vpop.f32.mrb[0].mxu0
        %2101 = vmatprep.mubr.f32.mxu0 0.0
        %2102 = vmatmul.mubr.f32.gmra.mrb[0].mxu0 %v1890
        %v2103 = vpop.f32.mrb[0].mxu0
        %v2104 = vadd.f32 %v1827, %v2103
        %v2105 = vpop.f32.mrb[0].mxu0
        %2106 = vmatprep.mubr.f32.mxu0 0.0
        %2107 = vmatmul.mubr.f32.gmra.mrb[0].mxu0 %v1893
        %v2108 = vpop.f32.mrb[0].mxu0
        %v2109 = vadd.f32 %v1827, %v2108
        %v2110 = vpop.f32.mrb[0].mxu0
        %2111 = vmatprep.mubr.f32.mxu0 0.0
        %2112 = vmatmul.mubr.f32.gmra.mrb[0].mxu0 %v1896
        %v2113 = vpop.f32.mrb[0].mxu0
        %v2114 = vadd.f32 %v1827, %v2113
        %v2115 = vpop.f32.mrb[0].mxu0
        %2116 = vmatprep.mubr.f32.mxu0 0.0
        %2117 = vmatmul.mubr.f32.gmra.mrb[0].mxu0 %v1899
        %v2118 = vpop.f32.mrb[0].mxu0
        %v2119 = vadd.f32 %v1827, %v2118
        %v2120 = vpop.f32.mrb[0].mxu0
        %2121 = vmatprep.mubr.f32.mxu0 0.0
        %2122 = vmatmul.mubr.f32.gmra.mrb[0].mxu0 %v1902
        %v2123 = vpop.f32.mrb[0].mxu0
        %v2124 = vadd.f32 %v1827, %v2123
        %v2125 = vpop.f32.mrb[0].mxu0
        %2126 = vmatprep.mubr.f32.mxu0 0.0
        %2127 = vmatmul.mubr.f32.gmra.mrb[0].mxu0 %v1905
        %v2128 = vpop.f32.mrb[0].mxu0
        %v2129 = vadd.f32 %v1827, %v2128
        %v2130 = vpop.f32.mrb[0].mxu0
        %2131 = vmatprep.mubr.f32.mxu0 0.0
        %2132 = vmatmul.mubr.f32.gmra.mrb[0].mxu0 %v1908
        %v2133 = vpop.f32.mrb[0].mxu0
        %v2134 = vadd.f32 %v1827, %v2133
        %v2135 = vpop.f32.mrb[0].mxu0
        %2136 = vmatprep.mubr.f32.mxu0 0.0
        %2137 = vmatmul.mubr.f32.gmra.mrb[0].mxu0 %v1911
        %v2138 = vpop.f32.mrb[0].mxu0
        %v2139 = vadd.f32 %v1827, %v2138
        %v2140 = vpop.f32.mrb[0].mxu0
        %2141 = vmatprep.mubr.f32.mxu0 0.0
        %2142 = vmatmul.mubr.f32.gmra.mrb[0].mxu0 %v1914
        %v2143 = vpop.f32.mrb[0].mxu0
        %v2144 = vadd.f32 %v1827, %v2143
        %v2145 = vpop.f32.mrb[0].mxu0
        %2146 = vmatprep.mubr.f32.mxu0 0.0
        %2147 = vmatmul.mubr.f32.gmra.mrb[0].mxu0 %v1917
        %v2148 = vpop.f32.mrb[0].mxu0
        %v2149 = vadd.f32 %v1827, %v2148
        %v2150 = vpop.f32.mrb[0].mxu0
        %2151 = vmatprep.mubr.f32.mxu0 0.0
        %2152 = vmatmul.mubr.f32.gmra.mrb[0].mxu0 %v1920
        %v2153 = vpop.f32.mrb[0].mxu0
        %v2154 = vadd.f32 %v1827, %v2153
        %v2155 = vpop.f32.mrb[0].mxu0
        %2156 = vmatprep.mubr.f32.mxu0 0.0
        %2157 = vmatmul.mubr.f32.gmra.mrb[0].mxu0 %v1923
        %v2158 = vpop.f32.mrb[0].mxu0
        %v2159 = vadd.f32 %v1827, %v2158
        %v2160 = vpop.f32.mrb[0].mxu0
        %2161 = vmatprep.mubr.f32.mxu0 0.0
        %2162 = vmatmul.mubr.f32.gmra.mrb[0].mxu0 %v1926
        %v2163 = vpop.f32.mrb[0].mxu0
        %v2164 = vadd.f32 %v1827, %v2163
        %v2165 = vpop.f32.mrb[0].mxu0
        %2166 = vmatprep.mubr.f32.mxu0 0.0
        %2167 = vmatmul.mubr.f32.gmra.mrb[0].mxu0 %v1929
        %v2168 = vpop.f32.mrb[0].mxu0
        %v2169 = vadd.f32 %v1827, %v2168
        %v2170 = vpop.f32.mrb[0].mxu0
        %2171 = vmatprep.mubr.f32.mxu0 0.0
        %2172 = vmatmul.mubr.f32.gmra.mrb[0].mxu0 %v1932
        %v2173 = vpop.f32.mrb[0].mxu0
        %v2174 = vadd.f32 %v1827, %v2173
        %v2175 = vpop.f32.mrb[0].mxu0
        %2176 = vmatprep.mubr.f32.mxu0 0.0
        %2177 = vmatmul.mubr.f32.gmra.mrb[0].mxu0 %v1935
        %v2178 = vpop.f32.mrb[0].mxu0
        %v2179 = vadd.f32 %v1827, %v2178
        %v2180 = vpop.f32.mrb[0].mxu0
        %2181 = vdwg.mxu0
        %v2182 = vmul.f32 %v2004, 0.01
        %v2183 = vmul.f32 %v2009, 0.01
        %v2184 = vmul.f32 %v2014, 0.01
        %v2185 = vmul.f32 %v2019, 0.01
        %v2186 = vmul.f32 %v2024, 0.01
        %v2187 = vmul.f32 %v2029, 0.01
        %v2188 = vmul.f32 %v2034, 0.01
        %v2189 = vmul.f32 %v2039, 0.01
        %v2190 = vmul.f32 %v2044, 0.01
        %v2191 = vmul.f32 %v2049, 0.01
        %v2192 = vmul.f32 %v2054, 0.01
        %v2193 = vmul.f32 %v2059, 0.01
        %v2194 = vmul.f32 %v2064, 0.01
        %v2195 = vmul.f32 %v2069, 0.01
        %v2196 = vmul.f32 %v2074, 0.01
        %v2197 = vmul.f32 %v2079, 0.01
        %v2198 = vmul.f32 %v2084, 0.01
        %v2199 = vmul.f32 %v2089, 0.01
        %v2200 = vmul.f32 %v2094, 0.01
        %v2201 = vmul.f32 %v2099, 0.01
        %v2202 = vmul.f32 %v2104, 0.01
        %v2203 = vmul.f32 %v2109, 0.01
        %v2204 = vmul.f32 %v2114, 0.01
        %v2205 = vmul.f32 %v2119, 0.01
        %v2206 = vmul.f32 %v2124, 0.01
        %v2207 = vmul.f32 %v2129, 0.01
        %v2208 = vmul.f32 %v2134, 0.01
        %v2209 = vmul.f32 %v2139, 0.01
        %v2210 = vmul.f32 %v2144, 0.01
        %v2211 = vmul.f32 %v2149, 0.01
        %v2212 = vmul.f32 %v2154, 0.01
        %v2213 = vmul.f32 %v2159, 0.01
        %v2214 = vmul.f32 %v2164, 0.01
        %v2215 = vmul.f32 %v2169, 0.01
        %v2216 = vmul.f32 %v2174, 0.01
        %v2217 = vmul.f32 %v2179, 0.01
        %v2218 = vmax.f32 %v2004, %v2182
        %v2219 = vmax.f32 %v2009, %v2183
        %v2220 = vmax.f32 %v2014, %v2184
        %v2221 = vmax.f32 %v2019, %v2185
        %v2222 = vmax.f32 %v2024, %v2186
        %v2223 = vmax.f32 %v2029, %v2187
        %v2224 = vmax.f32 %v2034, %v2188
        %v2225 = vmax.f32 %v2039, %v2189
        %v2226 = vmax.f32 %v2044, %v2190
        %v2227 = vmax.f32 %v2049, %v2191
        %v2228 = vmax.f32 %v2054, %v2192
        %v2229 = vmax.f32 %v2059, %v2193
        %v2230 = vmax.f32 %v2064, %v2194
        %v2231 = vmax.f32 %v2069, %v2195
        %v2232 = vmax.f32 %v2074, %v2196
        %v2233 = vmax.f32 %v2079, %v2197
        %v2234 = vmax.f32 %v2084, %v2198
        %v2235 = vmax.f32 %v2089, %v2199
        %v2236 = vmax.f32 %v2094, %v2200
        %v2237 = vmax.f32 %v2099, %v2201
        %v2238 = vmax.f32 %v2104, %v2202
        %v2239 = vmax.f32 %v2109, %v2203
        %v2240 = vmax.f32 %v2114, %v2204
        %v2241 = vmax.f32 %v2119, %v2205
        %v2242 = vmax.f32 %v2124, %v2206
        %v2243 = vmax.f32 %v2129, %v2207
        %v2244 = vmax.f32 %v2134, %v2208
        %v2245 = vmax.f32 %v2139, %v2209
        %v2246 = vmax.f32 %v2144, %v2210
        %v2247 = vmax.f32 %v2149, %v2211
        %v2248 = vmax.f32 %v2154, %v2212
        %v2249 = vmax.f32 %v2159, %v2213
        %v2250 = vmax.f32 %v2164, %v2214
        %v2251 = vmax.f32 %v2169, %v2215
        %v2252 = vmax.f32 %v2174, %v2216
        %v2253 = vmax.f32 %v2179, %v2217
        %v2254 = vld [vmem:[%s7] sm:$0xff]
        %v2255 = vld [vmem:[%s7 + $0x8] sm:$0xff]
        %v2256 = vld [vmem:[%s7 + $0x10] sm:$0xff]
        %v2257 = vld [vmem:[%s7 + $0x18] sm:$0xff]
        %v2258 = vld [vmem:[%s8] sm:$0x1]
        %v2260 = vlaneseq
        %v2261 = vshrl.u32 %v2260, 7
        %v2262 = vsub.s32 0, %v2261
        %v2263 = vrot.slane %v2258, %v2262
        %v2266 = vsel %vm1392, %v2218, 0
        %v2269 = vsel %vm1392, %v2219, 0
        %v2272 = vsel %vm1392, %v2220, 0
        %v2275 = vsel %vm1392, %v2221, 0
        %v2278 = vsel %vm1392, %v2222, 0
        %v2281 = vsel %vm1392, %v2223, 0
        %v2284 = vsel %vm1392, %v2224, 0
        %v2287 = vsel %vm1392, %v2225, 0
        %v2290 = vsel %vm1392, %v2226, 0
        %v2293 = vsel %vm1392, %v2227, 0
        %v2296 = vsel %vm1392, %v2228, 0
        %v2299 = vsel %vm1392, %v2229, 0
        %v2302 = vsel %vm1392, %v2230, 0
        %v2305 = vsel %vm1392, %v2231, 0
        %v2308 = vsel %vm1392, %v2232, 0
        %v2311 = vsel %vm1392, %v2233, 0
        %v2314 = vsel %vm1392, %v2234, 0
        %v2317 = vsel %vm1392, %v2235, 0
        %v2320 = vsel %vm1392, %v2236, 0
        %v2323 = vsel %vm1392, %v2237, 0
        %v2326 = vsel %vm1392, %v2238, 0
        %v2329 = vsel %vm1392, %v2239, 0
        %v2332 = vsel %vm1392, %v2240, 0
        %v2335 = vsel %vm1392, %v2241, 0
        %v2338 = vsel %vm1392, %v2242, 0
        %v2341 = vsel %vm1392, %v2243, 0
        %v2344 = vsel %vm1392, %v2244, 0
        %v2347 = vsel %vm1392, %v2245, 0
        %v2350 = vsel %vm1392, %v2246, 0
        %v2353 = vsel %vm1392, %v2247, 0
        %v2356 = vsel %vm1392, %v2248, 0
        %v2359 = vsel %vm1392, %v2249, 0
        %v2362 = vsel %vm1392, %v2250, 0
        %v2365 = vsel %vm1392, %v2251, 0
        %v2368 = vsel %vm1392, %v2252, 0
        %v2371 = vsel %vm1392, %v2253, 0
        %2373 = vmatprep.subr.mxu0 0.0
        %2374 = vmatpush1.msra.mxu0 %v2254
        %2375 = vmatprep.subr.mxu0 0.0
        %2376 = vmatpush1.msra.mxu0 %v2255
        %2377 = vmatprep.subr.mxu0 0.0
        %2378 = vmatpush1.msra.mxu0 %v2256
        %2379 = vmatprep.subr.mxu0 0.0
        %2380 = vmatpush1.msra.mxu0 %v2257
        %2381 = vmatprep.subr.mxu0 0.0
        %2382 = vmatpush1.msra.mxu0 0.0
        %2383 = vmatprep.subr.mxu0 0.0
        %2384 = vmatpush1.msra.mxu0 0.0
        %2385 = vmatprep.subr.mxu0 0.0
        %2386 = vmatpush1.msra.mxu0 0.0
        %2387 = vmatprep.subr.mxu0 0.0
        %2388 = vmatpush1.msra.mxu0 0.0
        %2389 = vmatprep.subr.mxu0 0.0
        %2390 = vmatpush1.msra.mxu0 0.0
        %2391 = vmatprep.subr.mxu0 0.0
        %2392 = vmatpush1.msra.mxu0 0.0
        %2393 = vmatprep.subr.mxu0 0.0
        %2394 = vmatpush1.msra.mxu0 0.0
        %2395 = vmatprep.subr.mxu0 0.0
        %2396 = vmatpush1.msra.mxu0 0.0
        %2397 = vmatprep.subr.mxu0 0.0
        %2398 = vmatpush1.msra.mxu0 0.0
        %2399 = vmatprep.subr.mxu0 0.0
        %2400 = vmatpush1.msra.mxu0 0.0
        %2401 = vmatprep.subr.mxu0 0.0
        %2402 = vmatpush1.msra.mxu0 0.0
        %2403 = vmatprep.subr.mxu0 0.0
        %2404 = vmatpush1.msra.mxu0 0.0
        %2405 = vmatprep.subr.mxu0 0.0
        %2406 = vmatpush1.msra.mxu0 0.0
        %2407 = vmatprep.subr.mxu0 0.0
        %2408 = vmatpush1.msra.mxu0 0.0
        %2409 = vmatprep.subr.mxu0 0.0
        %2410 = vmatpush1.msra.mxu0 0.0
        %2411 = vmatprep.subr.mxu0 0.0
        %2412 = vmatpush1.msra.mxu0 0.0
        %2413 = vmatprep.subr.mxu0 0.0
        %2414 = vmatpush1.msra.mxu0 0.0
        %2415 = vmatprep.subr.mxu0 0.0
        %2416 = vmatpush1.msra.mxu0 0.0
        %2417 = vmatprep.subr.mxu0 0.0
        %2418 = vmatpush1.msra.mxu0 0.0
        %2419 = vmatprep.subr.mxu0 0.0
        %2420 = vmatpush1.msra.mxu0 0.0
        %2421 = vmatprep.subr.mxu0 0.0
        %2422 = vmatpush1.msra.mxu0 0.0
        %2423 = vmatprep.subr.mxu0 0.0
        %2424 = vmatpush1.msra.mxu0 0.0
        %2425 = vmatprep.subr.mxu0 0.0
        %2426 = vmatpush1.msra.mxu0 0.0
        %2427 = vmatprep.subr.mxu0 0.0
        %2428 = vmatpush1.msra.mxu0 0.0
        %2429 = vmatprep.subr.mxu0 0.0
        %2430 = vmatpush1.msra.mxu0 0.0
        %2431 = vmatprep.subr.mxu0 0.0
        %2432 = vmatpush1.msra.mxu0 0.0
        %2433 = vmatprep.subr.mxu0 0.0
        %2434 = vmatpush1.msra.mxu0 0.0
        %2435 = vmatprep.subr.mxu0 0.0
        %2436 = vmatpush1.msra.mxu0 0.0
        %2437 = vmatprep.mubr.f32.mxu0 0.0
        %2438 = vmatmul.mubr.f32.gmra.mrb[0].mxu0 %v2266
        %v2439 = vpop.f32.mrb[0].mxu0
        %v2440 = vadd.f32 %v2263, %v2439
        %v2441 = vpop.f32.mrb[0].mxu0
        %2442 = vmatprep.mubr.f32.mxu0 0.0
        %2443 = vmatmul.mubr.f32.gmra.mrb[0].mxu0 %v2269
        %v2444 = vpop.f32.mrb[0].mxu0
        %v2445 = vadd.f32 %v2263, %v2444
        %v2446 = vpop.f32.mrb[0].mxu0
        %2447 = vmatprep.mubr.f32.mxu0 0.0
        %2448 = vmatmul.mubr.f32.gmra.mrb[0].mxu0 %v2272
        %v2449 = vpop.f32.mrb[0].mxu0
        %v2450 = vadd.f32 %v2263, %v2449
        %v2451 = vpop.f32.mrb[0].mxu0
        %2452 = vmatprep.mubr.f32.mxu0 0.0
        %2453 = vmatmul.mubr.f32.gmra.mrb[0].mxu0 %v2275
        %v2454 = vpop.f32.mrb[0].mxu0
        %v2455 = vadd.f32 %v2263, %v2454
        %v2456 = vpop.f32.mrb[0].mxu0
        %2457 = vmatprep.mubr.f32.mxu0 0.0
        %2458 = vmatmul.mubr.f32.gmra.mrb[0].mxu0 %v2278
        %v2459 = vpop.f32.mrb[0].mxu0
        %v2460 = vadd.f32 %v2263, %v2459
        %v2461 = vpop.f32.mrb[0].mxu0
        %2462 = vmatprep.mubr.f32.mxu0 0.0
        %2463 = vmatmul.mubr.f32.gmra.mrb[0].mxu0 %v2281
        %v2464 = vpop.f32.mrb[0].mxu0
        %v2465 = vadd.f32 %v2263, %v2464
        %v2466 = vpop.f32.mrb[0].mxu0
        %2467 = vmatprep.mubr.f32.mxu0 0.0
        %2468 = vmatmul.mubr.f32.gmra.mrb[0].mxu0 %v2284
        %v2469 = vpop.f32.mrb[0].mxu0
        %v2470 = vadd.f32 %v2263, %v2469
        %v2471 = vpop.f32.mrb[0].mxu0
        %2472 = vmatprep.mubr.f32.mxu0 0.0
        %2473 = vmatmul.mubr.f32.gmra.mrb[0].mxu0 %v2287
        %v2474 = vpop.f32.mrb[0].mxu0
        %v2475 = vadd.f32 %v2263, %v2474
        %v2476 = vpop.f32.mrb[0].mxu0
        %2477 = vmatprep.mubr.f32.mxu0 0.0
        %2478 = vmatmul.mubr.f32.gmra.mrb[0].mxu0 %v2290
        %v2479 = vpop.f32.mrb[0].mxu0
        %v2480 = vadd.f32 %v2263, %v2479
        %v2481 = vpop.f32.mrb[0].mxu0
        %2482 = vmatprep.mubr.f32.mxu0 0.0
        %2483 = vmatmul.mubr.f32.gmra.mrb[0].mxu0 %v2293
        %v2484 = vpop.f32.mrb[0].mxu0
        %v2485 = vadd.f32 %v2263, %v2484
        %v2486 = vpop.f32.mrb[0].mxu0
        %2487 = vmatprep.mubr.f32.mxu0 0.0
        %2488 = vmatmul.mubr.f32.gmra.mrb[0].mxu0 %v2296
        %v2489 = vpop.f32.mrb[0].mxu0
        %v2490 = vadd.f32 %v2263, %v2489
        %v2491 = vpop.f32.mrb[0].mxu0
        %2492 = vmatprep.mubr.f32.mxu0 0.0
        %2493 = vmatmul.mubr.f32.gmra.mrb[0].mxu0 %v2299
        %v2494 = vpop.f32.mrb[0].mxu0
        %v2495 = vadd.f32 %v2263, %v2494
        %v2496 = vpop.f32.mrb[0].mxu0
        %2497 = vmatprep.mubr.f32.mxu0 0.0
        %2498 = vmatmul.mubr.f32.gmra.mrb[0].mxu0 %v2302
        %v2499 = vpop.f32.mrb[0].mxu0
        %v2500 = vadd.f32 %v2263, %v2499
        %v2501 = vpop.f32.mrb[0].mxu0
        %2502 = vmatprep.mubr.f32.mxu0 0.0
        %2503 = vmatmul.mubr.f32.gmra.mrb[0].mxu0 %v2305
        %v2504 = vpop.f32.mrb[0].mxu0
        %v2505 = vadd.f32 %v2263, %v2504
        %v2506 = vpop.f32.mrb[0].mxu0
        %2507 = vmatprep.mubr.f32.mxu0 0.0
        %2508 = vmatmul.mubr.f32.gmra.mrb[0].mxu0 %v2308
        %v2509 = vpop.f32.mrb[0].mxu0
        %v2510 = vadd.f32 %v2263, %v2509
        %v2511 = vpop.f32.mrb[0].mxu0
        %2512 = vmatprep.mubr.f32.mxu0 0.0
        %2513 = vmatmul.mubr.f32.gmra.mrb[0].mxu0 %v2311
        %v2514 = vpop.f32.mrb[0].mxu0
        %v2515 = vadd.f32 %v2263, %v2514
        %v2516 = vpop.f32.mrb[0].mxu0
        %2517 = vmatprep.mubr.f32.mxu0 0.0
        %2518 = vmatmul.mubr.f32.gmra.mrb[0].mxu0 %v2314
        %v2519 = vpop.f32.mrb[0].mxu0
        %v2520 = vadd.f32 %v2263, %v2519
        %v2521 = vpop.f32.mrb[0].mxu0
        %2522 = vmatprep.mubr.f32.mxu0 0.0
        %2523 = vmatmul.mubr.f32.gmra.mrb[0].mxu0 %v2317
        %v2524 = vpop.f32.mrb[0].mxu0
        %v2525 = vadd.f32 %v2263, %v2524
        %v2526 = vpop.f32.mrb[0].mxu0
        %2527 = vmatprep.mubr.f32.mxu0 0.0
        %2528 = vmatmul.mubr.f32.gmra.mrb[0].mxu0 %v2320
        %v2529 = vpop.f32.mrb[0].mxu0
        %v2530 = vadd.f32 %v2263, %v2529
        %v2531 = vpop.f32.mrb[0].mxu0
        %2532 = vmatprep.mubr.f32.mxu0 0.0
        %2533 = vmatmul.mubr.f32.gmra.mrb[0].mxu0 %v2323
        %v2534 = vpop.f32.mrb[0].mxu0
        %v2535 = vadd.f32 %v2263, %v2534
        %v2536 = vpop.f32.mrb[0].mxu0
        %2537 = vmatprep.mubr.f32.mxu0 0.0
        %2538 = vmatmul.mubr.f32.gmra.mrb[0].mxu0 %v2326
        %v2539 = vpop.f32.mrb[0].mxu0
        %v2540 = vadd.f32 %v2263, %v2539
        %v2541 = vpop.f32.mrb[0].mxu0
        %2542 = vmatprep.mubr.f32.mxu0 0.0
        %2543 = vmatmul.mubr.f32.gmra.mrb[0].mxu0 %v2329
        %v2544 = vpop.f32.mrb[0].mxu0
        %v2545 = vadd.f32 %v2263, %v2544
        %v2546 = vpop.f32.mrb[0].mxu0
        %2547 = vmatprep.mubr.f32.mxu0 0.0
        %2548 = vmatmul.mubr.f32.gmra.mrb[0].mxu0 %v2332
        %v2549 = vpop.f32.mrb[0].mxu0
        %v2550 = vadd.f32 %v2263, %v2549
        %v2551 = vpop.f32.mrb[0].mxu0
        %2552 = vmatprep.mubr.f32.mxu0 0.0
        %2553 = vmatmul.mubr.f32.gmra.mrb[0].mxu0 %v2335
        %v2554 = vpop.f32.mrb[0].mxu0
        %v2555 = vadd.f32 %v2263, %v2554
        %v2556 = vpop.f32.mrb[0].mxu0
        %2557 = vmatprep.mubr.f32.mxu0 0.0
        %2558 = vmatmul.mubr.f32.gmra.mrb[0].mxu0 %v2338
        %v2559 = vpop.f32.mrb[0].mxu0
        %v2560 = vadd.f32 %v2263, %v2559
        %v2561 = vpop.f32.mrb[0].mxu0
        %2562 = vmatprep.mubr.f32.mxu0 0.0
        %2563 = vmatmul.mubr.f32.gmra.mrb[0].mxu0 %v2341
        %v2564 = vpop.f32.mrb[0].mxu0
        %v2565 = vadd.f32 %v2263, %v2564
        %v2566 = vpop.f32.mrb[0].mxu0
        %2567 = vmatprep.mubr.f32.mxu0 0.0
        %2568 = vmatmul.mubr.f32.gmra.mrb[0].mxu0 %v2344
        %v2569 = vpop.f32.mrb[0].mxu0
        %v2570 = vadd.f32 %v2263, %v2569
        %v2571 = vpop.f32.mrb[0].mxu0
        %2572 = vmatprep.mubr.f32.mxu0 0.0
        %2573 = vmatmul.mubr.f32.gmra.mrb[0].mxu0 %v2347
        %v2574 = vpop.f32.mrb[0].mxu0
        %v2575 = vadd.f32 %v2263, %v2574
        %v2576 = vpop.f32.mrb[0].mxu0
        %2577 = vmatprep.mubr.f32.mxu0 0.0
        %2578 = vmatmul.mubr.f32.gmra.mrb[0].mxu0 %v2350
        %v2579 = vpop.f32.mrb[0].mxu0
        %v2580 = vadd.f32 %v2263, %v2579
        %v2581 = vpop.f32.mrb[0].mxu0
        %2582 = vmatprep.mubr.f32.mxu0 0.0
        %2583 = vmatmul.mubr.f32.gmra.mrb[0].mxu0 %v2353
        %v2584 = vpop.f32.mrb[0].mxu0
        %v2585 = vadd.f32 %v2263, %v2584
        %v2586 = vpop.f32.mrb[0].mxu0
        %2587 = vmatprep.mubr.f32.mxu0 0.0
        %2588 = vmatmul.mubr.f32.gmra.mrb[0].mxu0 %v2356
        %v2589 = vpop.f32.mrb[0].mxu0
        %v2590 = vadd.f32 %v2263, %v2589
        %v2591 = vpop.f32.mrb[0].mxu0
        %2592 = vmatprep.mubr.f32.mxu0 0.0
        %2593 = vmatmul.mubr.f32.gmra.mrb[0].mxu0 %v2359
        %v2594 = vpop.f32.mrb[0].mxu0
        %v2595 = vadd.f32 %v2263, %v2594
        %v2596 = vpop.f32.mrb[0].mxu0
        %2597 = vmatprep.mubr.f32.mxu0 0.0
        %2598 = vmatmul.mubr.f32.gmra.mrb[0].mxu0 %v2362
        %v2599 = vpop.f32.mrb[0].mxu0
        %v2600 = vadd.f32 %v2263, %v2599
        %v2601 = vpop.f32.mrb[0].mxu0
        %2602 = vmatprep.mubr.f32.mxu0 0.0
        %2603 = vmatmul.mubr.f32.gmra.mrb[0].mxu0 %v2365
        %v2604 = vpop.f32.mrb[0].mxu0
        %v2605 = vadd.f32 %v2263, %v2604
        %v2606 = vpop.f32.mrb[0].mxu0
        %2607 = vmatprep.mubr.f32.mxu0 0.0
        %2608 = vmatmul.mubr.f32.gmra.mrb[0].mxu0 %v2368
        %v2609 = vpop.f32.mrb[0].mxu0
        %v2610 = vadd.f32 %v2263, %v2609
        %v2611 = vpop.f32.mrb[0].mxu0
        %2612 = vmatprep.mubr.f32.mxu0 0.0
        %2613 = vmatmul.mubr.f32.gmra.mrb[0].mxu0 %v2371
        %v2614 = vpop.f32.mrb[0].mxu0
        %v2615 = vadd.f32 %v2263, %v2614
        %v2616 = vpop.f32.mrb[0].mxu0
        %2617 = vdwg.mxu0
        %v2618 = vmul.f32 %v2440, 0.01
        %v2619 = vmul.f32 %v2445, 0.01
        %v2620 = vmul.f32 %v2450, 0.01
        %v2621 = vmul.f32 %v2455, 0.01
        %v2622 = vmul.f32 %v2460, 0.01
        %v2623 = vmul.f32 %v2465, 0.01
        %v2624 = vmul.f32 %v2470, 0.01
        %v2625 = vmul.f32 %v2475, 0.01
        %v2626 = vmul.f32 %v2480, 0.01
        %v2627 = vmul.f32 %v2485, 0.01
        %v2628 = vmul.f32 %v2490, 0.01
        %v2629 = vmul.f32 %v2495, 0.01
        %v2630 = vmul.f32 %v2500, 0.01
        %v2631 = vmul.f32 %v2505, 0.01
        %v2632 = vmul.f32 %v2510, 0.01
        %v2633 = vmul.f32 %v2515, 0.01
        %v2634 = vmul.f32 %v2520, 0.01
        %v2635 = vmul.f32 %v2525, 0.01
        %v2636 = vmul.f32 %v2530, 0.01
        %v2637 = vmul.f32 %v2535, 0.01
        %v2638 = vmul.f32 %v2540, 0.01
        %v2639 = vmul.f32 %v2545, 0.01
        %v2640 = vmul.f32 %v2550, 0.01
        %v2641 = vmul.f32 %v2555, 0.01
        %v2642 = vmul.f32 %v2560, 0.01
        %v2643 = vmul.f32 %v2565, 0.01
        %v2644 = vmul.f32 %v2570, 0.01
        %v2645 = vmul.f32 %v2575, 0.01
        %v2646 = vmul.f32 %v2580, 0.01
        %v2647 = vmul.f32 %v2585, 0.01
        %v2648 = vmul.f32 %v2590, 0.01
        %v2649 = vmul.f32 %v2595, 0.01
        %v2650 = vmul.f32 %v2600, 0.01
        %v2651 = vmul.f32 %v2605, 0.01
        %v2652 = vmul.f32 %v2610, 0.01
        %v2653 = vmul.f32 %v2615, 0.01
        %v2654 = vmax.f32 %v2440, %v2618
        %v2655 = vmax.f32 %v2445, %v2619
        %v2656 = vmax.f32 %v2450, %v2620
        %v2657 = vmax.f32 %v2455, %v2621
        %v2658 = vmax.f32 %v2460, %v2622
        %v2659 = vmax.f32 %v2465, %v2623
        %v2660 = vmax.f32 %v2470, %v2624
        %v2661 = vmax.f32 %v2475, %v2625
        %v2662 = vmax.f32 %v2480, %v2626
        %v2663 = vmax.f32 %v2485, %v2627
        %v2664 = vmax.f32 %v2490, %v2628
        %v2665 = vmax.f32 %v2495, %v2629
        %v2666 = vmax.f32 %v2500, %v2630
        %v2667 = vmax.f32 %v2505, %v2631
        %v2668 = vmax.f32 %v2510, %v2632
        %v2669 = vmax.f32 %v2515, %v2633
        %v2670 = vmax.f32 %v2520, %v2634
        %v2671 = vmax.f32 %v2525, %v2635
        %v2672 = vmax.f32 %v2530, %v2636
        %v2673 = vmax.f32 %v2535, %v2637
        %v2674 = vmax.f32 %v2540, %v2638
        %v2675 = vmax.f32 %v2545, %v2639
        %v2676 = vmax.f32 %v2550, %v2640
        %v2677 = vmax.f32 %v2555, %v2641
        %v2678 = vmax.f32 %v2560, %v2642
        %v2679 = vmax.f32 %v2565, %v2643
        %v2680 = vmax.f32 %v2570, %v2644
        %v2681 = vmax.f32 %v2575, %v2645
        %v2682 = vmax.f32 %v2580, %v2646
        %v2683 = vmax.f32 %v2585, %v2647
        %v2684 = vmax.f32 %v2590, %v2648
        %v2685 = vmax.f32 %v2595, %v2649
        %v2686 = vmax.f32 %v2600, %v2650
        %v2687 = vmax.f32 %v2605, %v2651
        %v2688 = vmax.f32 %v2610, %v2652
        %v2689 = vmax.f32 %v2615, %v2653
        %v2690 = vld [vmem:[%s9] sm:$0xff]
        %v2691 = vld [vmem:[%s9 + $0x8] sm:$0xff]
        %v2692 = vld [vmem:[%s10] sm:$0x1]
        %v2694 = vlaneseq
        %v2695 = vshrl.u32 %v2694, 7
        %v2696 = vsub.s32 0, %v2695
        %v2697 = vrot.slane %v2692, %v2696
        %vm2699 = vcmask 130048
        %v2701 = vsel %vm2699, %v2654, 0
        %v2704 = vsel %vm2699, %v2655, 0
        %v2707 = vsel %vm2699, %v2656, 0
        %v2710 = vsel %vm2699, %v2657, 0
        %v2713 = vsel %vm2699, %v2658, 0
        %v2716 = vsel %vm2699, %v2659, 0
        %v2719 = vsel %vm2699, %v2660, 0
        %v2722 = vsel %vm2699, %v2661, 0
        %v2725 = vsel %vm2699, %v2662, 0
        %v2728 = vsel %vm2699, %v2663, 0
        %v2731 = vsel %vm2699, %v2664, 0
        %v2734 = vsel %vm2699, %v2665, 0
        %v2737 = vsel %vm2699, %v2666, 0
        %v2740 = vsel %vm2699, %v2667, 0
        %v2743 = vsel %vm2699, %v2668, 0
        %v2746 = vsel %vm2699, %v2669, 0
        %v2749 = vsel %vm2699, %v2670, 0
        %v2752 = vsel %vm2699, %v2671, 0
        %v2755 = vsel %vm2699, %v2672, 0
        %v2758 = vsel %vm2699, %v2673, 0
        %v2761 = vsel %vm2699, %v2674, 0
        %v2764 = vsel %vm2699, %v2675, 0
        %v2767 = vsel %vm2699, %v2676, 0
        %v2770 = vsel %vm2699, %v2677, 0
        %v2773 = vsel %vm2699, %v2678, 0
        %v2776 = vsel %vm2699, %v2679, 0
        %v2779 = vsel %vm2699, %v2680, 0
        %v2782 = vsel %vm2699, %v2681, 0
        %v2785 = vsel %vm2699, %v2682, 0
        %v2788 = vsel %vm2699, %v2683, 0
        %v2791 = vsel %vm2699, %v2684, 0
        %v2794 = vsel %vm2699, %v2685, 0
        %v2797 = vsel %vm2699, %v2686, 0
        %v2800 = vsel %vm2699, %v2687, 0
        %v2803 = vsel %vm2699, %v2688, 0
        %v2806 = vsel %vm2699, %v2689, 0
        %2808 = vmatprep.subr.mxu0 0.0
        %2809 = vmatpush1.msra.mxu0 %v2690
        %2810 = vmatprep.subr.mxu0 0.0
        %2811 = vmatpush1.msra.mxu0 %v2691
        %2812 = vmatprep.subr.mxu0 0.0
        %2813 = vmatpush1.msra.mxu0 0.0
        %2814 = vmatprep.subr.mxu0 0.0
        %2815 = vmatpush1.msra.mxu0 0.0
        %2816 = vmatprep.subr.mxu0 0.0
        %2817 = vmatpush1.msra.mxu0 0.0
        %2818 = vmatprep.subr.mxu0 0.0
        %2819 = vmatpush1.msra.mxu0 0.0
        %2820 = vmatprep.subr.mxu0 0.0
        %2821 = vmatpush1.msra.mxu0 0.0
        %2822 = vmatprep.subr.mxu0 0.0
        %2823 = vmatpush1.msra.mxu0 0.0
        %2824 = vmatprep.subr.mxu0 0.0
        %2825 = vmatpush1.msra.mxu0 0.0
        %2826 = vmatprep.subr.mxu0 0.0
        %2827 = vmatpush1.msra.mxu0 0.0
        %2828 = vmatprep.subr.mxu0 0.0
        %2829 = vmatpush1.msra.mxu0 0.0
        %2830 = vmatprep.subr.mxu0 0.0
        %2831 = vmatpush1.msra.mxu0 0.0
        %2832 = vmatprep.subr.mxu0 0.0
        %2833 = vmatpush1.msra.mxu0 0.0
        %2834 = vmatprep.subr.mxu0 0.0
        %2835 = vmatpush1.msra.mxu0 0.0
        %2836 = vmatprep.subr.mxu0 0.0
        %2837 = vmatpush1.msra.mxu0 0.0
        %2838 = vmatprep.subr.mxu0 0.0
        %2839 = vmatpush1.msra.mxu0 0.0
        %2840 = vmatprep.subr.mxu0 0.0
        %2841 = vmatpush1.msra.mxu0 0.0
        %2842 = vmatprep.subr.mxu0 0.0
        %2843 = vmatpush1.msra.mxu0 0.0
        %2844 = vmatprep.subr.mxu0 0.0
        %2845 = vmatpush1.msra.mxu0 0.0
        %2846 = vmatprep.subr.mxu0 0.0
        %2847 = vmatpush1.msra.mxu0 0.0
        %2848 = vmatprep.subr.mxu0 0.0
        %2849 = vmatpush1.msra.mxu0 0.0
        %2850 = vmatprep.subr.mxu0 0.0
        %2851 = vmatpush1.msra.mxu0 0.0
        %2852 = vmatprep.subr.mxu0 0.0
        %2853 = vmatpush1.msra.mxu0 0.0
        %2854 = vmatprep.subr.mxu0 0.0
        %2855 = vmatpush1.msra.mxu0 0.0
        %2856 = vmatprep.subr.mxu0 0.0
        %2857 = vmatpush1.msra.mxu0 0.0
        %2858 = vmatprep.subr.mxu0 0.0
        %2859 = vmatpush1.msra.mxu0 0.0
        %2860 = vmatprep.subr.mxu0 0.0
        %2861 = vmatpush1.msra.mxu0 0.0
        %2862 = vmatprep.subr.mxu0 0.0
        %2863 = vmatpush1.msra.mxu0 0.0
        %2864 = vmatprep.subr.mxu0 0.0
        %2865 = vmatpush1.msra.mxu0 0.0
        %2866 = vmatprep.subr.mxu0 0.0
        %2867 = vmatpush1.msra.mxu0 0.0
        %2868 = vmatprep.subr.mxu0 0.0
        %2869 = vmatpush1.msra.mxu0 0.0
        %2870 = vmatprep.subr.mxu0 0.0
        %2871 = vmatpush1.msra.mxu0 0.0
        %2872 = vmatprep.mubr.f32.mxu0 0.0
        %2873 = vmatmul.mubr.f32.gmra.mrb[0].mxu0 %v2701
        %v2874 = vpop.f32.mrb[0].mxu0
        %v2875 = vadd.f32 %v2697, %v2874
        %v2876 = vpop.f32.mrb[0].mxu0
        %2877 = vmatprep.mubr.f32.mxu0 0.0
        %2878 = vmatmul.mubr.f32.gmra.mrb[0].mxu0 %v2704
        %v2879 = vpop.f32.mrb[0].mxu0
        %v2880 = vadd.f32 %v2697, %v2879
        %v2881 = vpop.f32.mrb[0].mxu0
        %2882 = vmatprep.mubr.f32.mxu0 0.0
        %2883 = vmatmul.mubr.f32.gmra.mrb[0].mxu0 %v2707
        %v2884 = vpop.f32.mrb[0].mxu0
        %v2885 = vadd.f32 %v2697, %v2884
        %v2886 = vpop.f32.mrb[0].mxu0
        %2887 = vmatprep.mubr.f32.mxu0 0.0
        %2888 = vmatmul.mubr.f32.gmra.mrb[0].mxu0 %v2710
        %v2889 = vpop.f32.mrb[0].mxu0
        %v2890 = vadd.f32 %v2697, %v2889
        %v2891 = vpop.f32.mrb[0].mxu0
        %2892 = vmatprep.mubr.f32.mxu0 0.0
        %2893 = vmatmul.mubr.f32.gmra.mrb[0].mxu0 %v2713
        %v2894 = vpop.f32.mrb[0].mxu0
        %v2895 = vadd.f32 %v2697, %v2894
        %v2896 = vpop.f32.mrb[0].mxu0
        %2897 = vmatprep.mubr.f32.mxu0 0.0
        %2898 = vmatmul.mubr.f32.gmra.mrb[0].mxu0 %v2716
        %v2899 = vpop.f32.mrb[0].mxu0
        %v2900 = vadd.f32 %v2697, %v2899
        %v2901 = vpop.f32.mrb[0].mxu0
        %2902 = vmatprep.mubr.f32.mxu0 0.0
        %2903 = vmatmul.mubr.f32.gmra.mrb[0].mxu0 %v2719
        %v2904 = vpop.f32.mrb[0].mxu0
        %v2905 = vadd.f32 %v2697, %v2904
        %v2906 = vpop.f32.mrb[0].mxu0
        %2907 = vmatprep.mubr.f32.mxu0 0.0
        %2908 = vmatmul.mubr.f32.gmra.mrb[0].mxu0 %v2722
        %v2909 = vpop.f32.mrb[0].mxu0
        %v2910 = vadd.f32 %v2697, %v2909
        %v2911 = vpop.f32.mrb[0].mxu0
        %2912 = vmatprep.mubr.f32.mxu0 0.0
        %2913 = vmatmul.mubr.f32.gmra.mrb[0].mxu0 %v2725
        %v2914 = vpop.f32.mrb[0].mxu0
        %v2915 = vadd.f32 %v2697, %v2914
        %v2916 = vpop.f32.mrb[0].mxu0
        %2917 = vmatprep.mubr.f32.mxu0 0.0
        %2918 = vmatmul.mubr.f32.gmra.mrb[0].mxu0 %v2728
        %v2919 = vpop.f32.mrb[0].mxu0
        %v2920 = vadd.f32 %v2697, %v2919
        %v2921 = vpop.f32.mrb[0].mxu0
        %2922 = vmatprep.mubr.f32.mxu0 0.0
        %2923 = vmatmul.mubr.f32.gmra.mrb[0].mxu0 %v2731
        %v2924 = vpop.f32.mrb[0].mxu0
        %v2925 = vadd.f32 %v2697, %v2924
        %v2926 = vpop.f32.mrb[0].mxu0
        %2927 = vmatprep.mubr.f32.mxu0 0.0
        %2928 = vmatmul.mubr.f32.gmra.mrb[0].mxu0 %v2734
        %v2929 = vpop.f32.mrb[0].mxu0
        %v2930 = vadd.f32 %v2697, %v2929
        %v2931 = vpop.f32.mrb[0].mxu0
        %2932 = vmatprep.mubr.f32.mxu0 0.0
        %2933 = vmatmul.mubr.f32.gmra.mrb[0].mxu0 %v2737
        %v2934 = vpop.f32.mrb[0].mxu0
        %v2935 = vadd.f32 %v2697, %v2934
        %v2936 = vpop.f32.mrb[0].mxu0
        %2937 = vmatprep.mubr.f32.mxu0 0.0
        %2938 = vmatmul.mubr.f32.gmra.mrb[0].mxu0 %v2740
        %v2939 = vpop.f32.mrb[0].mxu0
        %v2940 = vadd.f32 %v2697, %v2939
        %v2941 = vpop.f32.mrb[0].mxu0
        %2942 = vmatprep.mubr.f32.mxu0 0.0
        %2943 = vmatmul.mubr.f32.gmra.mrb[0].mxu0 %v2743
        %v2944 = vpop.f32.mrb[0].mxu0
        %v2945 = vadd.f32 %v2697, %v2944
        %v2946 = vpop.f32.mrb[0].mxu0
        %2947 = vmatprep.mubr.f32.mxu0 0.0
        %2948 = vmatmul.mubr.f32.gmra.mrb[0].mxu0 %v2746
        %v2949 = vpop.f32.mrb[0].mxu0
        %v2950 = vadd.f32 %v2697, %v2949
        %v2951 = vpop.f32.mrb[0].mxu0
        %2952 = vmatprep.mubr.f32.mxu0 0.0
        %2953 = vmatmul.mubr.f32.gmra.mrb[0].mxu0 %v2749
        %v2954 = vpop.f32.mrb[0].mxu0
        %v2955 = vadd.f32 %v2697, %v2954
        %v2956 = vpop.f32.mrb[0].mxu0
        %2957 = vmatprep.mubr.f32.mxu0 0.0
        %2958 = vmatmul.mubr.f32.gmra.mrb[0].mxu0 %v2752
        %v2959 = vpop.f32.mrb[0].mxu0
        %v2960 = vadd.f32 %v2697, %v2959
        %v2961 = vpop.f32.mrb[0].mxu0
        %2962 = vmatprep.mubr.f32.mxu0 0.0
        %2963 = vmatmul.mubr.f32.gmra.mrb[0].mxu0 %v2755
        %v2964 = vpop.f32.mrb[0].mxu0
        %v2965 = vadd.f32 %v2697, %v2964
        %v2966 = vpop.f32.mrb[0].mxu0
        %2967 = vmatprep.mubr.f32.mxu0 0.0
        %2968 = vmatmul.mubr.f32.gmra.mrb[0].mxu0 %v2758
        %v2969 = vpop.f32.mrb[0].mxu0
        %v2970 = vadd.f32 %v2697, %v2969
        %v2971 = vpop.f32.mrb[0].mxu0
        %2972 = vmatprep.mubr.f32.mxu0 0.0
        %2973 = vmatmul.mubr.f32.gmra.mrb[0].mxu0 %v2761
        %v2974 = vpop.f32.mrb[0].mxu0
        %v2975 = vadd.f32 %v2697, %v2974
        %v2976 = vpop.f32.mrb[0].mxu0
        %2977 = vmatprep.mubr.f32.mxu0 0.0
        %2978 = vmatmul.mubr.f32.gmra.mrb[0].mxu0 %v2764
        %v2979 = vpop.f32.mrb[0].mxu0
        %v2980 = vadd.f32 %v2697, %v2979
        %v2981 = vpop.f32.mrb[0].mxu0
        %2982 = vmatprep.mubr.f32.mxu0 0.0
        %2983 = vmatmul.mubr.f32.gmra.mrb[0].mxu0 %v2767
        %v2984 = vpop.f32.mrb[0].mxu0
        %v2985 = vadd.f32 %v2697, %v2984
        %v2986 = vpop.f32.mrb[0].mxu0
        %2987 = vmatprep.mubr.f32.mxu0 0.0
        %2988 = vmatmul.mubr.f32.gmra.mrb[0].mxu0 %v2770
        %v2989 = vpop.f32.mrb[0].mxu0
        %v2990 = vadd.f32 %v2697, %v2989
        %v2991 = vpop.f32.mrb[0].mxu0
        %2992 = vmatprep.mubr.f32.mxu0 0.0
        %2993 = vmatmul.mubr.f32.gmra.mrb[0].mxu0 %v2773
        %v2994 = vpop.f32.mrb[0].mxu0
        %v2995 = vadd.f32 %v2697, %v2994
        %v2996 = vpop.f32.mrb[0].mxu0
        %2997 = vmatprep.mubr.f32.mxu0 0.0
        %2998 = vmatmul.mubr.f32.gmra.mrb[0].mxu0 %v2776
        %v2999 = vpop.f32.mrb[0].mxu0
        %v3000 = vadd.f32 %v2697, %v2999
        %v3001 = vpop.f32.mrb[0].mxu0
        %3002 = vmatprep.mubr.f32.mxu0 0.0
        %3003 = vmatmul.mubr.f32.gmra.mrb[0].mxu0 %v2779
        %v3004 = vpop.f32.mrb[0].mxu0
        %v3005 = vadd.f32 %v2697, %v3004
        %v3006 = vpop.f32.mrb[0].mxu0
        %3007 = vmatprep.mubr.f32.mxu0 0.0
        %3008 = vmatmul.mubr.f32.gmra.mrb[0].mxu0 %v2782
        %v3009 = vpop.f32.mrb[0].mxu0
        %v3010 = vadd.f32 %v2697, %v3009
        %v3011 = vpop.f32.mrb[0].mxu0
        %3012 = vmatprep.mubr.f32.mxu0 0.0
        %3013 = vmatmul.mubr.f32.gmra.mrb[0].mxu0 %v2785
        %v3014 = vpop.f32.mrb[0].mxu0
        %v3015 = vadd.f32 %v2697, %v3014
        %v3016 = vpop.f32.mrb[0].mxu0
        %3017 = vmatprep.mubr.f32.mxu0 0.0
        %3018 = vmatmul.mubr.f32.gmra.mrb[0].mxu0 %v2788
        %v3019 = vpop.f32.mrb[0].mxu0
        %v3020 = vadd.f32 %v2697, %v3019
        %v3021 = vpop.f32.mrb[0].mxu0
        %3022 = vmatprep.mubr.f32.mxu0 0.0
        %3023 = vmatmul.mubr.f32.gmra.mrb[0].mxu0 %v2791
        %v3024 = vpop.f32.mrb[0].mxu0
        %v3025 = vadd.f32 %v2697, %v3024
        %v3026 = vpop.f32.mrb[0].mxu0
        %3027 = vmatprep.mubr.f32.mxu0 0.0
        %3028 = vmatmul.mubr.f32.gmra.mrb[0].mxu0 %v2794
        %v3029 = vpop.f32.mrb[0].mxu0
        %v3030 = vadd.f32 %v2697, %v3029
        %v3031 = vpop.f32.mrb[0].mxu0
        %3032 = vmatprep.mubr.f32.mxu0 0.0
        %3033 = vmatmul.mubr.f32.gmra.mrb[0].mxu0 %v2797
        %v3034 = vpop.f32.mrb[0].mxu0
        %v3035 = vadd.f32 %v2697, %v3034
        %v3036 = vpop.f32.mrb[0].mxu0
        %3037 = vmatprep.mubr.f32.mxu0 0.0
        %3038 = vmatmul.mubr.f32.gmra.mrb[0].mxu0 %v2800
        %v3039 = vpop.f32.mrb[0].mxu0
        %v3040 = vadd.f32 %v2697, %v3039
        %v3041 = vpop.f32.mrb[0].mxu0
        %3042 = vmatprep.mubr.f32.mxu0 0.0
        %3043 = vmatmul.mubr.f32.gmra.mrb[0].mxu0 %v2803
        %v3044 = vpop.f32.mrb[0].mxu0
        %v3045 = vadd.f32 %v2697, %v3044
        %v3046 = vpop.f32.mrb[0].mxu0
        %3047 = vmatprep.mubr.f32.mxu0 0.0
        %3048 = vmatmul.mubr.f32.gmra.mrb[0].mxu0 %v2806
        %v3049 = vpop.f32.mrb[0].mxu0
        %v3050 = vadd.f32 %v2697, %v3049
        %v3051 = vpop.f32.mrb[0].mxu0
        %3052 = vdwg.mxu0
        %v3053 = vmul.f32 %v2875, 0.01
        %v3054 = vmul.f32 %v2880, 0.01
        %v3055 = vmul.f32 %v2885, 0.01
        %v3056 = vmul.f32 %v2890, 0.01
        %v3057 = vmul.f32 %v2895, 0.01
        %v3058 = vmul.f32 %v2900, 0.01
        %v3059 = vmul.f32 %v2905, 0.01
        %v3060 = vmul.f32 %v2910, 0.01
        %v3061 = vmul.f32 %v2915, 0.01
        %v3062 = vmul.f32 %v2920, 0.01
        %v3063 = vmul.f32 %v2925, 0.01
        %v3064 = vmul.f32 %v2930, 0.01
        %v3065 = vmul.f32 %v2935, 0.01
        %v3066 = vmul.f32 %v2940, 0.01
        %v3067 = vmul.f32 %v2945, 0.01
        %v3068 = vmul.f32 %v2950, 0.01
        %v3069 = vmul.f32 %v2955, 0.01
        %v3070 = vmul.f32 %v2960, 0.01
        %v3071 = vmul.f32 %v2965, 0.01
        %v3072 = vmul.f32 %v2970, 0.01
        %v3073 = vmul.f32 %v2975, 0.01
        %v3074 = vmul.f32 %v2980, 0.01
        %v3075 = vmul.f32 %v2985, 0.01
        %v3076 = vmul.f32 %v2990, 0.01
        %v3077 = vmul.f32 %v2995, 0.01
        %v3078 = vmul.f32 %v3000, 0.01
        %v3079 = vmul.f32 %v3005, 0.01
        %v3080 = vmul.f32 %v3010, 0.01
        %v3081 = vmul.f32 %v3015, 0.01
        %v3082 = vmul.f32 %v3020, 0.01
        %v3083 = vmul.f32 %v3025, 0.01
        %v3084 = vmul.f32 %v3030, 0.01
        %v3085 = vmul.f32 %v3035, 0.01
        %v3086 = vmul.f32 %v3040, 0.01
        %v3087 = vmul.f32 %v3045, 0.01
        %v3088 = vmul.f32 %v3050, 0.01
        %v3089 = vmax.f32 %v2875, %v3053
        %v3090 = vmax.f32 %v2880, %v3054
        %v3091 = vmax.f32 %v2885, %v3055
        %v3092 = vmax.f32 %v2890, %v3056
        %v3093 = vmax.f32 %v2895, %v3057
        %v3094 = vmax.f32 %v2900, %v3058
        %v3095 = vmax.f32 %v2905, %v3059
        %v3096 = vmax.f32 %v2910, %v3060
        %v3097 = vmax.f32 %v2915, %v3061
        %v3098 = vmax.f32 %v2920, %v3062
        %v3099 = vmax.f32 %v2925, %v3063
        %v3100 = vmax.f32 %v2930, %v3064
        %v3101 = vmax.f32 %v2935, %v3065
        %v3102 = vmax.f32 %v2940, %v3066
        %v3103 = vmax.f32 %v2945, %v3067
        %v3104 = vmax.f32 %v2950, %v3068
        %v3105 = vmax.f32 %v2955, %v3069
        %v3106 = vmax.f32 %v2960, %v3070
        %v3107 = vmax.f32 %v2965, %v3071
        %v3108 = vmax.f32 %v2970, %v3072
        %v3109 = vmax.f32 %v2975, %v3073
        %v3110 = vmax.f32 %v2980, %v3074
        %v3111 = vmax.f32 %v2985, %v3075
        %v3112 = vmax.f32 %v2990, %v3076
        %v3113 = vmax.f32 %v2995, %v3077
        %v3114 = vmax.f32 %v3000, %v3078
        %v3115 = vmax.f32 %v3005, %v3079
        %v3116 = vmax.f32 %v3010, %v3080
        %v3117 = vmax.f32 %v3015, %v3081
        %v3118 = vmax.f32 %v3020, %v3082
        %v3119 = vmax.f32 %v3025, %v3083
        %v3120 = vmax.f32 %v3030, %v3084
        %v3121 = vmax.f32 %v3035, %v3085
        %v3122 = vmax.f32 %v3040, %v3086
        %v3123 = vmax.f32 %v3045, %v3087
        %v3124 = vmax.f32 %v3050, %v3088
        %v3125 = vld [vmem:[%s11] sm:$0xff]
        %v3126 = vld [vmem:[%s11 + $0x8] sm:$0xff]
        %v3127 = vld [vmem:[%s12] sm:$0x1]
        %v3129 = vlaneseq
        %v3130 = vshrl.u32 %v3129, 7
        %v3131 = vsub.s32 0, %v3130
        %v3132 = vrot.slane %v3127, %v3131
        %v3135 = vsel %vm2699, %v3089, 0
        %v3138 = vsel %vm2699, %v3090, 0
        %v3141 = vsel %vm2699, %v3091, 0
        %v3144 = vsel %vm2699, %v3092, 0
        %v3147 = vsel %vm2699, %v3093, 0
        %v3150 = vsel %vm2699, %v3094, 0
        %v3153 = vsel %vm2699, %v3095, 0
        %v3156 = vsel %vm2699, %v3096, 0
        %v3159 = vsel %vm2699, %v3097, 0
        %v3162 = vsel %vm2699, %v3098, 0
        %v3165 = vsel %vm2699, %v3099, 0
        %v3168 = vsel %vm2699, %v3100, 0
        %v3171 = vsel %vm2699, %v3101, 0
        %v3174 = vsel %vm2699, %v3102, 0
        %v3177 = vsel %vm2699, %v3103, 0
        %v3180 = vsel %vm2699, %v3104, 0
        %v3183 = vsel %vm2699, %v3105, 0
        %v3186 = vsel %vm2699, %v3106, 0
        %v3189 = vsel %vm2699, %v3107, 0
        %v3192 = vsel %vm2699, %v3108, 0
        %v3195 = vsel %vm2699, %v3109, 0
        %v3198 = vsel %vm2699, %v3110, 0
        %v3201 = vsel %vm2699, %v3111, 0
        %v3204 = vsel %vm2699, %v3112, 0
        %v3207 = vsel %vm2699, %v3113, 0
        %v3210 = vsel %vm2699, %v3114, 0
        %v3213 = vsel %vm2699, %v3115, 0
        %v3216 = vsel %vm2699, %v3116, 0
        %v3219 = vsel %vm2699, %v3117, 0
        %v3222 = vsel %vm2699, %v3118, 0
        %v3225 = vsel %vm2699, %v3119, 0
        %v3228 = vsel %vm2699, %v3120, 0
        %v3231 = vsel %vm2699, %v3121, 0
        %v3234 = vsel %vm2699, %v3122, 0
        %v3237 = vsel %vm2699, %v3123, 0
        %v3240 = vsel %vm2699, %v3124, 0
        %3242 = vmatprep.subr.mxu0 0.0
        %3243 = vmatpush1.msra.mxu0 %v3125
        %3244 = vmatprep.subr.mxu0 0.0
        %3245 = vmatpush1.msra.mxu0 %v3126
        %3246 = vmatprep.subr.mxu0 0.0
        %3247 = vmatpush1.msra.mxu0 0.0
        %3248 = vmatprep.subr.mxu0 0.0
        %3249 = vmatpush1.msra.mxu0 0.0
        %3250 = vmatprep.subr.mxu0 0.0
        %3251 = vmatpush1.msra.mxu0 0.0
        %3252 = vmatprep.subr.mxu0 0.0
        %3253 = vmatpush1.msra.mxu0 0.0
        %3254 = vmatprep.subr.mxu0 0.0
        %3255 = vmatpush1.msra.mxu0 0.0
        %3256 = vmatprep.subr.mxu0 0.0
        %3257 = vmatpush1.msra.mxu0 0.0
        %3258 = vmatprep.subr.mxu0 0.0
        %3259 = vmatpush1.msra.mxu0 0.0
        %3260 = vmatprep.subr.mxu0 0.0
        %3261 = vmatpush1.msra.mxu0 0.0
        %3262 = vmatprep.subr.mxu0 0.0
        %3263 = vmatpush1.msra.mxu0 0.0
        %3264 = vmatprep.subr.mxu0 0.0
        %3265 = vmatpush1.msra.mxu0 0.0
        %3266 = vmatprep.subr.mxu0 0.0
        %3267 = vmatpush1.msra.mxu0 0.0
        %3268 = vmatprep.subr.mxu0 0.0
        %3269 = vmatpush1.msra.mxu0 0.0
        %3270 = vmatprep.subr.mxu0 0.0
        %3271 = vmatpush1.msra.mxu0 0.0
        %3272 = vmatprep.subr.mxu0 0.0
        %3273 = vmatpush1.msra.mxu0 0.0
        %3274 = vmatprep.subr.mxu0 0.0
        %3275 = vmatpush1.msra.mxu0 0.0
        %3276 = vmatprep.subr.mxu0 0.0
        %3277 = vmatpush1.msra.mxu0 0.0
        %3278 = vmatprep.subr.mxu0 0.0
        %3279 = vmatpush1.msra.mxu0 0.0
        %3280 = vmatprep.subr.mxu0 0.0
        %3281 = vmatpush1.msra.mxu0 0.0
        %3282 = vmatprep.subr.mxu0 0.0
        %3283 = vmatpush1.msra.mxu0 0.0
        %3284 = vmatprep.subr.mxu0 0.0
        %3285 = vmatpush1.msra.mxu0 0.0
        %3286 = vmatprep.subr.mxu0 0.0
        %3287 = vmatpush1.msra.mxu0 0.0
        %3288 = vmatprep.subr.mxu0 0.0
        %3289 = vmatpush1.msra.mxu0 0.0
        %3290 = vmatprep.subr.mxu0 0.0
        %3291 = vmatpush1.msra.mxu0 0.0
        %3292 = vmatprep.subr.mxu0 0.0
        %3293 = vmatpush1.msra.mxu0 0.0
        %3294 = vmatprep.subr.mxu0 0.0
        %3295 = vmatpush1.msra.mxu0 0.0
        %3296 = vmatprep.subr.mxu0 0.0
        %3297 = vmatpush1.msra.mxu0 0.0
        %3298 = vmatprep.subr.mxu0 0.0
        %3299 = vmatpush1.msra.mxu0 0.0
        %3300 = vmatprep.subr.mxu0 0.0
        %3301 = vmatpush1.msra.mxu0 0.0
        %3302 = vmatprep.subr.mxu0 0.0
        %3303 = vmatpush1.msra.mxu0 0.0
        %3304 = vmatprep.subr.mxu0 0.0
        %3305 = vmatpush1.msra.mxu0 0.0
        %3306 = vmatprep.mubr.f32.mxu0 0.0
        %3307 = vmatmul.mubr.f32.gmra.mrb[0].mxu0 %v3135
        %v3308 = vpop.f32.mrb[0].mxu0
        %v3309 = vadd.f32 %v3132, %v3308
        %v3310 = vpop.f32.mrb[0].mxu0
        %3311 = vmatprep.mubr.f32.mxu0 0.0
        %3312 = vmatmul.mubr.f32.gmra.mrb[0].mxu0 %v3138
        %v3313 = vpop.f32.mrb[0].mxu0
        %v3314 = vadd.f32 %v3132, %v3313
        %v3315 = vpop.f32.mrb[0].mxu0
        %3316 = vmatprep.mubr.f32.mxu0 0.0
        %3317 = vmatmul.mubr.f32.gmra.mrb[0].mxu0 %v3141
        %v3318 = vpop.f32.mrb[0].mxu0
        %v3319 = vadd.f32 %v3132, %v3318
        %v3320 = vpop.f32.mrb[0].mxu0
        %3321 = vmatprep.mubr.f32.mxu0 0.0
        %3322 = vmatmul.mubr.f32.gmra.mrb[0].mxu0 %v3144
        %v3323 = vpop.f32.mrb[0].mxu0
        %v3324 = vadd.f32 %v3132, %v3323
        %v3325 = vpop.f32.mrb[0].mxu0
        %3326 = vmatprep.mubr.f32.mxu0 0.0
        %3327 = vmatmul.mubr.f32.gmra.mrb[0].mxu0 %v3147
        %v3328 = vpop.f32.mrb[0].mxu0
        %v3329 = vadd.f32 %v3132, %v3328
        %v3330 = vpop.f32.mrb[0].mxu0
        %3331 = vmatprep.mubr.f32.mxu0 0.0
        %3332 = vmatmul.mubr.f32.gmra.mrb[0].mxu0 %v3150
        %v3333 = vpop.f32.mrb[0].mxu0
        %v3334 = vadd.f32 %v3132, %v3333
        %v3335 = vpop.f32.mrb[0].mxu0
        %3336 = vmatprep.mubr.f32.mxu0 0.0
        %3337 = vmatmul.mubr.f32.gmra.mrb[0].mxu0 %v3153
        %v3338 = vpop.f32.mrb[0].mxu0
        %v3339 = vadd.f32 %v3132, %v3338
        %v3340 = vpop.f32.mrb[0].mxu0
        %3341 = vmatprep.mubr.f32.mxu0 0.0
        %3342 = vmatmul.mubr.f32.gmra.mrb[0].mxu0 %v3156
        %v3343 = vpop.f32.mrb[0].mxu0
        %v3344 = vadd.f32 %v3132, %v3343
        %v3345 = vpop.f32.mrb[0].mxu0
        %3346 = vmatprep.mubr.f32.mxu0 0.0
        %3347 = vmatmul.mubr.f32.gmra.mrb[0].mxu0 %v3159
        %v3348 = vpop.f32.mrb[0].mxu0
        %v3349 = vadd.f32 %v3132, %v3348
        %v3350 = vpop.f32.mrb[0].mxu0
        %3351 = vmatprep.mubr.f32.mxu0 0.0
        %3352 = vmatmul.mubr.f32.gmra.mrb[0].mxu0 %v3162
        %v3353 = vpop.f32.mrb[0].mxu0
        %v3354 = vadd.f32 %v3132, %v3353
        %v3355 = vpop.f32.mrb[0].mxu0
        %3356 = vmatprep.mubr.f32.mxu0 0.0
        %3357 = vmatmul.mubr.f32.gmra.mrb[0].mxu0 %v3165
        %v3358 = vpop.f32.mrb[0].mxu0
        %v3359 = vadd.f32 %v3132, %v3358
        %v3360 = vpop.f32.mrb[0].mxu0
        %3361 = vmatprep.mubr.f32.mxu0 0.0
        %3362 = vmatmul.mubr.f32.gmra.mrb[0].mxu0 %v3168
        %v3363 = vpop.f32.mrb[0].mxu0
        %v3364 = vadd.f32 %v3132, %v3363
        %v3365 = vpop.f32.mrb[0].mxu0
        %3366 = vmatprep.mubr.f32.mxu0 0.0
        %3367 = vmatmul.mubr.f32.gmra.mrb[0].mxu0 %v3171
        %v3368 = vpop.f32.mrb[0].mxu0
        %v3369 = vadd.f32 %v3132, %v3368
        %v3370 = vpop.f32.mrb[0].mxu0
        %3371 = vmatprep.mubr.f32.mxu0 0.0
        %3372 = vmatmul.mubr.f32.gmra.mrb[0].mxu0 %v3174
        %v3373 = vpop.f32.mrb[0].mxu0
        %v3374 = vadd.f32 %v3132, %v3373
        %v3375 = vpop.f32.mrb[0].mxu0
        %3376 = vmatprep.mubr.f32.mxu0 0.0
        %3377 = vmatmul.mubr.f32.gmra.mrb[0].mxu0 %v3177
        %v3378 = vpop.f32.mrb[0].mxu0
        %v3379 = vadd.f32 %v3132, %v3378
        %v3380 = vpop.f32.mrb[0].mxu0
        %3381 = vmatprep.mubr.f32.mxu0 0.0
        %3382 = vmatmul.mubr.f32.gmra.mrb[0].mxu0 %v3180
        %v3383 = vpop.f32.mrb[0].mxu0
        %v3384 = vadd.f32 %v3132, %v3383
        %v3385 = vpop.f32.mrb[0].mxu0
        %3386 = vmatprep.mubr.f32.mxu0 0.0
        %3387 = vmatmul.mubr.f32.gmra.mrb[0].mxu0 %v3183
        %v3388 = vpop.f32.mrb[0].mxu0
        %v3389 = vadd.f32 %v3132, %v3388
        %v3390 = vpop.f32.mrb[0].mxu0
        %3391 = vmatprep.mubr.f32.mxu0 0.0
        %3392 = vmatmul.mubr.f32.gmra.mrb[0].mxu0 %v3186
        %v3393 = vpop.f32.mrb[0].mxu0
        %v3394 = vadd.f32 %v3132, %v3393
        %v3395 = vpop.f32.mrb[0].mxu0
        %3396 = vmatprep.mubr.f32.mxu0 0.0
        %3397 = vmatmul.mubr.f32.gmra.mrb[0].mxu0 %v3189
        %v3398 = vpop.f32.mrb[0].mxu0
        %v3399 = vadd.f32 %v3132, %v3398
        %v3400 = vpop.f32.mrb[0].mxu0
        %3401 = vmatprep.mubr.f32.mxu0 0.0
        %3402 = vmatmul.mubr.f32.gmra.mrb[0].mxu0 %v3192
        %v3403 = vpop.f32.mrb[0].mxu0
        %v3404 = vadd.f32 %v3132, %v3403
        %v3405 = vpop.f32.mrb[0].mxu0
        %3406 = vmatprep.mubr.f32.mxu0 0.0
        %3407 = vmatmul.mubr.f32.gmra.mrb[0].mxu0 %v3195
        %v3408 = vpop.f32.mrb[0].mxu0
        %v3409 = vadd.f32 %v3132, %v3408
        %v3410 = vpop.f32.mrb[0].mxu0
        %3411 = vmatprep.mubr.f32.mxu0 0.0
        %3412 = vmatmul.mubr.f32.gmra.mrb[0].mxu0 %v3198
        %v3413 = vpop.f32.mrb[0].mxu0
        %v3414 = vadd.f32 %v3132, %v3413
        %v3415 = vpop.f32.mrb[0].mxu0
        %3416 = vmatprep.mubr.f32.mxu0 0.0
        %3417 = vmatmul.mubr.f32.gmra.mrb[0].mxu0 %v3201
        %v3418 = vpop.f32.mrb[0].mxu0
        %v3419 = vadd.f32 %v3132, %v3418
        %v3420 = vpop.f32.mrb[0].mxu0
        %3421 = vmatprep.mubr.f32.mxu0 0.0
        %3422 = vmatmul.mubr.f32.gmra.mrb[0].mxu0 %v3204
        %v3423 = vpop.f32.mrb[0].mxu0
        %v3424 = vadd.f32 %v3132, %v3423
        %v3425 = vpop.f32.mrb[0].mxu0
        %3426 = vmatprep.mubr.f32.mxu0 0.0
        %3427 = vmatmul.mubr.f32.gmra.mrb[0].mxu0 %v3207
        %v3428 = vpop.f32.mrb[0].mxu0
        %v3429 = vadd.f32 %v3132, %v3428
        %v3430 = vpop.f32.mrb[0].mxu0
        %3431 = vmatprep.mubr.f32.mxu0 0.0
        %3432 = vmatmul.mubr.f32.gmra.mrb[0].mxu0 %v3210
        %v3433 = vpop.f32.mrb[0].mxu0
        %v3434 = vadd.f32 %v3132, %v3433
        %v3435 = vpop.f32.mrb[0].mxu0
        %3436 = vmatprep.mubr.f32.mxu0 0.0
        %3437 = vmatmul.mubr.f32.gmra.mrb[0].mxu0 %v3213
        %v3438 = vpop.f32.mrb[0].mxu0
        %v3439 = vadd.f32 %v3132, %v3438
        %v3440 = vpop.f32.mrb[0].mxu0
        %3441 = vmatprep.mubr.f32.mxu0 0.0
        %3442 = vmatmul.mubr.f32.gmra.mrb[0].mxu0 %v3216
        %v3443 = vpop.f32.mrb[0].mxu0
        %v3444 = vadd.f32 %v3132, %v3443
        %v3445 = vpop.f32.mrb[0].mxu0
        %3446 = vmatprep.mubr.f32.mxu0 0.0
        %3447 = vmatmul.mubr.f32.gmra.mrb[0].mxu0 %v3219
        %v3448 = vpop.f32.mrb[0].mxu0
        %v3449 = vadd.f32 %v3132, %v3448
        %v3450 = vpop.f32.mrb[0].mxu0
        %3451 = vmatprep.mubr.f32.mxu0 0.0
        %3452 = vmatmul.mubr.f32.gmra.mrb[0].mxu0 %v3222
        %v3453 = vpop.f32.mrb[0].mxu0
        %v3454 = vadd.f32 %v3132, %v3453
        %v3455 = vpop.f32.mrb[0].mxu0
        %3456 = vmatprep.mubr.f32.mxu0 0.0
        %3457 = vmatmul.mubr.f32.gmra.mrb[0].mxu0 %v3225
        %v3458 = vpop.f32.mrb[0].mxu0
        %v3459 = vadd.f32 %v3132, %v3458
        %v3460 = vpop.f32.mrb[0].mxu0
        %3461 = vmatprep.mubr.f32.mxu0 0.0
        %3462 = vmatmul.mubr.f32.gmra.mrb[0].mxu0 %v3228
        %v3463 = vpop.f32.mrb[0].mxu0
        %v3464 = vadd.f32 %v3132, %v3463
        %v3465 = vpop.f32.mrb[0].mxu0
        %3466 = vmatprep.mubr.f32.mxu0 0.0
        %3467 = vmatmul.mubr.f32.gmra.mrb[0].mxu0 %v3231
        %v3468 = vpop.f32.mrb[0].mxu0
        %v3469 = vadd.f32 %v3132, %v3468
        %v3470 = vpop.f32.mrb[0].mxu0
        %3471 = vmatprep.mubr.f32.mxu0 0.0
        %3472 = vmatmul.mubr.f32.gmra.mrb[0].mxu0 %v3234
        %v3473 = vpop.f32.mrb[0].mxu0
        %v3474 = vadd.f32 %v3132, %v3473
        %v3475 = vpop.f32.mrb[0].mxu0
        %3476 = vmatprep.mubr.f32.mxu0 0.0
        %3477 = vmatmul.mubr.f32.gmra.mrb[0].mxu0 %v3237
        %v3478 = vpop.f32.mrb[0].mxu0
        %v3479 = vadd.f32 %v3132, %v3478
        %v3480 = vpop.f32.mrb[0].mxu0
        %3481 = vmatprep.mubr.f32.mxu0 0.0
        %3482 = vmatmul.mubr.f32.gmra.mrb[0].mxu0 %v3240
        %v3483 = vpop.f32.mrb[0].mxu0
        %v3484 = vadd.f32 %v3132, %v3483
        %v3485 = vpop.f32.mrb[0].mxu0
        %3486 = vdwg.mxu0
        %v3487 = vmul.f32 %v3309, 0.01
        %v3488 = vmul.f32 %v3314, 0.01
        %v3489 = vmul.f32 %v3319, 0.01
        %v3490 = vmul.f32 %v3324, 0.01
        %v3491 = vmul.f32 %v3329, 0.01
        %v3492 = vmul.f32 %v3334, 0.01
        %v3493 = vmul.f32 %v3339, 0.01
        %v3494 = vmul.f32 %v3344, 0.01
        %v3495 = vmul.f32 %v3349, 0.01
        %v3496 = vmul.f32 %v3354, 0.01
        %v3497 = vmul.f32 %v3359, 0.01
        %v3498 = vmul.f32 %v3364, 0.01
        %v3499 = vmul.f32 %v3369, 0.01
        %v3500 = vmul.f32 %v3374, 0.01
        %v3501 = vmul.f32 %v3379, 0.01
        %v3502 = vmul.f32 %v3384, 0.01
        %v3503 = vmul.f32 %v3389, 0.01
        %v3504 = vmul.f32 %v3394, 0.01
        %v3505 = vmul.f32 %v3399, 0.01
        %v3506 = vmul.f32 %v3404, 0.01
        %v3507 = vmul.f32 %v3409, 0.01
        %v3508 = vmul.f32 %v3414, 0.01
        %v3509 = vmul.f32 %v3419, 0.01
        %v3510 = vmul.f32 %v3424, 0.01
        %v3511 = vmul.f32 %v3429, 0.01
        %v3512 = vmul.f32 %v3434, 0.01
        %v3513 = vmul.f32 %v3439, 0.01
        %v3514 = vmul.f32 %v3444, 0.01
        %v3515 = vmul.f32 %v3449, 0.01
        %v3516 = vmul.f32 %v3454, 0.01
        %v3517 = vmul.f32 %v3459, 0.01
        %v3518 = vmul.f32 %v3464, 0.01
        %v3519 = vmul.f32 %v3469, 0.01
        %v3520 = vmul.f32 %v3474, 0.01
        %v3521 = vmul.f32 %v3479, 0.01
        %v3522 = vmul.f32 %v3484, 0.01
        %v3523 = vmax.f32 %v3309, %v3487
        %v3524 = vmax.f32 %v3314, %v3488
        %v3525 = vmax.f32 %v3319, %v3489
        %v3526 = vmax.f32 %v3324, %v3490
        %v3527 = vmax.f32 %v3329, %v3491
        %v3528 = vmax.f32 %v3334, %v3492
        %v3529 = vmax.f32 %v3339, %v3493
        %v3530 = vmax.f32 %v3344, %v3494
        %v3531 = vmax.f32 %v3349, %v3495
        %v3532 = vmax.f32 %v3354, %v3496
        %v3533 = vmax.f32 %v3359, %v3497
        %v3534 = vmax.f32 %v3364, %v3498
        %v3535 = vmax.f32 %v3369, %v3499
        %v3536 = vmax.f32 %v3374, %v3500
        %v3537 = vmax.f32 %v3379, %v3501
        %v3538 = vmax.f32 %v3384, %v3502
        %v3539 = vmax.f32 %v3389, %v3503
        %v3540 = vmax.f32 %v3394, %v3504
        %v3541 = vmax.f32 %v3399, %v3505
        %v3542 = vmax.f32 %v3404, %v3506
        %v3543 = vmax.f32 %v3409, %v3507
        %v3544 = vmax.f32 %v3414, %v3508
        %v3545 = vmax.f32 %v3419, %v3509
        %v3546 = vmax.f32 %v3424, %v3510
        %v3547 = vmax.f32 %v3429, %v3511
        %v3548 = vmax.f32 %v3434, %v3512
        %v3549 = vmax.f32 %v3439, %v3513
        %v3550 = vmax.f32 %v3444, %v3514
        %v3551 = vmax.f32 %v3449, %v3515
        %v3552 = vmax.f32 %v3454, %v3516
        %v3553 = vmax.f32 %v3459, %v3517
        %v3554 = vmax.f32 %v3464, %v3518
        %v3555 = vmax.f32 %v3469, %v3519
        %v3556 = vmax.f32 %v3474, %v3520
        %v3557 = vmax.f32 %v3479, %v3521
        %v3558 = vmax.f32 %v3484, %v3522
        %3559 = vst.msk [vmem:[%s447] sm:$0xff] %vm2699, %v3523
        %3560 = vst.msk [vmem:[%s447 + $0x8] sm:$0xff] %vm2699, %v3524
        %3561 = vst.msk [vmem:[%s447 + $0x10] sm:$0xff] %vm2699, %v3525
        %3562 = vst.msk [vmem:[%s447 + $0x18] sm:$0xff] %vm2699, %v3526
        %3563 = vst.msk [vmem:[%s447 + $0x20] sm:$0xff] %vm2699, %v3527
        %3564 = vst.msk [vmem:[%s447 + $0x28] sm:$0xff] %vm2699, %v3528
        %3565 = vst.msk [vmem:[%s447 + $0x30] sm:$0xff] %vm2699, %v3529
        %3566 = vst.msk [vmem:[%s447 + $0x38] sm:$0xff] %vm2699, %v3530
        %3567 = vst.msk [vmem:[%s447 + $0x40] sm:$0xff] %vm2699, %v3531
        %3568 = vst.msk [vmem:[%s447 + $0x48] sm:$0xff] %vm2699, %v3532
        %3569 = vst.msk [vmem:[%s447 + $0x50] sm:$0xff] %vm2699, %v3533
        %3570 = vst.msk [vmem:[%s447 + $0x58] sm:$0xff] %vm2699, %v3534
        %3571 = vst.msk [vmem:[%s447 + $0x60] sm:$0xff] %vm2699, %v3535
        %3572 = vst.msk [vmem:[%s447 + $0x68] sm:$0xff] %vm2699, %v3536
        %3573 = vst.msk [vmem:[%s447 + $0x70] sm:$0xff] %vm2699, %v3537
        %3574 = vst.msk [vmem:[%s447 + $0x78] sm:$0xff] %vm2699, %v3538
        %3575 = vst.msk [vmem:[%s447 + $0x80] sm:$0xff] %vm2699, %v3539
        %3576 = vst.msk [vmem:[%s447 + $0x88] sm:$0xff] %vm2699, %v3540
        %3577 = vst.msk [vmem:[%s447 + $0x90] sm:$0xff] %vm2699, %v3541
        %3578 = vst.msk [vmem:[%s447 + $0x98] sm:$0xff] %vm2699, %v3542
        %3579 = vst.msk [vmem:[%s447 + $0xa0] sm:$0xff] %vm2699, %v3543
        %3580 = vst.msk [vmem:[%s447 + $0xa8] sm:$0xff] %vm2699, %v3544
        %3581 = vst.msk [vmem:[%s447 + $0xb0] sm:$0xff] %vm2699, %v3545
        %3582 = vst.msk [vmem:[%s447 + $0xb8] sm:$0xff] %vm2699, %v3546
        %3583 = vst.msk [vmem:[%s447 + $0xc0] sm:$0xff] %vm2699, %v3547
        %3584 = vst.msk [vmem:[%s447 + $0xc8] sm:$0xff] %vm2699, %v3548
        %3585 = vst.msk [vmem:[%s447 + $0xd0] sm:$0xff] %vm2699, %v3549
        %3586 = vst.msk [vmem:[%s447 + $0xd8] sm:$0xff] %vm2699, %v3550
        %3587 = vst.msk [vmem:[%s447 + $0xe0] sm:$0xff] %vm2699, %v3551
        %3588 = vst.msk [vmem:[%s447 + $0xe8] sm:$0xff] %vm2699, %v3552
        %3589 = vst.msk [vmem:[%s447 + $0xf0] sm:$0xff] %vm2699, %v3553
        %3590 = vst.msk [vmem:[%s447 + $0xf8] sm:$0xff] %vm2699, %v3554
        %3591 = vst.msk [vmem:[%s447 + $0x100] sm:$0xff] %vm2699, %v3555
        %3592 = vst.msk [vmem:[%s447 + $0x108] sm:$0xff] %vm2699, %v3556
        %3593 = vst.msk [vmem:[%s447 + $0x110] sm:$0xff] %vm2699, %v3557
        %3594 = vst.msk [vmem:[%s447 + $0x118] sm:$0xff] %vm2699, %v3558
        %s3595 = sand.u32 %s310, 1
        %s3596 = sand.u32 %s310, 1
        %s3597 = smul.addr %s3596, 288
        %s3598 = scalar_lea.vmem [#allocation2], %s3597
        // Predicated region
        $region73: #{tpu_custom_call.1} parent=71 // pred_check
          %p3599 = pneg %p320
        $region74: #{tpu_custom_call.1} parent=71 // pred_check_branch
          %3601 = sbr.rel (%p3599) target = $region76
        $region75: #{tpu_custom_call.1} parent=71 // pred_region
          %s3602 = smul.u32 36, %s24
          %s3603 = ssub.s32 282, %s3602
          %p3604 = scmp.lt.s32.totalorder %s3603, 36
          %s3605 = scalar_select %p3604, %s3603, 36
          %s3606 = smul.u32 128, %s3605
          %p3607 = scmp.ne.s32.totalorder 0, %s3606
          %s3608 = smul.addr %s3602, 8
          %s3609 = scalar_lea.vmem %s13, %s3608
          // Predicated region
          $region77: #{tpu_custom_call.1} parent=75 // pred_check
            %p3610 = pneg %p3607
          $region78: #{tpu_custom_call.1} parent=75 // pred_check_branch
            %3612 = sbr.rel (%p3610) target = $region80
          $region79: #{tpu_custom_call.1} parent=75 // pred_region
            // Predicated region
            $region81: #{tpu_custom_call.1} parent=79 // pred_check
              _
            $region82: #{tpu_custom_call.1} parent=79 // pred_check_branch
              %3614 = sbr.rel (0) target = $region84
            $region83: #{tpu_custom_call.1} parent=79 // pred_region
              // Predicated region
              $region103: #{tpu_custom_call.1} parent=83 // pred_check
                _
              $region104: #{tpu_custom_call.1} parent=83 // pred_check_branch
                %3734 = sbr.rel (0) target = $region106
              $region105: #{tpu_custom_call.1} parent=83 // pred_region
                %s3735 = sdiv.u32.pop %s3605, 36
                %s3736 = srem.u32.pop %s3605, 36
                // While loop
                $region107: #{tpu_custom_call.1} parent=105 // loop_pre_header
                  _
                $region108: #{tpu_custom_call.1} parent=105 // loop_header
                  %s3738 = sphi 0, %s3740
                  %p3739 = scmp.ge.s32.totalorder %s3738, %s3735
                  %s3743 = sphi 0, %s3820
                  %s3744 = sphi %s3598, %s3823
                  %s3745 = sphi %s3609, %s3824
                $region109: #{tpu_custom_call.1} parent=105 // loop_header_branch
                  %3742 = sbr.rel (%p3739) target = $region113
                $region110: #{tpu_custom_call.1} parent=105 // loop_body
                  %v3746 = vld [vmem:[%s3744] sm:$0xff]
                  %3747 = vst [vmem:[%s3745] sm:$0xff] %v3746
                  %v3748 = vld [vmem:[%s3744 + $0x8] sm:$0xff]
                  %3749 = vst [vmem:[%s3745 + $0x8] sm:$0xff] %v3748
                  %v3750 = vld [vmem:[%s3744 + $0x10] sm:$0xff]
                  %3751 = vst [vmem:[%s3745 + $0x10] sm:$0xff] %v3750
                  %v3752 = vld [vmem:[%s3744 + $0x18] sm:$0xff]
                  %3753 = vst [vmem:[%s3745 + $0x18] sm:$0xff] %v3752
                  %v3754 = vld [vmem:[%s3744 + $0x20] sm:$0xff]
                  %3755 = vst [vmem:[%s3745 + $0x20] sm:$0xff] %v3754
                  %v3756 = vld [vmem:[%s3744 + $0x28] sm:$0xff]
                  %3757 = vst [vmem:[%s3745 + $0x28] sm:$0xff] %v3756
                  %v3758 = vld [vmem:[%s3744 + $0x30] sm:$0xff]
                  %3759 = vst [vmem:[%s3745 + $0x30] sm:$0xff] %v3758
                  %v3760 = vld [vmem:[%s3744 + $0x38] sm:$0xff]
                  %3761 = vst [vmem:[%s3745 + $0x38] sm:$0xff] %v3760
                  %v3762 = vld [vmem:[%s3744 + $0x40] sm:$0xff]
                  %3763 = vst [vmem:[%s3745 + $0x40] sm:$0xff] %v3762
                  %v3764 = vld [vmem:[%s3744 + $0x48] sm:$0xff]
                  %3765 = vst [vmem:[%s3745 + $0x48] sm:$0xff] %v3764
                  %v3766 = vld [vmem:[%s3744 + $0x50] sm:$0xff]
                  %3767 = vst [vmem:[%s3745 + $0x50] sm:$0xff] %v3766
                  %v3768 = vld [vmem:[%s3744 + $0x58] sm:$0xff]
                  %3769 = vst [vmem:[%s3745 + $0x58] sm:$0xff] %v3768
                  %v3770 = vld [vmem:[%s3744 + $0x60] sm:$0xff]
                  %3771 = vst [vmem:[%s3745 + $0x60] sm:$0xff] %v3770
                  %v3772 = vld [vmem:[%s3744 + $0x68] sm:$0xff]
                  %3773 = vst [vmem:[%s3745 + $0x68] sm:$0xff] %v3772
                  %v3774 = vld [vmem:[%s3744 + $0x70] sm:$0xff]
                  %3775 = vst [vmem:[%s3745 + $0x70] sm:$0xff] %v3774
                  %v3776 = vld [vmem:[%s3744 + $0x78] sm:$0xff]
                  %3777 = vst [vmem:[%s3745 + $0x78] sm:$0xff] %v3776
                  %v3778 = vld [vmem:[%s3744 + $0x80] sm:$0xff]
                  %3779 = vst [vmem:[%s3745 + $0x80] sm:$0xff] %v3778
                  %v3780 = vld [vmem:[%s3744 + $0x88] sm:$0xff]
                  %3781 = vst [vmem:[%s3745 + $0x88] sm:$0xff] %v3780
                  %v3782 = vld [vmem:[%s3744 + $0x90] sm:$0xff]
                  %3783 = vst [vmem:[%s3745 + $0x90] sm:$0xff] %v3782
                  %v3784 = vld [vmem:[%s3744 + $0x98] sm:$0xff]
                  %3785 = vst [vmem:[%s3745 + $0x98] sm:$0xff] %v3784
                  %v3786 = vld [vmem:[%s3744 + $0xa0] sm:$0xff]
                  %3787 = vst [vmem:[%s3745 + $0xa0] sm:$0xff] %v3786
                  %v3788 = vld [vmem:[%s3744 + $0xa8] sm:$0xff]
                  %3789 = vst [vmem:[%s3745 + $0xa8] sm:$0xff] %v3788
                  %v3790 = vld [vmem:[%s3744 + $0xb0] sm:$0xff]
                  %3791 = vst [vmem:[%s3745 + $0xb0] sm:$0xff] %v3790
                  %v3792 = vld [vmem:[%s3744 + $0xb8] sm:$0xff]
                  %3793 = vst [vmem:[%s3745 + $0xb8] sm:$0xff] %v3792
                  %v3794 = vld [vmem:[%s3744 + $0xc0] sm:$0xff]
                  %3795 = vst [vmem:[%s3745 + $0xc0] sm:$0xff] %v3794
                  %v3796 = vld [vmem:[%s3744 + $0xc8] sm:$0xff]
                  %3797 = vst [vmem:[%s3745 + $0xc8] sm:$0xff] %v3796
                  %v3798 = vld [vmem:[%s3744 + $0xd0] sm:$0xff]
                  %3799 = vst [vmem:[%s3745 + $0xd0] sm:$0xff] %v3798
                  %v3800 = vld [vmem:[%s3744 + $0xd8] sm:$0xff]
                  %3801 = vst [vmem:[%s3745 + $0xd8] sm:$0xff] %v3800
                  %v3802 = vld [vmem:[%s3744 + $0xe0] sm:$0xff]
                  %3803 = vst [vmem:[%s3745 + $0xe0] sm:$0xff] %v3802
                  %v3804 = vld [vmem:[%s3744 + $0xe8] sm:$0xff]
                  %3805 = vst [vmem:[%s3745 + $0xe8] sm:$0xff] %v3804
                  %v3806 = vld [vmem:[%s3744 + $0xf0] sm:$0xff]
                  %3807 = vst [vmem:[%s3745 + $0xf0] sm:$0xff] %v3806
                  %v3808 = vld [vmem:[%s3744 + $0xf8] sm:$0xff]
                  %3809 = vst [vmem:[%s3745 + $0xf8] sm:$0xff] %v3808
                  %v3810 = vld [vmem:[%s3744 + $0x100] sm:$0xff]
                  %3811 = vst [vmem:[%s3745 + $0x100] sm:$0xff] %v3810
                  %v3812 = vld [vmem:[%s3744 + $0x108] sm:$0xff]
                  %3813 = vst [vmem:[%s3745 + $0x108] sm:$0xff] %v3812
                  %v3814 = vld [vmem:[%s3744 + $0x110] sm:$0xff]
                  %3815 = vst [vmem:[%s3745 + $0x110] sm:$0xff] %v3814
                  %v3816 = vld [vmem:[%s3744 + $0x118] sm:$0xff]
                  %3817 = vst [vmem:[%s3745 + $0x118] sm:$0xff] %v3816
                  %s3818 = sadd.s32 1, %s3743
                  %p3819 = scmp.ge.s32.totalorder %s3818, %s3735
                  %s3820 = scalar_select %p3819, 0, %s3818
                  %s3821 = smul.u32 %s3820, 288
                  %s3822 = smul.u32 %s3820, 288
                  %s3823 = scalar_lea.vmem %s3598, %s3821 [#allocation2]
                  %s3824 = scalar_lea.vmem %s3609, %s3822
                $region111: #{tpu_custom_call.1} parent=105 // loop_footer
                  %s3740 = sadd.s32 %s3738, 1
                $region112: #{tpu_custom_call.1} parent=105 // loop_footer_branch
                  %3737 = sbr.rel target = $region108
                $region113: #{tpu_custom_call.1} parent=105 // loop_exit
                  _
                %s3825 = sdiv.u32.pop %s3605, 36
                %s3826 = srem.u32.pop %s3605, 36
                %s3827 = smul.u32 %s3825, 36
                %s3828 = smul.u32 8, %s3827
                %s3829 = scalar_lea.vmem %s3598, %s3828 [#allocation2]
                %s3830 = smul.u32 8, %s3827
                %s3831 = scalar_lea.vmem %s3609, %s3830
                // While loop
                $region114: #{tpu_custom_call.1} parent=105 // loop_pre_header
                  _
                $region115: #{tpu_custom_call.1} parent=105 // loop_header
                  %s3833 = sphi 0, %s3835
                  %p3834 = scmp.ge.s32.totalorder %s3833, %s3826
                  %s3838 = sphi 0, %s3845
                  %s3839 = sphi %s3829, %s3848
                  %s3840 = sphi %s3831, %s3849
                $region116: #{tpu_custom_call.1} parent=105 // loop_header_branch
                  %3837 = sbr.rel (%p3834) target = $region120
                $region117: #{tpu_custom_call.1} parent=105 // loop_body
                  %v3841 = vld [vmem:[%s3839] sm:$0xff]
                  %3842 = vst [vmem:[%s3840] sm:$0xff] %v3841
                  %s3843 = sadd.s32 1, %s3838
                  %p3844 = scmp.ge.s32.totalorder %s3843, %s3826
                  %s3845 = scalar_select %p3844, 0, %s3843
                  %s3846 = smul.u32 %s3845, 8
                  %s3847 = smul.u32 %s3845, 8
                  %s3848 = scalar_lea.vmem %s3829, %s3846 [#allocation2]
                  %s3849 = scalar_lea.vmem %s3831, %s3847
                $region118: #{tpu_custom_call.1} parent=105 // loop_footer
                  %s3835 = sadd.s32 %s3833, 1
                $region119: #{tpu_custom_call.1} parent=105 // loop_footer_branch
                  %3832 = sbr.rel target = $region115
                $region120: #{tpu_custom_call.1} parent=105 // loop_exit
                  _
              $region106: #{tpu_custom_call.1} parent=83 // pred_fallthru
                _
              // Predicated region
              $region121: #{tpu_custom_call.1} parent=83 // pred_check
                _
              $region122: #{tpu_custom_call.1} parent=83 // pred_check_branch
                %3851 = sbr.rel target = $region124
              $region123: #{tpu_custom_call.1} parent=83 // pred_region
                _
              $region124: #{tpu_custom_call.1} parent=83 // pred_fallthru
                _
            $region84: #{tpu_custom_call.1} parent=79 // pred_fallthru
              _
            // Predicated region
            $region85: #{tpu_custom_call.1} parent=79 // pred_check
              _
            $region86: #{tpu_custom_call.1} parent=79 // pred_check_branch
              %3616 = sbr.rel target = $region88
            $region87: #{tpu_custom_call.1} parent=79 // pred_region
              %s3618 = sdiv.u32.pop %s3605, 36
              %s3619 = srem.u32.pop %s3605, 36
              // While loop
              $region89: #{tpu_custom_call.1} parent=87 // loop_pre_header
                _
              $region90: #{tpu_custom_call.1} parent=87 // loop_header
                %s3621 = sphi 0, %s3623
                %p3622 = scmp.ge.s32.totalorder %s3621, %s3618
                %s3626 = sphi 0, %s3703
                %s3627 = sphi %s3598, %s3706
                %s3628 = sphi %s3609, %s3707
              $region91: #{tpu_custom_call.1} parent=87 // loop_header_branch
                %3625 = sbr.rel (%p3622) target = $region95
              $region92: #{tpu_custom_call.1} parent=87 // loop_body
                %v3629 = vld [vmem:[%s3627] sm:$0xff]
                %3630 = vst [vmem:[%s3628] sm:$0xff] %v3629
                %v3631 = vld [vmem:[%s3627 + $0x8] sm:$0xff]
                %3632 = vst [vmem:[%s3628 + $0x8] sm:$0xff] %v3631
                %v3633 = vld [vmem:[%s3627 + $0x10] sm:$0xff]
                %3634 = vst [vmem:[%s3628 + $0x10] sm:$0xff] %v3633
                %v3635 = vld [vmem:[%s3627 + $0x18] sm:$0xff]
                %3636 = vst [vmem:[%s3628 + $0x18] sm:$0xff] %v3635
                %v3637 = vld [vmem:[%s3627 + $0x20] sm:$0xff]
                %3638 = vst [vmem:[%s3628 + $0x20] sm:$0xff] %v3637
                %v3639 = vld [vmem:[%s3627 + $0x28] sm:$0xff]
                %3640 = vst [vmem:[%s3628 + $0x28] sm:$0xff] %v3639
                %v3641 = vld [vmem:[%s3627 + $0x30] sm:$0xff]
                %3642 = vst [vmem:[%s3628 + $0x30] sm:$0xff] %v3641
                %v3643 = vld [vmem:[%s3627 + $0x38] sm:$0xff]
                %3644 = vst [vmem:[%s3628 + $0x38] sm:$0xff] %v3643
                %v3645 = vld [vmem:[%s3627 + $0x40] sm:$0xff]
                %3646 = vst [vmem:[%s3628 + $0x40] sm:$0xff] %v3645
                %v3647 = vld [vmem:[%s3627 + $0x48] sm:$0xff]
                %3648 = vst [vmem:[%s3628 + $0x48] sm:$0xff] %v3647
                %v3649 = vld [vmem:[%s3627 + $0x50] sm:$0xff]
                %3650 = vst [vmem:[%s3628 + $0x50] sm:$0xff] %v3649
                %v3651 = vld [vmem:[%s3627 + $0x58] sm:$0xff]
                %3652 = vst [vmem:[%s3628 + $0x58] sm:$0xff] %v3651
                %v3653 = vld [vmem:[%s3627 + $0x60] sm:$0xff]
                %3654 = vst [vmem:[%s3628 + $0x60] sm:$0xff] %v3653
                %v3655 = vld [vmem:[%s3627 + $0x68] sm:$0xff]
                %3656 = vst [vmem:[%s3628 + $0x68] sm:$0xff] %v3655
                %v3657 = vld [vmem:[%s3627 + $0x70] sm:$0xff]
                %3658 = vst [vmem:[%s3628 + $0x70] sm:$0xff] %v3657
                %v3659 = vld [vmem:[%s3627 + $0x78] sm:$0xff]
                %3660 = vst [vmem:[%s3628 + $0x78] sm:$0xff] %v3659
                %v3661 = vld [vmem:[%s3627 + $0x80] sm:$0xff]
                %3662 = vst [vmem:[%s3628 + $0x80] sm:$0xff] %v3661
                %v3663 = vld [vmem:[%s3627 + $0x88] sm:$0xff]
                %3664 = vst [vmem:[%s3628 + $0x88] sm:$0xff] %v3663
                %v3665 = vld [vmem:[%s3627 + $0x90] sm:$0xff]
                %3666 = vst [vmem:[%s3628 + $0x90] sm:$0xff] %v3665
                %v3667 = vld [vmem:[%s3627 + $0x98] sm:$0xff]
                %3668 = vst [vmem:[%s3628 + $0x98] sm:$0xff] %v3667
                %v3669 = vld [vmem:[%s3627 + $0xa0] sm:$0xff]
                %3670 = vst [vmem:[%s3628 + $0xa0] sm:$0xff] %v3669
                %v3671 = vld [vmem:[%s3627 + $0xa8] sm:$0xff]
                %3672 = vst [vmem:[%s3628 + $0xa8] sm:$0xff] %v3671
                %v3673 = vld [vmem:[%s3627 + $0xb0] sm:$0xff]
                %3674 = vst [vmem:[%s3628 + $0xb0] sm:$0xff] %v3673
                %v3675 = vld [vmem:[%s3627 + $0xb8] sm:$0xff]
                %3676 = vst [vmem:[%s3628 + $0xb8] sm:$0xff] %v3675
                %v3677 = vld [vmem:[%s3627 + $0xc0] sm:$0xff]
                %3678 = vst [vmem:[%s3628 + $0xc0] sm:$0xff] %v3677
                %v3679 = vld [vmem:[%s3627 + $0xc8] sm:$0xff]
                %3680 = vst [vmem:[%s3628 + $0xc8] sm:$0xff] %v3679
                %v3681 = vld [vmem:[%s3627 + $0xd0] sm:$0xff]
                %3682 = vst [vmem:[%s3628 + $0xd0] sm:$0xff] %v3681
                %v3683 = vld [vmem:[%s3627 + $0xd8] sm:$0xff]
                %3684 = vst [vmem:[%s3628 + $0xd8] sm:$0xff] %v3683
                %v3685 = vld [vmem:[%s3627 + $0xe0] sm:$0xff]
                %3686 = vst [vmem:[%s3628 + $0xe0] sm:$0xff] %v3685
                %v3687 = vld [vmem:[%s3627 + $0xe8] sm:$0xff]
                %3688 = vst [vmem:[%s3628 + $0xe8] sm:$0xff] %v3687
                %v3689 = vld [vmem:[%s3627 + $0xf0] sm:$0xff]
                %3690 = vst [vmem:[%s3628 + $0xf0] sm:$0xff] %v3689
                %v3691 = vld [vmem:[%s3627 + $0xf8] sm:$0xff]
                %3692 = vst [vmem:[%s3628 + $0xf8] sm:$0xff] %v3691
                %v3693 = vld [vmem:[%s3627 + $0x100] sm:$0xff]
                %3694 = vst [vmem:[%s3628 + $0x100] sm:$0xff] %v3693
                %v3695 = vld [vmem:[%s3627 + $0x108] sm:$0xff]
                %3696 = vst [vmem:[%s3628 + $0x108] sm:$0xff] %v3695
                %v3697 = vld [vmem:[%s3627 + $0x110] sm:$0xff]
                %3698 = vst [vmem:[%s3628 + $0x110] sm:$0xff] %v3697
                %v3699 = vld [vmem:[%s3627 + $0x118] sm:$0xff]
                %3700 = vst [vmem:[%s3628 + $0x118] sm:$0xff] %v3699
                %s3701 = sadd.s32 1, %s3626
                %p3702 = scmp.ge.s32.totalorder %s3701, %s3618
                %s3703 = scalar_select %p3702, 0, %s3701
                %s3704 = smul.u32 %s3703, 288
                %s3705 = smul.u32 %s3703, 288
                %s3706 = scalar_lea.vmem %s3598, %s3704 [#allocation2]
                %s3707 = scalar_lea.vmem %s3609, %s3705
              $region93: #{tpu_custom_call.1} parent=87 // loop_footer
                %s3623 = sadd.s32 %s3621, 1
              $region94: #{tpu_custom_call.1} parent=87 // loop_footer_branch
                %3620 = sbr.rel target = $region90
              $region95: #{tpu_custom_call.1} parent=87 // loop_exit
                _
              %s3708 = sdiv.u32.pop %s3605, 36
              %s3709 = srem.u32.pop %s3605, 36
              %s3710 = smul.u32 %s3708, 36
              %s3711 = smul.u32 8, %s3710
              %s3712 = scalar_lea.vmem %s3598, %s3711 [#allocation2]
              %s3713 = smul.u32 8, %s3710
              %s3714 = scalar_lea.vmem %s3609, %s3713
              // While loop
              $region96: #{tpu_custom_call.1} parent=87 // loop_pre_header
                _
              $region97: #{tpu_custom_call.1} parent=87 // loop_header
                %s3716 = sphi 0, %s3718
                %p3717 = scmp.ge.s32.totalorder %s3716, %s3709
                %s3721 = sphi 0, %s3728
                %s3722 = sphi %s3712, %s3731
                %s3723 = sphi %s3714, %s3732
              $region98: #{tpu_custom_call.1} parent=87 // loop_header_branch
                %3720 = sbr.rel (%p3717) target = $region102
              $region99: #{tpu_custom_call.1} parent=87 // loop_body
                %v3724 = vld [vmem:[%s3722] sm:$0xff]
                %3725 = vst [vmem:[%s3723] sm:$0xff] %v3724
                %s3726 = sadd.s32 1, %s3721
                %p3727 = scmp.ge.s32.totalorder %s3726, %s3709
                %s3728 = scalar_select %p3727, 0, %s3726
                %s3729 = smul.u32 %s3728, 8
                %s3730 = smul.u32 %s3728, 8
                %s3731 = scalar_lea.vmem %s3712, %s3729 [#allocation2]
                %s3732 = scalar_lea.vmem %s3714, %s3730
              $region100: #{tpu_custom_call.1} parent=87 // loop_footer
                %s3718 = sadd.s32 %s3716, 1
              $region101: #{tpu_custom_call.1} parent=87 // loop_footer_branch
                %3715 = sbr.rel target = $region97
              $region102: #{tpu_custom_call.1} parent=87 // loop_exit
                _
            $region88: #{tpu_custom_call.1} parent=79 // pred_fallthru
              _
          $region80: #{tpu_custom_call.1} parent=75 // pred_fallthru
            _
          %3852 = vnop
        $region76: #{tpu_custom_call.1} parent=71 // pred_fallthru
          _
      $region72: #{tpu_custom_call.1} parent=5 // pred_fallthru
        _
      %p3853 = scmp.le.s32.totalorder 2, %s19
      // Predicated region
      $region125: #{tpu_custom_call.1} parent=5 // pred_check
        %p3854 = pneg %p3853
      $region126: #{tpu_custom_call.1} parent=5 // pred_check_branch
        %3856 = sbr.rel (%p3854) target = $region128
      $region127: #{tpu_custom_call.1} parent=5 // pred_region
        %s3857 = ssub.s32 %s19, 2
        // Predicated region
        $region129: #{tpu_custom_call.1} parent=127 // pred_check
          %p3858 = pneg %p326
        $region130: #{tpu_custom_call.1} parent=127 // pred_check_branch
          %3860 = sbr.rel (%p3858) target = $region132
        $region131: #{tpu_custom_call.1} parent=127 // pred_region
          %s3861 = sand.u32 %s311, 1
          %s3862 = sand.u32 %s311, 1
          %s3863 = smul.addr %s3862, 288
          %s3864 = scalar_lea.vmem [#allocation2], %s3863
        $region132: #{tpu_custom_call.1} parent=127 // pred_fallthru
          _
      $region128: #{tpu_custom_call.1} parent=5 // pred_fallthru
        _
    $region6: #{tpu_custom_call.1} parent=1 // loop_footer
      %s23 = sadd.s32 1, %s19
    $region7: #{tpu_custom_call.1} parent=1 // loop_footer_branch
      %18 = sbr.rel target = $region3
    $region8: #{tpu_custom_call.1} parent=1 // loop_exit
      _

</llo_original>
